<compile_context>
chip_gen: v6e
topology: v6e:2x2x1
jax: 0.10.0
libtpu: 0.0.40
codegen_flags: <defaults>
</compile_context>

<pallas_src>
import math
from functools import partial

import jax
import jax.numpy as jnp
from jax.experimental import pallas as pl
from jax.experimental.pallas import tpu as pltpu

EPS = 1e-5          # nn.LayerNorm default
NEG_INF = -1e9      # additive causal-mask fill (CLIP builds an upper-triangular -inf mask)


def _layernorm(x, w, b):
    # f32 LayerNorm (elementwise math kept f32 on all generations).
    mu = jnp.mean(x, axis=-1, keepdims=True)
    var = jnp.mean((x - mu) ** 2, axis=-1, keepdims=True)
    return (x - mu) * jax.lax.rsqrt(var + EPS) * w + b


# --------------------------------------------------------------------------- #
# Fused kernel: grid = (B_pad // B_tile, L)
#   l == 0   : residual stream (VMEM scratch) <- prompts + positional_embedding
#   each l   : x = x + MHA(LN1(x)) ; x = x + MLP(LN2(x))
#   l == L-1 : gather EOT rows, ln_final, @ text_projection -> (B_tile, E) out
# Weight convention: right-multiply (y = x @ W + b), i.e. PyTorch weights^T,
# stored bf16; biases / LN params f32.
# --------------------------------------------------------------------------- #
def _text_encoder_kernel(eot_ref,                                  # scalar prefetch (SMEM)
                         x_in_ref, pos_ref, mask_ref,
                         ln1w_ref, ln1b_ref, wqkv_ref, bqkv_ref, wo_ref, bo_ref,
                         ln2w_ref, ln2b_ref, wfc_ref, bfc_ref, wpr_ref, bpr_ref,
                         lnfw_ref, lnfb_ref, proj_ref,
                         out_ref,
                         x_scr,                                    # (B_tile*S, D) f32 scratch
                         *, n_heads, b_tile, seq, gelu_bf16, approx_softmax):
    b = pl.program_id(0)
    l = pl.program_id(1)
    n_layers = pl.num_programs(1)

    Bt, S = b_tile, seq
    D = pos_ref.shape[-1]
    hd = D // n_heads
    scale = 1.0 / math.sqrt(hd)
    bf16, f32 = jnp.bfloat16, jnp.float32

    @pl.when(l == 0)
    def _():
        # Fold the positional add into the layer-0 initialization of the
        # VMEM-resident residual stream.
        x0 = x_in_ref[...] + pos_ref[...][None, :, :]              # (Bt, S, D)
        x_scr[...] = x0.reshape(Bt * S, D)

    x = x_scr[...]                                                 # (Bt*S, D) f32, resident

    # ---- attention sub-block ----
    xn = _layernorm(x, ln1w_ref[...], ln1b_ref[...])
    qkv = jnp.dot(xn.astype(bf16), wqkv_ref[...],
                  preferred_element_type=f32) + bqkv_ref[...]      # (Bt*S, 3D)
    q = qkv[:, :D] * scale                                         # fold softmax scale into q
    k = qkv[:, D:2 * D]
    v = qkv[:, 2 * D:]

    def split_heads(t):   # (Bt*S, D) -> (Bt*H, S, hd): one explicit relayout per tensor
        t = t.reshape(Bt, S, n_heads, hd)
        t = jnp.swapaxes(t, 1, 2)
        return t.reshape(Bt * n_heads, S, hd).astype(bf16)

    q3, k3, v3 = split_heads(q), split_heads(k), split_heads(v)

    # leading-batch, contraction-last einsums -> clean batched MXU matmuls
    s = jnp.einsum('bqd,bkd->bqk', q3, k3, preferred_element_type=f32)  # (Bt*H, S, S)
    s = s + mask_ref[...][None, :, :]                              # resident causal mask
    s = s - jnp.max(s, axis=-1, keepdims=True)
    p = jnp.exp(s)
    denom = jnp.sum(p, axis=-1, keepdims=True)
    if approx_softmax:
        p = p * pl.reciprocal(denom, approx=True)                  # EUP slot instead of divide
    else:
        p = p / denom

    attn = jnp.einsum('bqk,bkd->bqd', p.astype(bf16), v3,
                      preferred_element_type=f32)                  # (Bt*H, S, hd)
    attn = jnp.swapaxes(attn.reshape(Bt, n_heads, S, hd), 1, 2).reshape(Bt * S, D)
    attn = jnp.dot(attn.astype(bf16), wo_ref[...],
                   preferred_element_type=f32) + bo_ref[...]
    x = x + attn

    # ---- MLP sub-block (QuickGELU) ----
    xn = _layernorm(x, ln2w_ref[...], ln2b_ref[...])
    h1 = jnp.dot(xn.astype(bf16), wfc_ref[...],
                 preferred_element_type=f32) + bfc_ref[...]        # (Bt*S, 4D)
    if gelu_bf16:
        h1b = h1.astype(bf16)
        h_act = h1b * jax.nn.sigmoid(1.702 * h1b)                  # bf16 VPU/EUP (v6e/v7x)
    else:
        h_act = (h1 * jax.nn.sigmoid(1.702 * h1)).astype(bf16)     # f32 path (v5e and older)
    h2 = jnp.dot(h_act, wpr_ref[...],
                 preferred_element_type=f32) + bpr_ref[...]
    x_scr[...] = x + h2

    # ---- epilogue: EOT gather + ln_final + text_projection ----
    @pl.when(l == n_layers - 1)
    def _():
        rows = [x_scr[pl.ds(bi * S + eot_ref[b * Bt + bi], 1), :]  # dynamic row gather
                for bi in range(Bt)]
        xe = jnp.concatenate(rows, axis=0)                         # (Bt, D)
        xn_f = _layernorm(xe, lnfw_ref[...], lnfb_ref[...])
        out_ref[...] = jnp.dot(xn_f.astype(bf16), proj_ref[...],
                               preferred_element_type=f32)         # (Bt, E)


# --------------------------------------------------------------------------- #
# Host-side helpers
# --------------------------------------------------------------------------- #
def _vmem_limit_bytes():
    # ~3/4 of physical VMEM, capped; safe on v7x (64 MiB) and v5e/v6e (128 MiB).
    default = 48 * 1024 * 1024
    try:
        info = pltpu.get_tpu_info()
        cap = int(getattr(info, "vmem_capacity_bytes", 64 * 1024 * 1024))
    except Exception:
        return default
    return min(cap * 3 // 4, 100 * 1024 * 1024)


def _has_bf16_vector_unit():
    # v6e/v7x have bf16 VPU/EUP paths; v5e and older do not.
    try:
        kind = jax.devices()[0].device_kind.lower()
    except Exception:
        return False
    return not any(t in kind for t in ("v2", "v3", "v4", "v5"))


def text_encoder(prompts, tokenized_prompts, params, *, b_tile=8, approx_softmax=True):
    B, S, D = prompts.shape
    H = params['n_heads']
    L = params['wqkv'].shape[0]
    E = params['proj'].shape[-1]

    # EOT index per sequence (tiny scalar work in plain JAX, feeds scalar prefetch).
    eot = jnp.argmax(tokenized_prompts, axis=-1).astype(jnp.int32)

    # Batch tile: use 8 (or B if smaller); pad B up to a multiple of the tile.
    bt = min(b_tile, B)
    b_pad = ((B + bt - 1) // bt) * bt
    if b_pad != B:
        prompts = jnp.pad(prompts, ((0, b_pad - B), (0, 0), (0, 0)))
        eot = jnp.pad(eot, (0, b_pad - B))

    # Causal mask built once, passed as a resident input (constant index map).
    idx = jnp.arange(S)
    mask = jnp.where(idx[None, :] <= idx[:, None], 0.0, NEG_INF).astype(jnp.float32)

    def wspec(arr):
        nd = arr.ndim
        # stacked per-layer tensor: pick layer l, squeeze the layer axis
        return pl.BlockSpec((pl.Squeezed(),) + tuple(arr.shape[1:]),
                            lambda b, l, eot_ref, _nd=nd: (l,) + (0,) * (_nd - 1))

    def const_spec(arr):
        nd = arr.ndim
        return pl.BlockSpec(tuple(arr.shape),
                            lambda b, l, eot_ref, _nd=nd: (0,) * _nd)

    in_specs = [
        pl.BlockSpec((bt, S, D), lambda b, l, eot_ref: (b, 0, 0)),   # prompts (per batch tile)
        const_spec(params['pos']),                                   # positional emb (resident)
        const_spec(mask),                                            # causal mask (resident)
        wspec(params['ln1_w']), wspec(params['ln1_b']),
        wspec(params['wqkv']), wspec(params['bqkv']),
        wspec(params['wo']), wspec(params['bo']),
        wspec(params['ln2_w']), wspec(params['ln2_b']),
        wspec(params['wfc']), wspec(params['bfc']),
        wspec(params['wpr']), wspec(params['bpr']),
        const_spec(params['ln_f_w']), const_spec(params['ln_f_b']),
        const_spec(params['proj']),                                  # (D, E) bf16, resident
    ]
    out_spec = pl.BlockSpec((bt, E), lambda b, l, eot_ref: (b, 0))

    grid_spec = pltpu.PrefetchScalarGridSpec(
        num_scalar_prefetch=1,
        grid=(b_pad // bt, L),
        in_specs=in_specs,
        out_specs=out_spec,
        scratch_shapes=[pltpu.VMEM((bt * S, D), jnp.float32)],       # resident residual stream
    )

    kernel = partial(_text_encoder_kernel,
                     n_heads=H, b_tile=bt, seq=S,
                     gelu_bf16=_has_bf16_vector_unit(),
                     approx_softmax=approx_softmax)

    out = pl.pallas_call(
        kernel,
        grid_spec=grid_spec,
        out_shape=jax.ShapeDtypeStruct((b_pad, E), jnp.float32),
        compiler_params=pltpu.CompilerParams(
            dimension_semantics=("parallel", "arbitrary"),
            vmem_limit_bytes=_vmem_limit_bytes()),
    )(eot, prompts, params['pos'], mask,
      params['ln1_w'], params['ln1_b'], params['wqkv'], params['bqkv'],
      params['wo'], params['bo'], params['ln2_w'], params['ln2_b'],
      params['wfc'], params['bfc'], params['wpr'], params['bpr'],
      params['ln_f_w'], params['ln_f_b'], params['proj'])
    return out[:B]


# --------------------------------------------------------------------------- #
# Parameter init (deterministic, synthetic)
# --------------------------------------------------------------------------- #
def init_params(key, depth, d, heads, embed_dim, seq):
    keys = iter(jax.random.split(key, 2 + 6 * depth))
    f32, bf16 = jnp.float32, jnp.bfloat16
    w_init = lambda kk, shape: (0.02 * jax.random.normal(kk, shape)).astype(bf16)

    def stack(fn):
        return jnp.stack([fn() for _ in range(depth)], axis=0)

    params = {
        'n_heads': heads,
        'pos': (0.02 * jax.random.normal(next(keys), (seq, d))).astype(f32),
        'ln_f_w': jnp.ones((1, d), f32),
        'ln_f_b': jnp.zeros((1, d), f32),
        'proj': w_init(next(keys), (d, embed_dim)),
        # stacked per-layer parameters (leading L axis)
        'ln1_w': jnp.ones((depth, 1, d), f32),
        'ln1_b': jnp.zeros((depth, 1, d), f32),
        'ln2_w': jnp.ones((depth, 1, d), f32),
        'ln2_b': jnp.zeros((depth, 1, d), f32),
        'wqkv': stack(lambda: w_init(next(keys), (d, 3 * d))),
        'bqkv': jnp.zeros((depth, 1, 3 * d), f32),
        'wo': stack(lambda: w_init(next(keys), (d, d))),
        'bo': jnp.zeros((depth, 1, d), f32),
        'wfc': stack(lambda: w_init(next(keys), (d, 4 * d))),
        'bfc': jnp.zeros((depth, 1, 4 * d), f32),
        'wpr': stack(lambda: w_init(next(keys), (4 * d, d))),
        'bpr': jnp.zeros((depth, 1, d), f32),
    }
    return params


if __name__ == "__main__":
    B, S, D, H, L, E = 2, 8, 32, 4, 2, 32
    key = jax.random.PRNGKey(0)
    k_par, k_prompt, k_tok = jax.random.split(key, 3)

    params = init_params(k_par, depth=L, d=D, heads=H, embed_dim=E, seq=S)

    prompts = jax.random.normal(k_prompt, (B, S, D), dtype=jnp.float32)
    tokenized_prompts = jax.random.randint(k_tok, (B, S), 1, 400, dtype=jnp.int32)
    # place an "EOT" token (largest id) at a distinct position per row
    eot_pos = jnp.array([S - 1, S // 2])
    tokenized_prompts = tokenized_prompts.at[jnp.arange(B), eot_pos].set(49407)

    out = jax.block_until_ready(text_encoder(prompts, tokenized_prompts, params))
    assert out.shape == (B, E) and out.dtype == jnp.float32
    assert bool(jnp.all(jnp.isfinite(out)))
    print("KERNEL_OK")
</pallas_src>

<mosaic_0001>
module attributes {stable_mosaic.version = 11 : i64} {
  func.func @_text_encoder_kernel(%arg0: i32, %arg1: i32, %arg2: memref<2xi32, #tpu.memory_space<smem>>, %arg3: memref<2x8x32xf32, #tpu.memory_space<vmem>>, %arg4: memref<8x32xf32, #tpu.memory_space<vmem>>, %arg5: memref<8x8xf32, #tpu.memory_space<vmem>>, %arg6: memref<1x1x32xf32, #tpu.memory_space<vmem>>, %arg7: memref<1x1x32xf32, #tpu.memory_space<vmem>>, %arg8: memref<1x32x96xbf16, #tpu.memory_space<vmem>>, %arg9: memref<1x1x96xf32, #tpu.memory_space<vmem>>, %arg10: memref<1x32x32xbf16, #tpu.memory_space<vmem>>, %arg11: memref<1x1x32xf32, #tpu.memory_space<vmem>>, %arg12: memref<1x1x32xf32, #tpu.memory_space<vmem>>, %arg13: memref<1x1x32xf32, #tpu.memory_space<vmem>>, %arg14: memref<1x32x128xbf16, #tpu.memory_space<vmem>>, %arg15: memref<1x1x128xf32, #tpu.memory_space<vmem>>, %arg16: memref<1x128x32xbf16, #tpu.memory_space<vmem>>, %arg17: memref<1x1x32xf32, #tpu.memory_space<vmem>>, %arg18: memref<1x32xf32, #tpu.memory_space<vmem>>, %arg19: memref<1x32xf32, #tpu.memory_space<vmem>>, %arg20: memref<32x32xbf16, #tpu.memory_space<vmem>>, %arg21: memref<2x32xf32, #tpu.memory_space<vmem>>, %arg22: memref<16x32xf32, #tpu.memory_space<vmem>>) attributes {dimension_semantics = [#tpu.dimension_semantics<parallel>, #tpu.dimension_semantics<arbitrary>], iteration_bounds = array<i64: 1, 2>, scalar_prefetch = 1 : i64, scratch_operands = 1 : i64, tpu.core_type = #tpu.core_type<tc>, window_params = [{transform_indices = @transform_0, window_bounds = array<i64: 2, 8, 32>}, {pipeline_mode = #tpu.pipeline_mode<synchronous>, transform_indices = @transform_1, window_bounds = array<i64: 8, 32>}, {pipeline_mode = #tpu.pipeline_mode<synchronous>, transform_indices = @transform_2, window_bounds = array<i64: 8, 8>}, {transform_indices = @transform_3, window_bounds = array<i64: 1, 1, 32>}, {transform_indices = @transform_4, window_bounds = array<i64: 1, 1, 32>}, {transform_indices = @transform_5, window_bounds = array<i64: 1, 32, 96>}, {transform_indices = @transform_6, window_bounds = array<i64: 1, 1, 96>}, {transform_indices = @transform_7, window_bounds = array<i64: 1, 32, 32>}, {transform_indices = @transform_8, window_bounds = array<i64: 1, 1, 32>}, {transform_indices = @transform_9, window_bounds = array<i64: 1, 1, 32>}, {transform_indices = @transform_10, window_bounds = array<i64: 1, 1, 32>}, {transform_indices = @transform_11, window_bounds = array<i64: 1, 32, 128>}, {transform_indices = @transform_12, window_bounds = array<i64: 1, 1, 128>}, {transform_indices = @transform_13, window_bounds = array<i64: 1, 128, 32>}, {transform_indices = @transform_14, window_bounds = array<i64: 1, 1, 32>}, {pipeline_mode = #tpu.pipeline_mode<synchronous>, transform_indices = @transform_15, window_bounds = array<i64: 1, 32>}, {pipeline_mode = #tpu.pipeline_mode<synchronous>, transform_indices = @transform_16, window_bounds = array<i64: 1, 32>}, {pipeline_mode = #tpu.pipeline_mode<synchronous>, transform_indices = @transform_17, window_bounds = array<i64: 32, 32>}, {transform_indices = @transform_18, window_bounds = array<i64: 2, 32>}]} {
    %c0_i32 = arith.constant 0 : i32
    %0 = arith.cmpi eq, %arg1, %c0_i32 : i32
    %1 = arith.extui %0 : i1 to i32
    %c0_i32_0 = arith.constant 0 : i32
    %2 = arith.cmpi ne, %1, %c0_i32_0 : i32
    scf.if %2 {
      %c0_63 = arith.constant 0 : index
      %c0_64 = arith.constant 0 : index
      %c0_65 = arith.constant 0 : index
      %139 = vector.load %arg3[%c0_63, %c0_64, %c0_65] : memref<2x8x32xf32, #tpu.memory_space<vmem>>, vector<2x8x32xf32>
      %c0_66 = arith.constant 0 : index
      %c0_67 = arith.constant 0 : index
      %140 = vector.load %arg4[%c0_66, %c0_67] : memref<8x32xf32, #tpu.memory_space<vmem>>, vector<8x32xf32>
      %141 = vector.shape_cast %140 : vector<8x32xf32> to vector<1x8x32xf32>
      %142 = vector.broadcast %141 : vector<1x8x32xf32> to vector<2x8x32xf32>
      %143 = arith.addf %139, %142 : vector<2x8x32xf32>
      %144 = vector.shape_cast %143 : vector<2x8x32xf32> to vector<16x32xf32>
      %c0_68 = arith.constant 0 : index
      %c0_69 = arith.constant 0 : index
      %145 = vector.load %arg22[%c0_68, %c0_69] : memref<16x32xf32, #tpu.memory_space<vmem>>, vector<16x32xf32>
      tpu.vector_store %arg22[%c0_68, %c0_69], %144 {strides = array<i32>} : memref<16x32xf32, #tpu.memory_space<vmem>>, vector<16x32xf32>,
    } else {
    }
    %c0 = arith.constant 0 : index
    %c0_1 = arith.constant 0 : index
    %3 = vector.load %arg22[%c0, %c0_1] : memref<16x32xf32, #tpu.memory_space<vmem>>, vector<16x32xf32>
    %c0_2 = arith.constant 0 : index
    %c0_3 = arith.constant 0 : index
    %c0_4 = arith.constant 0 : index
    %4 = vector.load %arg6[%c0_2, %c0_3, %c0_4] : memref<1x1x32xf32, #tpu.memory_space<vmem>>, vector<1x1x32xf32>
    %5 = vector.shape_cast %4 : vector<1x1x32xf32> to vector<1x32xf32>
    %c0_5 = arith.constant 0 : index
    %c0_6 = arith.constant 0 : index
    %c0_7 = arith.constant 0 : index
    %6 = vector.load %arg7[%c0_5, %c0_6, %c0_7] : memref<1x1x32xf32, #tpu.memory_space<vmem>>, vector<1x1x32xf32>
    %7 = vector.shape_cast %6 : vector<1x1x32xf32> to vector<1x32xf32>
    %cst = arith.constant dense<0.000000e+00> : vector<16xf32>
    %8 = vector.multi_reduction <add>, %3, %cst [1] : vector<16x32xf32> to vector<16xf32>
    %9 = vector.shape_cast %8 : vector<16xf32> to vector<16x1xf32>
    %cst_8 = arith.constant 3.200000e+01 : f32
    %10 = vector.broadcast %cst_8 : f32 to vector<16x1xf32>
    %11 = arith.divf %9, %10 : vector<16x1xf32>
    %12 = vector.broadcast %11 : vector<16x1xf32> to vector<16x32xf32>
    %13 = arith.subf %3, %12 : vector<16x32xf32>
    %14 = arith.mulf %13, %13 : vector<16x32xf32>
    %cst_9 = arith.constant dense<0.000000e+00> : vector<16xf32>
    %15 = vector.multi_reduction <add>, %14, %cst_9 [1] : vector<16x32xf32> to vector<16xf32>
    %16 = vector.shape_cast %15 : vector<16xf32> to vector<16x1xf32>
    %cst_10 = arith.constant 3.200000e+01 : f32
    %17 = vector.broadcast %cst_10 : f32 to vector<16x1xf32>
    %18 = arith.divf %16, %17 : vector<16x1xf32>
    %19 = vector.broadcast %11 : vector<16x1xf32> to vector<16x32xf32>
    %20 = arith.subf %3, %19 : vector<16x32xf32>
    %cst_11 = arith.constant 9.99999974E-6 : f32
    %21 = vector.broadcast %cst_11 : f32 to vector<16x1xf32>
    %22 = arith.addf %18, %21 : vector<16x1xf32>
    %23 = math.rsqrt %22 : vector<16x1xf32>
    %24 = vector.broadcast %23 : vector<16x1xf32> to vector<16x32xf32>
    %25 = arith.mulf %20, %24 : vector<16x32xf32>
    %26 = vector.broadcast %5 : vector<1x32xf32> to vector<16x32xf32>
    %27 = arith.mulf %25, %26 : vector<16x32xf32>
    %28 = vector.broadcast %7 : vector<1x32xf32> to vector<16x32xf32>
    %29 = arith.addf %27, %28 : vector<16x32xf32>
    %30 = arith.truncf %29 : vector<16x32xf32> to vector<16x32xbf16>
    %c0_12 = arith.constant 0 : index
    %c0_13 = arith.constant 0 : index
    %c0_14 = arith.constant 0 : index
    %31 = vector.load %arg8[%c0_12, %c0_13, %c0_14] : memref<1x32x96xbf16, #tpu.memory_space<vmem>>, vector<1x32x96xbf16>
    %32 = vector.shape_cast %31 : vector<1x32x96xbf16> to vector<32x96xbf16>
    %cst_15 = arith.constant dense<0.000000e+00> : vector<16x96xf32>
    %33 = tpu.matmul %30, %32, %cst_15 {dimension_numbers = #tpu.dot_dimension_numbers<[1], [0], [0], [1], [0, 0, 1, 1], [], []>} : vector<16x32xbf16>, vector<32x96xbf16>, vector<16x96xf32> -> vector<16x96xf32>
    %c0_16 = arith.constant 0 : index
    %c0_17 = arith.constant 0 : index
    %c0_18 = arith.constant 0 : index
    %34 = vector.load %arg9[%c0_16, %c0_17, %c0_18] : memref<1x1x96xf32, #tpu.memory_space<vmem>>, vector<1x1x96xf32>
    %35 = vector.shape_cast %34 : vector<1x1x96xf32> to vector<1x96xf32>
    %36 = vector.broadcast %35 : vector<1x96xf32> to vector<16x96xf32>
    %37 = arith.addf %33, %36 : vector<16x96xf32>
    %38 = vector.extract_strided_slice %37 {offsets = [0, 0], sizes = [16, 32], strides = [1, 1]} : vector<16x96xf32> to vector<16x32xf32>
    %cst_19 = arith.constant 0.353553385 : f32
    %39 = vector.broadcast %cst_19 : f32 to vector<16x32xf32>
    %40 = arith.mulf %38, %39 : vector<16x32xf32>
    %41 = vector.extract_strided_slice %37 {offsets = [0, 32], sizes = [16, 32], strides = [1, 1]} : vector<16x96xf32> to vector<16x32xf32>
    %42 = vector.extract_strided_slice %37 {offsets = [0, 64], sizes = [16, 32], strides = [1, 1]} : vector<16x96xf32> to vector<16x32xf32>
    %43 = vector.shape_cast %40 : vector<16x32xf32> to vector<2x8x4x8xf32>
    %44 = tpu.transpose %43, [0, 2, 1, 3] : vector<2x8x4x8xf32> -> vector<2x4x8x8xf32>
    %45 = vector.shape_cast %44 : vector<2x4x8x8xf32> to vector<8x8x8xf32>
    %46 = arith.truncf %45 : vector<8x8x8xf32> to vector<8x8x8xbf16>
    %47 = vector.shape_cast %41 : vector<16x32xf32> to vector<2x8x4x8xf32>
    %48 = tpu.transpose %47, [0, 2, 1, 3] : vector<2x8x4x8xf32> -> vector<2x4x8x8xf32>
    %49 = vector.shape_cast %48 : vector<2x4x8x8xf32> to vector<8x8x8xf32>
    %50 = arith.truncf %49 : vector<8x8x8xf32> to vector<8x8x8xbf16>
    %51 = vector.shape_cast %42 : vector<16x32xf32> to vector<2x8x4x8xf32>
    %52 = tpu.transpose %51, [0, 2, 1, 3] : vector<2x8x4x8xf32> -> vector<2x4x8x8xf32>
    %53 = vector.shape_cast %52 : vector<2x4x8x8xf32> to vector<8x8x8xf32>
    %54 = arith.truncf %53 : vector<8x8x8xf32> to vector<8x8x8xbf16>
    "tpu.trace_start"() <{level = 10 : i32, message = "bqd,bkd->bqk"}> : () -> ()
    %cst_20 = arith.constant dense<0.000000e+00> : vector<8x8x8xf32>
    %55 = tpu.matmul %46, %50, %cst_20 {dimension_numbers = #tpu.dot_dimension_numbers<[2], [2], [1], [1], [0, 0, 0, 1, 1, 1], [0], [0]>} : vector<8x8x8xbf16>, vector<8x8x8xbf16>, vector<8x8x8xf32> -> vector<8x8x8xf32>
    "tpu.trace_stop"() : () -> ()
    %c0_21 = arith.constant 0 : index
    %c0_22 = arith.constant 0 : index
    %56 = vector.load %arg5[%c0_21, %c0_22] : memref<8x8xf32, #tpu.memory_space<vmem>>, vector<8x8xf32>
    %57 = vector.shape_cast %56 : vector<8x8xf32> to vector<1x8x8xf32>
    %58 = vector.broadcast %57 : vector<1x8x8xf32> to vector<8x8x8xf32>
    %59 = arith.addf %55, %58 : vector<8x8x8xf32>
    %cst_23 = arith.constant dense<0xFF800000> : vector<8x8xf32>
    %60 = vector.multi_reduction <maximumf>, %59, %cst_23 [2] : vector<8x8x8xf32> to vector<8x8xf32>
    %61 = vector.shape_cast %60 : vector<8x8xf32> to vector<8x8x1xf32>
    %62 = vector.broadcast %61 : vector<8x8x1xf32> to vector<8x8x8xf32>
    %63 = arith.subf %59, %62 : vector<8x8x8xf32>
    %64 = math.exp %63 : vector<8x8x8xf32>
    %cst_24 = arith.constant dense<0.000000e+00> : vector<8x8xf32>
    %65 = vector.multi_reduction <add>, %64, %cst_24 [2] : vector<8x8x8xf32> to vector<8x8xf32>
    %66 = vector.shape_cast %65 : vector<8x8xf32> to vector<8x8x1xf32>
    %67 = tpu.reciprocal %66 {approx = true} : vector<8x8x1xf32> -> vector<8x8x1xf32>
    %68 = vector.broadcast %67 : vector<8x8x1xf32> to vector<8x8x8xf32>
    %69 = arith.mulf %64, %68 : vector<8x8x8xf32>
    %70 = arith.truncf %69 : vector<8x8x8xf32> to vector<8x8x8xbf16>
    "tpu.trace_start"() <{level = 10 : i32, message = "bqk,bkd->bqd"}> : () -> ()
    %cst_25 = arith.constant dense<0.000000e+00> : vector<8x8x8xf32>
    %71 = tpu.matmul %70, %54, %cst_25 {dimension_numbers = #tpu.dot_dimension_numbers<[2], [1], [1], [2], [0, 0, 0, 1, 1, 2], [0], [0]>} : vector<8x8x8xbf16>, vector<8x8x8xbf16>, vector<8x8x8xf32> -> vector<8x8x8xf32>
    "tpu.trace_stop"() : () -> ()
    %72 = vector.shape_cast %71 : vector<8x8x8xf32> to vector<2x4x8x8xf32>
    %73 = tpu.transpose %72, [0, 2, 1, 3] : vector<2x4x8x8xf32> -> vector<2x8x4x8xf32>
    %74 = vector.shape_cast %73 : vector<2x8x4x8xf32> to vector<16x32xf32>
    %75 = arith.truncf %74 : vector<16x32xf32> to vector<16x32xbf16>
    %c0_26 = arith.constant 0 : index
    %c0_27 = arith.constant 0 : index
    %c0_28 = arith.constant 0 : index
    %76 = vector.load %arg10[%c0_26, %c0_27, %c0_28] : memref<1x32x32xbf16, #tpu.memory_space<vmem>>, vector<1x32x32xbf16>
    %77 = vector.shape_cast %76 : vector<1x32x32xbf16> to vector<32x32xbf16>
    %cst_29 = arith.constant dense<0.000000e+00> : vector<16x32xf32>
    %78 = tpu.matmul %75, %77, %cst_29 {dimension_numbers = #tpu.dot_dimension_numbers<[1], [0], [0], [1], [0, 0, 1, 1], [], []>} : vector<16x32xbf16>, vector<32x32xbf16>, vector<16x32xf32> -> vector<16x32xf32>
    %c0_30 = arith.constant 0 : index
    %c0_31 = arith.constant 0 : index
    %c0_32 = arith.constant 0 : index
    %79 = vector.load %arg11[%c0_30, %c0_31, %c0_32] : memref<1x1x32xf32, #tpu.memory_space<vmem>>, vector<1x1x32xf32>
    %80 = vector.shape_cast %79 : vector<1x1x32xf32> to vector<1x32xf32>
    %81 = vector.broadcast %80 : vector<1x32xf32> to vector<16x32xf32>
    %82 = arith.addf %78, %81 : vector<16x32xf32>
    %83 = arith.addf %3, %82 : vector<16x32xf32>
    %c0_33 = arith.constant 0 : index
    %c0_34 = arith.constant 0 : index
    %c0_35 = arith.constant 0 : index
    %84 = vector.load %arg12[%c0_33, %c0_34, %c0_35] : memref<1x1x32xf32, #tpu.memory_space<vmem>>, vector<1x1x32xf32>
    %85 = vector.shape_cast %84 : vector<1x1x32xf32> to vector<1x32xf32>
    %c0_36 = arith.constant 0 : index
    %c0_37 = arith.constant 0 : index
    %c0_38 = arith.constant 0 : index
    %86 = vector.load %arg13[%c0_36, %c0_37, %c0_38] : memref<1x1x32xf32, #tpu.memory_space<vmem>>, vector<1x1x32xf32>
    %87 = vector.shape_cast %86 : vector<1x1x32xf32> to vector<1x32xf32>
    %cst_39 = arith.constant dense<0.000000e+00> : vector<16xf32>
    %88 = vector.multi_reduction <add>, %83, %cst_39 [1] : vector<16x32xf32> to vector<16xf32>
    %89 = vector.shape_cast %88 : vector<16xf32> to vector<16x1xf32>
    %cst_40 = arith.constant 3.200000e+01 : f32
    %90 = vector.broadcast %cst_40 : f32 to vector<16x1xf32>
    %91 = arith.divf %89, %90 : vector<16x1xf32>
    %92 = vector.broadcast %91 : vector<16x1xf32> to vector<16x32xf32>
    %93 = arith.subf %83, %92 : vector<16x32xf32>
    %94 = arith.mulf %93, %93 : vector<16x32xf32>
    %cst_41 = arith.constant dense<0.000000e+00> : vector<16xf32>
    %95 = vector.multi_reduction <add>, %94, %cst_41 [1] : vector<16x32xf32> to vector<16xf32>
    %96 = vector.shape_cast %95 : vector<16xf32> to vector<16x1xf32>
    %cst_42 = arith.constant 3.200000e+01 : f32
    %97 = vector.broadcast %cst_42 : f32 to vector<16x1xf32>
    %98 = arith.divf %96, %97 : vector<16x1xf32>
    %99 = vector.broadcast %91 : vector<16x1xf32> to vector<16x32xf32>
    %100 = arith.subf %83, %99 : vector<16x32xf32>
    %cst_43 = arith.constant 9.99999974E-6 : f32
    %101 = vector.broadcast %cst_43 : f32 to vector<16x1xf32>
    %102 = arith.addf %98, %101 : vector<16x1xf32>
    %103 = math.rsqrt %102 : vector<16x1xf32>
    %104 = vector.broadcast %103 : vector<16x1xf32> to vector<16x32xf32>
    %105 = arith.mulf %100, %104 : vector<16x32xf32>
    %106 = vector.broadcast %85 : vector<1x32xf32> to vector<16x32xf32>
    %107 = arith.mulf %105, %106 : vector<16x32xf32>
    %108 = vector.broadcast %87 : vector<1x32xf32> to vector<16x32xf32>
    %109 = arith.addf %107, %108 : vector<16x32xf32>
    %110 = arith.truncf %109 : vector<16x32xf32> to vector<16x32xbf16>
    %c0_44 = arith.constant 0 : index
    %c0_45 = arith.constant 0 : index
    %c0_46 = arith.constant 0 : index
    %111 = vector.load %arg14[%c0_44, %c0_45, %c0_46] : memref<1x32x128xbf16, #tpu.memory_space<vmem>>, vector<1x32x128xbf16>
    %112 = vector.shape_cast %111 : vector<1x32x128xbf16> to vector<32x128xbf16>
    %cst_47 = arith.constant dense<0.000000e+00> : vector<16x128xf32>
    %113 = tpu.matmul %110, %112, %cst_47 {dimension_numbers = #tpu.dot_dimension_numbers<[1], [0], [0], [1], [0, 0, 1, 1], [], []>} : vector<16x32xbf16>, vector<32x128xbf16>, vector<16x128xf32> -> vector<16x128xf32>
    %c0_48 = arith.constant 0 : index
    %c0_49 = arith.constant 0 : index
    %c0_50 = arith.constant 0 : index
    %114 = vector.load %arg15[%c0_48, %c0_49, %c0_50] : memref<1x1x128xf32, #tpu.memory_space<vmem>>, vector<1x1x128xf32>
    %115 = vector.shape_cast %114 : vector<1x1x128xf32> to vector<1x128xf32>
    %116 = vector.broadcast %115 : vector<1x128xf32> to vector<16x128xf32>
    %117 = arith.addf %113, %116 : vector<16x128xf32>
    %118 = arith.truncf %117 : vector<16x128xf32> to vector<16x128xbf16>
    %cst_51 = arith.constant 1.703130e+00 : bf16
    %119 = vector.broadcast %cst_51 : bf16 to vector<16x128xbf16>
    %120 = arith.mulf %119, %118 : vector<16x128xbf16>
    %121 = arith.negf %120 : vector<16x128xbf16>
    %122 = math.exp %121 : vector<16x128xbf16>
    %cst_52 = arith.constant 1.000000e+00 : bf16
    %123 = vector.broadcast %cst_52 : bf16 to vector<16x128xbf16>
    %124 = arith.addf %123, %122 : vector<16x128xbf16>
    %125 = arith.divf %123, %124 : vector<16x128xbf16>
    %126 = arith.mulf %118, %125 : vector<16x128xbf16>
    %c0_53 = arith.constant 0 : index
    %c0_54 = arith.constant 0 : index
    %c0_55 = arith.constant 0 : index
    %127 = vector.load %arg16[%c0_53, %c0_54, %c0_55] : memref<1x128x32xbf16, #tpu.memory_space<vmem>>, vector<1x128x32xbf16>
    %128 = vector.shape_cast %127 : vector<1x128x32xbf16> to vector<128x32xbf16>
    %cst_56 = arith.constant dense<0.000000e+00> : vector<16x32xf32>
    %129 = tpu.matmul %126, %128, %cst_56 {dimension_numbers = #tpu.dot_dimension_numbers<[1], [0], [0], [1], [0, 0, 1, 1], [], []>} : vector<16x128xbf16>, vector<128x32xbf16>, vector<16x32xf32> -> vector<16x32xf32>
    %c0_57 = arith.constant 0 : index
    %c0_58 = arith.constant 0 : index
    %c0_59 = arith.constant 0 : index
    %130 = vector.load %arg17[%c0_57, %c0_58, %c0_59] : memref<1x1x32xf32, #tpu.memory_space<vmem>>, vector<1x1x32xf32>
    %131 = vector.shape_cast %130 : vector<1x1x32xf32> to vector<1x32xf32>
    %132 = vector.broadcast %131 : vector<1x32xf32> to vector<16x32xf32>
    %133 = arith.addf %129, %132 : vector<16x32xf32>
    %134 = arith.addf %83, %133 : vector<16x32xf32>
    %c0_60 = arith.constant 0 : index
    %c0_61 = arith.constant 0 : index
    %135 = vector.load %arg22[%c0_60, %c0_61] : memref<16x32xf32, #tpu.memory_space<vmem>>, vector<16x32xf32>
    tpu.vector_store %arg22[%c0_60, %c0_61], %134 {strides = array<i32>} : memref<16x32xf32, #tpu.memory_space<vmem>>, vector<16x32xf32>,
    %c1_i32 = arith.constant 1 : i32
    %136 = arith.cmpi eq, %arg1, %c1_i32 : i32
    %137 = arith.extui %136 : i1 to i32
    %c0_i32_62 = arith.constant 0 : i32
    %138 = arith.cmpi ne, %137, %c0_i32_62 : i32
    scf.if %138 {
      %c2_i32 = arith.constant 2 : i32
      %139 = arith.muli %arg0, %c2_i32 : i32
      %c0_i32_63 = arith.constant 0 : i32
      %140 = arith.addi %139, %c0_i32_63 : i32
      %141 = arith.index_cast %140 : i32 to index
      %142 = memref.load %arg2[%141] : memref<2xi32, #tpu.memory_space<smem>>
      %c0_i32_64 = arith.constant 0 : i32
      %143 = arith.addi %c0_i32_64, %142 : i32
      %144 = arith.index_cast %143 : i32 to index
      %c0_65 = arith.constant 0 : index
      %145 = vector.load %arg22[%144, %c0_65] : memref<16x32xf32, #tpu.memory_space<vmem>>, vector<1x32xf32>
      %c2_i32_66 = arith.constant 2 : i32
      %146 = arith.muli %arg0, %c2_i32_66 : i32
      %c1_i32_67 = arith.constant 1 : i32
      %147 = arith.addi %146, %c1_i32_67 : i32
      %148 = arith.index_cast %147 : i32 to index
      %149 = memref.load %arg2[%148] : memref<2xi32, #tpu.memory_space<smem>>
      %c8_i32 = arith.constant 8 : i32
      %150 = arith.addi %c8_i32, %149 : i32
      %151 = arith.index_cast %150 : i32 to index
      %c0_68 = arith.constant 0 : index
      %152 = vector.load %arg22[%151, %c0_68] : memref<16x32xf32, #tpu.memory_space<vmem>>, vector<1x32xf32>
      %153 = tpu.concatenate %145, %152 in 0 : vector<1x32xf32>, vector<1x32xf32> -> vector<2x32xf32>
      %c0_69 = arith.constant 0 : index
      %c0_70 = arith.constant 0 : index
      %154 = vector.load %arg18[%c0_69, %c0_70] : memref<1x32xf32, #tpu.memory_space<vmem>>, vector<1x32xf32>
      %c0_71 = arith.constant 0 : index
      %c0_72 = arith.constant 0 : index
      %155 = vector.load %arg19[%c0_71, %c0_72] : memref<1x32xf32, #tpu.memory_space<vmem>>, vector<1x32xf32>
      %cst_73 = arith.constant dense<0.000000e+00> : vector<2xf32>
      %156 = vector.multi_reduction <add>, %153, %cst_73 [1] : vector<2x32xf32> to vector<2xf32>
      %157 = vector.shape_cast %156 : vector<2xf32> to vector<2x1xf32>
      %cst_74 = arith.constant 3.200000e+01 : f32
      %158 = vector.broadcast %cst_74 : f32 to vector<2x1xf32>
      %159 = arith.divf %157, %158 : vector<2x1xf32>
      %160 = vector.broadcast %159 : vector<2x1xf32> to vector<2x32xf32>
      %161 = arith.subf %153, %160 : vector<2x32xf32>
      %162 = arith.mulf %161, %161 : vector<2x32xf32>
      %cst_75 = arith.constant dense<0.000000e+00> : vector<2xf32>
      %163 = vector.multi_reduction <add>, %162, %cst_75 [1] : vector<2x32xf32> to vector<2xf32>
      %164 = vector.shape_cast %163 : vector<2xf32> to vector<2x1xf32>
      %cst_76 = arith.constant 3.200000e+01 : f32
      %165 = vector.broadcast %cst_76 : f32 to vector<2x1xf32>
      %166 = arith.divf %164, %165 : vector<2x1xf32>
      %167 = vector.broadcast %159 : vector<2x1xf32> to vector<2x32xf32>
      %168 = arith.subf %153, %167 : vector<2x32xf32>
      %cst_77 = arith.constant 9.99999974E-6 : f32
      %169 = vector.broadcast %cst_77 : f32 to vector<2x1xf32>
      %170 = arith.addf %166, %169 : vector<2x1xf32>
      %171 = math.rsqrt %170 : vector<2x1xf32>
      %172 = vector.broadcast %171 : vector<2x1xf32> to vector<2x32xf32>
      %173 = arith.mulf %168, %172 : vector<2x32xf32>
      %174 = vector.broadcast %154 : vector<1x32xf32> to vector<2x32xf32>
      %175 = arith.mulf %173, %174 : vector<2x32xf32>
      %176 = vector.broadcast %155 : vector<1x32xf32> to vector<2x32xf32>
      %177 = arith.addf %175, %176 : vector<2x32xf32>
      %178 = arith.truncf %177 : vector<2x32xf32> to vector<2x32xbf16>
      %c0_78 = arith.constant 0 : index
      %c0_79 = arith.constant 0 : index
      %179 = vector.load %arg20[%c0_78, %c0_79] : memref<32x32xbf16, #tpu.memory_space<vmem>>, vector<32x32xbf16>
      %cst_80 = arith.constant dense<0.000000e+00> : vector<2x32xf32>
      %180 = tpu.matmul %178, %179, %cst_80 {dimension_numbers = #tpu.dot_dimension_numbers<[1], [0], [0], [1], [0, 0, 1, 1], [], []>} : vector<2x32xbf16>, vector<32x32xbf16>, vector<2x32xf32> -> vector<2x32xf32>
      %c0_81 = arith.constant 0 : index
      %c0_82 = arith.constant 0 : index
      %181 = vector.load %arg21[%c0_81, %c0_82] : memref<2x32xf32, #tpu.memory_space<vmem>>, vector<2x32xf32>
      tpu.vector_store %arg21[%c0_81, %c0_82], %180 {strides = array<i32>} : memref<2x32xf32, #tpu.memory_space<vmem>>, vector<2x32xf32>,
    } else {
    }
    return
  }
  func.func @transform_0(%arg0: i32, %arg1: i32, %arg2: memref<2xi32, #tpu.memory_space<smem>>) -> (i32, i32, i32) {
    %c0_i32 = arith.constant 0 : i32
    %c0_i32_0 = arith.constant 0 : i32
    %c0_i32_1 = arith.constant 0 : i32
    return %arg0, %c0_i32, %c0_i32_0 : i32, i32, i32
  }
  func.func @transform_1(%arg0: i32, %arg1: i32, %arg2: memref<2xi32, #tpu.memory_space<smem>>) -> (i32, i32) {
    %c0_i32 = arith.constant 0 : i32
    %c0_i32_0 = arith.constant 0 : i32
    %c0_i32_1 = arith.constant 0 : i32
    return %c0_i32, %c0_i32_0 : i32, i32
  }
  func.func @transform_2(%arg0: i32, %arg1: i32, %arg2: memref<2xi32, #tpu.memory_space<smem>>) -> (i32, i32) {
    %c0_i32 = arith.constant 0 : i32
    %c0_i32_0 = arith.constant 0 : i32
    %c0_i32_1 = arith.constant 0 : i32
    return %c0_i32, %c0_i32_0 : i32, i32
  }
  func.func @transform_3(%arg0: i32, %arg1: i32, %arg2: memref<2xi32, #tpu.memory_space<smem>>) -> (i32, i32, i32) {
    %c0_i32 = arith.constant 0 : i32
    %c0_i32_0 = arith.constant 0 : i32
    %c0_i32_1 = arith.constant 0 : i32
    return %arg1, %c0_i32, %c0_i32_0 : i32, i32, i32
  }
  func.func @transform_4(%arg0: i32, %arg1: i32, %arg2: memref<2xi32, #tpu.memory_space<smem>>) -> (i32, i32, i32) {
    %c0_i32 = arith.constant 0 : i32
    %c0_i32_0 = arith.constant 0 : i32
    %c0_i32_1 = arith.constant 0 : i32
    return %arg1, %c0_i32, %c0_i32_0 : i32, i32, i32
  }
  func.func @transform_5(%arg0: i32, %arg1: i32, %arg2: memref<2xi32, #tpu.memory_space<smem>>) -> (i32, i32, i32) {
    %c0_i32 = arith.constant 0 : i32
    %c0_i32_0 = arith.constant 0 : i32
    %c0_i32_1 = arith.constant 0 : i32
    return %arg1, %c0_i32, %c0_i32_0 : i32, i32, i32
  }
  func.func @transform_6(%arg0: i32, %arg1: i32, %arg2: memref<2xi32, #tpu.memory_space<smem>>) -> (i32, i32, i32) {
    %c0_i32 = arith.constant 0 : i32
    %c0_i32_0 = arith.constant 0 : i32
    %c0_i32_1 = arith.constant 0 : i32
    return %arg1, %c0_i32, %c0_i32_0 : i32, i32, i32
  }
  func.func @transform_7(%arg0: i32, %arg1: i32, %arg2: memref<2xi32, #tpu.memory_space<smem>>) -> (i32, i32, i32) {
    %c0_i32 = arith.constant 0 : i32
    %c0_i32_0 = arith.constant 0 : i32
    %c0_i32_1 = arith.constant 0 : i32
    return %arg1, %c0_i32, %c0_i32_0 : i32, i32, i32
  }
  func.func @transform_8(%arg0: i32, %arg1: i32, %arg2: memref<2xi32, #tpu.memory_space<smem>>) -> (i32, i32, i32) {
    %c0_i32 = arith.constant 0 : i32
    %c0_i32_0 = arith.constant 0 : i32
    %c0_i32_1 = arith.constant 0 : i32
    return %arg1, %c0_i32, %c0_i32_0 : i32, i32, i32
  }
  func.func @transform_9(%arg0: i32, %arg1: i32, %arg2: memref<2xi32, #tpu.memory_space<smem>>) -> (i32, i32, i32) {
    %c0_i32 = arith.constant 0 : i32
    %c0_i32_0 = arith.constant 0 : i32
    %c0_i32_1 = arith.constant 0 : i32
    return %arg1, %c0_i32, %c0_i32_0 : i32, i32, i32
  }
  func.func @transform_10(%arg0: i32, %arg1: i32, %arg2: memref<2xi32, #tpu.memory_space<smem>>) -> (i32, i32, i32) {
    %c0_i32 = arith.constant 0 : i32
    %c0_i32_0 = arith.constant 0 : i32
    %c0_i32_1 = arith.constant 0 : i32
    return %arg1, %c0_i32, %c0_i32_0 : i32, i32, i32
  }
  func.func @transform_11(%arg0: i32, %arg1: i32, %arg2: memref<2xi32, #tpu.memory_space<smem>>) -> (i32, i32, i32) {
    %c0_i32 = arith.constant 0 : i32
    %c0_i32_0 = arith.constant 0 : i32
    %c0_i32_1 = arith.constant 0 : i32
    return %arg1, %c0_i32, %c0_i32_0 : i32, i32, i32
  }
  func.func @transform_12(%arg0: i32, %arg1: i32, %arg2: memref<2xi32, #tpu.memory_space<smem>>) -> (i32, i32, i32) {
    %c0_i32 = arith.constant 0 : i32
    %c0_i32_0 = arith.constant 0 : i32
    %c0_i32_1 = arith.constant 0 : i32
    return %arg1, %c0_i32, %c0_i32_0 : i32, i32, i32
  }
  func.func @transform_13(%arg0: i32, %arg1: i32, %arg2: memref<2xi32, #tpu.memory_space<smem>>) -> (i32, i32, i32) {
    %c0_i32 = arith.constant 0 : i32
    %c0_i32_0 = arith.constant 0 : i32
    %c0_i32_1 = arith.constant 0 : i32
    return %arg1, %c0_i32, %c0_i32_0 : i32, i32, i32
  }
  func.func @transform_14(%arg0: i32, %arg1: i32, %arg2: memref<2xi32, #tpu.memory_space<smem>>) -> (i32, i32, i32) {
    %c0_i32 = arith.constant 0 : i32
    %c0_i32_0 = arith.constant 0 : i32
    %c0_i32_1 = arith.constant 0 : i32
    return %arg1, %c0_i32, %c0_i32_0 : i32, i32, i32
  }
  func.func @transform_15(%arg0: i32, %arg1: i32, %arg2: memref<2xi32, #tpu.memory_space<smem>>) -> (i32, i32) {
    %c0_i32 = arith.constant 0 : i32
    %c0_i32_0 = arith.constant 0 : i32
    %c0_i32_1 = arith.constant 0 : i32
    return %c0_i32, %c0_i32_0 : i32, i32
  }
  func.func @transform_16(%arg0: i32, %arg1: i32, %arg2: memref<2xi32, #tpu.memory_space<smem>>) -> (i32, i32) {
    %c0_i32 = arith.constant 0 : i32
    %c0_i32_0 = arith.constant 0 : i32
    %c0_i32_1 = arith.constant 0 : i32
    return %c0_i32, %c0_i32_0 : i32, i32
  }
  func.func @transform_17(%arg0: i32, %arg1: i32, %arg2: memref<2xi32, #tpu.memory_space<smem>>) -> (i32, i32) {
    %c0_i32 = arith.constant 0 : i32
    %c0_i32_0 = arith.constant 0 : i32
    %c0_i32_1 = arith.constant 0 : i32
    return %c0_i32, %c0_i32_0 : i32, i32
  }
  func.func @transform_18(%arg0: i32, %arg1: i32, %arg2: memref<2xi32, #tpu.memory_space<smem>>) -> (i32, i32) {
    %c0_i32 = arith.constant 0 : i32
    %c0_i32_0 = arith.constant 0 : i32
    return %arg0, %c0_i32 : i32, i32
  }
}

</mosaic_0001>

<llo_original>
// kernel: tpu_custom_call.1
$region0: #{tpu_custom_call.1}
  #allocation0 [shape = 'u32[]', space=smem, size = 0x4, offset = 0x4, fixed_abs, tag = 'smem constant byte address 0x4 - core index']
  #allocation1 [shape = 'u32[144,128]{1,0:T(1,128)}', space=vmem, size = 0x12000, scoped, tag = 'internal scratch']
  #allocation2 [shape = 'f32[16,32]{1,0:T(8,128)}', space=vmem, size = 0x2000, scoped, tag = 'scratch operand']
  #allocation3 [shape = 's32[1]{0}', space=sflag, size = 0x4, scoped, tag = 'scoped memory for tpu_custom_call.1']
  #allocation4 [shape = 'u8[512]{0}', space=smem, size = 0x200, scoped, tag = 'prefetched SMEM operand 0']
  %s0 = inlined_call_operand.hbm [shape: s32[2], index: 0, kind: input, shape index: {}]
  %s1 = inlined_call_operand.vmem [shape: f32[2,8,32], index: 1, kind: input, shape index: {}]
  %s2 = inlined_call_operand.vmem [shape: f32[8,32], index: 2, kind: input, shape index: {}]
  %s3 = inlined_call_operand.vmem [shape: f32[8,8], index: 3, kind: input, shape index: {}]
  %s4 = inlined_call_operand.vmem [shape: f32[2,1,32], index: 4, kind: input, shape index: {}]
  %s5 = inlined_call_operand.vmem [shape: f32[2,1,32], index: 5, kind: input, shape index: {}]
  %s6 = inlined_call_operand.vmem [shape: bf16[2,32,96], index: 6, kind: input, shape index: {}]
  %s7 = inlined_call_operand.vmem [shape: f32[2,1,96], index: 7, kind: input, shape index: {}]
  %s8 = inlined_call_operand.vmem [shape: bf16[2,32,32], index: 8, kind: input, shape index: {}]
  %s9 = inlined_call_operand.vmem [shape: f32[2,1,32], index: 9, kind: input, shape index: {}]
  %s10 = inlined_call_operand.vmem [shape: f32[2,1,32], index: 10, kind: input, shape index: {}]
  %s11 = inlined_call_operand.vmem [shape: f32[2,1,32], index: 11, kind: input, shape index: {}]
  %s12 = inlined_call_operand.vmem [shape: bf16[2,32,128], index: 12, kind: input, shape index: {}]
  %s13 = inlined_call_operand.vmem [shape: f32[2,1,128], index: 13, kind: input, shape index: {}]
  %s14 = inlined_call_operand.vmem [shape: bf16[2,128,32], index: 14, kind: input, shape index: {}]
  %s15 = inlined_call_operand.vmem [shape: f32[2,1,32], index: 15, kind: input, shape index: {}]
  %s16 = inlined_call_operand.vmem [shape: f32[1,32], index: 16, kind: input, shape index: {}]
  %s17 = inlined_call_operand.vmem [shape: f32[1,32], index: 17, kind: input, shape index: {}]
  %s18 = inlined_call_operand.vmem [shape: bf16[32,32], index: 18, kind: input, shape index: {}]
  %s19 = inlined_call_operand.hbm [shape: f32[2,32], index: 19, kind: output, shape index: {}]
  %s20 = sld [smem:[#allocation0]]
  $region113: #{tpu_custom_call.1} parent=0
    _
  %s22 = ssub.s32 1, %s20
  %s23 = scalar_select 0, %s22, %s20
  %25 = dma.hbm_to_smem %s0, 16, [#allocation4], [#allocation3]
  %26 = dma.done [#allocation3], 16
  %27 = sfence
  $region1: #{tpu_custom_call.1} parent=0
    #allocation5 [shape = 'u8[1024]{0}', space=vmem, size = 0x400, scoped, tag = 'output window, operand 0, single buffered']
    #allocation6 [shape = 's32[2]{0}', space=sflag, size = 0x8, scoped, tag = 'scoped memory for tpu_custom_call.1']
    %28 = vsyncpa [#allocation6], 0
    loop: start=0, step=1, limit=4
    $region2: #{tpu_custom_call.1} parent=1 // loop_pre_header
      _
    $region3: #{tpu_custom_call.1} parent=1 // loop_header
      %s30 = sphi 0, %s34
      %p31 = scmp.ge.s32.totalorder %s30, 4
      %s37 = sphi 0, %s49
      %s38 = sphi 0, %s45
      %s39 = sphi 0, %s37
      %s40 = sphi 0, %s38
      %s41 = sphi 0, %s39
      %s42 = sphi 0, %s40
      %s52 = sphi 0, %s54
      %s55 = sphi 0, %s52
      %s56 = sphi 0, %s55
      %s72 = sphi 0, %s56
      %s76 = sphi 0, %s76
      %s78 = sphi 0, %s76
      %s79 = sphi 0, %s78
      %s93 = sphi 0, %s79
      %s97 = sphi 0, %s97
      %s99 = sphi 0, %s97
      %s100 = sphi 0, %s99
      %s114 = sphi 0, %s100
      %s120 = sphi 0, %s122
      %s123 = sphi 0, %s120
      %s124 = sphi 0, %s123
      %s140 = sphi 0, %s124
      %s146 = sphi 0, %s148
      %s149 = sphi 0, %s146
      %s150 = sphi 0, %s149
      %s166 = sphi 0, %s150
      %s172 = sphi 0, %s174
      %s175 = sphi 0, %s172
      %s176 = sphi 0, %s175
      %s192 = sphi 0, %s176
      %s198 = sphi 0, %s200
      %s201 = sphi 0, %s198
      %s202 = sphi 0, %s201
      %s218 = sphi 0, %s202
      %s224 = sphi 0, %s226
      %s227 = sphi 0, %s224
      %s228 = sphi 0, %s227
      %s244 = sphi 0, %s228
      %s250 = sphi 0, %s252
      %s253 = sphi 0, %s250
      %s254 = sphi 0, %s253
      %s270 = sphi 0, %s254
      %s276 = sphi 0, %s278
      %s279 = sphi 0, %s276
      %s280 = sphi 0, %s279
      %s296 = sphi 0, %s280
      %s302 = sphi 0, %s304
      %s305 = sphi 0, %s302
      %s306 = sphi 0, %s305
      %s322 = sphi 0, %s306
      %s328 = sphi 0, %s330
      %s331 = sphi 0, %s328
      %s332 = sphi 0, %s331
      %s348 = sphi 0, %s332
      %s354 = sphi 0, %s356
      %s357 = sphi 0, %s354
      %s358 = sphi 0, %s357
      %s374 = sphi 0, %s358
      %s380 = sphi 0, %s382
      %s383 = sphi 0, %s380
      %s384 = sphi 0, %s383
      %s400 = sphi 0, %s384
      %s406 = sphi 0, %s408
      %s409 = sphi 0, %s406
      %s410 = sphi 0, %s409
      %s426 = sphi 0, %s410
      %s430 = sphi 0, %s430
      %s432 = sphi 0, %s430
      %s433 = sphi 0, %s432
      %s447 = sphi 0, %s433
      %s451 = sphi 0, %s451
      %s453 = sphi 0, %s451
      %s454 = sphi 0, %s453
      %s468 = sphi 0, %s454
      %s472 = sphi 0, %s472
      %s474 = sphi 0, %s472
      %s475 = sphi 0, %s474
      %s489 = sphi 0, %s475
      %s495 = sphi 0, %s497
      %s498 = sphi 0, %s495
      %s499 = sphi 0, %s498
      %s515 = sphi 0, %s499
    $region4: #{tpu_custom_call.1} parent=1 // loop_header_branch
      %33 = sbr.rel (%p31) target = $region8
    $region5: #{tpu_custom_call.1} parent=1 // loop_body
      %s35 = ssub.s32 %s30, 1
      %s36 = ssub.s32 %s30, 2
      %s43 = sadd.s32 1, %s38
      %p44 = scmp.ge.s32.totalorder %s43, 2
      %s45 = scalar_select %p44, 0, %s43
      %s46 = sadd.s32 1, %s37
      %s47 = scalar_select %p44, %s46, %s37
      %p48 = scmp.ge.s32.totalorder %s47, 1
      %s49 = scalar_select %p48, 0, %s47
      %s50 = ssub.s32 %s37, %s49
      %p51 = scmp.eq.s32.totalorder %s50, 0
      %s53 = sadd.s32 %s52, 1
      %s54 = scalar_select %p51, %s52, %s53
      %p57 = pneg %p51
      %p58 = scmp.eq.s32.totalorder %s30, 1
      %p59 = por %p57, %p58
      %p60 = scmp.ne.s32.totalorder %s52, %s55
      %p61 = scmp.eq.s32.totalorder %s30, 0
      %p62 = por %p60, %p61
      %p63 = scmp.ne.s32.totalorder %s52, %s55
      %p64 = scmp.eq.s32.totalorder %s35, 1
      %p65 = por %p63, %p64
      %p66 = scmp.ne.s32.totalorder %s55, %s56
      %p67 = scmp.eq.s32.totalorder %s35, 0
      %p68 = por %p66, %p67
      %p69 = scmp.ne.s32.totalorder %s55, %s56
      %p70 = scmp.eq.s32.totalorder %s36, 1
      %p71 = por %p69, %p70
      %p73 = scmp.ne.s32.totalorder %s56, %s72
      %p74 = scmp.eq.s32.totalorder %s36, 0
      %p75 = por %p73, %p74
      %s77 = sadd.s32 %s76, 1
      %p80 = scmp.eq.s32.totalorder %s30, 1
      %p81 = scmp.ne.s32.totalorder %s76, %s78
      %p82 = scmp.eq.s32.totalorder %s30, 0
      %p83 = por %p81, %p82
      %p84 = scmp.ne.s32.totalorder %s76, %s78
      %p85 = scmp.eq.s32.totalorder %s35, 1
      %p86 = por %p84, %p85
      %p87 = scmp.ne.s32.totalorder %s78, %s79
      %p88 = scmp.eq.s32.totalorder %s35, 0
      %p89 = por %p87, %p88
      %p90 = scmp.ne.s32.totalorder %s78, %s79
      %p91 = scmp.eq.s32.totalorder %s36, 1
      %p92 = por %p90, %p91
      %p94 = scmp.ne.s32.totalorder %s79, %s93
      %p95 = scmp.eq.s32.totalorder %s36, 0
      %p96 = por %p94, %p95
      %s98 = sadd.s32 %s97, 1
      %p101 = scmp.eq.s32.totalorder %s30, 1
      %p102 = scmp.ne.s32.totalorder %s97, %s99
      %p103 = scmp.eq.s32.totalorder %s30, 0
      %p104 = por %p102, %p103
      %p105 = scmp.ne.s32.totalorder %s97, %s99
      %p106 = scmp.eq.s32.totalorder %s35, 1
      %p107 = por %p105, %p106
      %p108 = scmp.ne.s32.totalorder %s99, %s100
      %p109 = scmp.eq.s32.totalorder %s35, 0
      %p110 = por %p108, %p109
      %p111 = scmp.ne.s32.totalorder %s99, %s100
      %p112 = scmp.eq.s32.totalorder %s36, 1
      %p113 = por %p111, %p112
      %p115 = scmp.ne.s32.totalorder %s100, %s114
      %p116 = scmp.eq.s32.totalorder %s36, 0
      %p117 = por %p115, %p116
      %s118 = ssub.s32 %s38, %s45
      %p119 = scmp.eq.s32.totalorder %s118, 0
      %s121 = sadd.s32 %s120, 1
      %s122 = scalar_select %p119, %s120, %s121
      %p125 = pneg %p119
      %p126 = scmp.eq.s32.totalorder %s30, 1
      %p127 = por %p125, %p126
      %p128 = scmp.ne.s32.totalorder %s120, %s123
      %p129 = scmp.eq.s32.totalorder %s30, 0
      %p130 = por %p128, %p129
      %p131 = scmp.ne.s32.totalorder %s120, %s123
      %p132 = scmp.eq.s32.totalorder %s35, 1
      %p133 = por %p131, %p132
      %p134 = scmp.ne.s32.totalorder %s123, %s124
      %p135 = scmp.eq.s32.totalorder %s35, 0
      %p136 = por %p134, %p135
      %p137 = scmp.ne.s32.totalorder %s123, %s124
      %p138 = scmp.eq.s32.totalorder %s36, 1
      %p139 = por %p137, %p138
      %p141 = scmp.ne.s32.totalorder %s124, %s140
      %p142 = scmp.eq.s32.totalorder %s36, 0
      %p143 = por %p141, %p142
      %s144 = ssub.s32 %s38, %s45
      %p145 = scmp.eq.s32.totalorder %s144, 0
      %s147 = sadd.s32 %s146, 1
      %s148 = scalar_select %p145, %s146, %s147
      %p151 = pneg %p145
      %p152 = scmp.eq.s32.totalorder %s30, 1
      %p153 = por %p151, %p152
      %p154 = scmp.ne.s32.totalorder %s146, %s149
      %p155 = scmp.eq.s32.totalorder %s30, 0
      %p156 = por %p154, %p155
      %p157 = scmp.ne.s32.totalorder %s146, %s149
      %p158 = scmp.eq.s32.totalorder %s35, 1
      %p159 = por %p157, %p158
      %p160 = scmp.ne.s32.totalorder %s149, %s150
      %p161 = scmp.eq.s32.totalorder %s35, 0
      %p162 = por %p160, %p161
      %p163 = scmp.ne.s32.totalorder %s149, %s150
      %p164 = scmp.eq.s32.totalorder %s36, 1
      %p165 = por %p163, %p164
      %p167 = scmp.ne.s32.totalorder %s150, %s166
      %p168 = scmp.eq.s32.totalorder %s36, 0
      %p169 = por %p167, %p168
      %s170 = ssub.s32 %s38, %s45
      %p171 = scmp.eq.s32.totalorder %s170, 0
      %s173 = sadd.s32 %s172, 1
      %s174 = scalar_select %p171, %s172, %s173
      %p177 = pneg %p171
      %p178 = scmp.eq.s32.totalorder %s30, 1
      %p179 = por %p177, %p178
      %p180 = scmp.ne.s32.totalorder %s172, %s175
      %p181 = scmp.eq.s32.totalorder %s30, 0
      %p182 = por %p180, %p181
      %p183 = scmp.ne.s32.totalorder %s172, %s175
      %p184 = scmp.eq.s32.totalorder %s35, 1
      %p185 = por %p183, %p184
      %p186 = scmp.ne.s32.totalorder %s175, %s176
      %p187 = scmp.eq.s32.totalorder %s35, 0
      %p188 = por %p186, %p187
      %p189 = scmp.ne.s32.totalorder %s175, %s176
      %p190 = scmp.eq.s32.totalorder %s36, 1
      %p191 = por %p189, %p190
      %p193 = scmp.ne.s32.totalorder %s176, %s192
      %p194 = scmp.eq.s32.totalorder %s36, 0
      %p195 = por %p193, %p194
      %s196 = ssub.s32 %s38, %s45
      %p197 = scmp.eq.s32.totalorder %s196, 0
      %s199 = sadd.s32 %s198, 1
      %s200 = scalar_select %p197, %s198, %s199
      %p203 = pneg %p197
      %p204 = scmp.eq.s32.totalorder %s30, 1
      %p205 = por %p203, %p204
      %p206 = scmp.ne.s32.totalorder %s198, %s201
      %p207 = scmp.eq.s32.totalorder %s30, 0
      %p208 = por %p206, %p207
      %p209 = scmp.ne.s32.totalorder %s198, %s201
      %p210 = scmp.eq.s32.totalorder %s35, 1
      %p211 = por %p209, %p210
      %p212 = scmp.ne.s32.totalorder %s201, %s202
      %p213 = scmp.eq.s32.totalorder %s35, 0
      %p214 = por %p212, %p213
      %p215 = scmp.ne.s32.totalorder %s201, %s202
      %p216 = scmp.eq.s32.totalorder %s36, 1
      %p217 = por %p215, %p216
      %p219 = scmp.ne.s32.totalorder %s202, %s218
      %p220 = scmp.eq.s32.totalorder %s36, 0
      %p221 = por %p219, %p220
      %s222 = ssub.s32 %s38, %s45
      %p223 = scmp.eq.s32.totalorder %s222, 0
      %s225 = sadd.s32 %s224, 1
      %s226 = scalar_select %p223, %s224, %s225
      %p229 = pneg %p223
      %p230 = scmp.eq.s32.totalorder %s30, 1
      %p231 = por %p229, %p230
      %p232 = scmp.ne.s32.totalorder %s224, %s227
      %p233 = scmp.eq.s32.totalorder %s30, 0
      %p234 = por %p232, %p233
      %p235 = scmp.ne.s32.totalorder %s224, %s227
      %p236 = scmp.eq.s32.totalorder %s35, 1
      %p237 = por %p235, %p236
      %p238 = scmp.ne.s32.totalorder %s227, %s228
      %p239 = scmp.eq.s32.totalorder %s35, 0
      %p240 = por %p238, %p239
      %p241 = scmp.ne.s32.totalorder %s227, %s228
      %p242 = scmp.eq.s32.totalorder %s36, 1
      %p243 = por %p241, %p242
      %p245 = scmp.ne.s32.totalorder %s228, %s244
      %p246 = scmp.eq.s32.totalorder %s36, 0
      %p247 = por %p245, %p246
      %s248 = ssub.s32 %s38, %s45
      %p249 = scmp.eq.s32.totalorder %s248, 0
      %s251 = sadd.s32 %s250, 1
      %s252 = scalar_select %p249, %s250, %s251
      %p255 = pneg %p249
      %p256 = scmp.eq.s32.totalorder %s30, 1
      %p257 = por %p255, %p256
      %p258 = scmp.ne.s32.totalorder %s250, %s253
      %p259 = scmp.eq.s32.totalorder %s30, 0
      %p260 = por %p258, %p259
      %p261 = scmp.ne.s32.totalorder %s250, %s253
      %p262 = scmp.eq.s32.totalorder %s35, 1
      %p263 = por %p261, %p262
      %p264 = scmp.ne.s32.totalorder %s253, %s254
      %p265 = scmp.eq.s32.totalorder %s35, 0
      %p266 = por %p264, %p265
      %p267 = scmp.ne.s32.totalorder %s253, %s254
      %p268 = scmp.eq.s32.totalorder %s36, 1
      %p269 = por %p267, %p268
      %p271 = scmp.ne.s32.totalorder %s254, %s270
      %p272 = scmp.eq.s32.totalorder %s36, 0
      %p273 = por %p271, %p272
      %s274 = ssub.s32 %s38, %s45
      %p275 = scmp.eq.s32.totalorder %s274, 0
      %s277 = sadd.s32 %s276, 1
      %s278 = scalar_select %p275, %s276, %s277
      %p281 = pneg %p275
      %p282 = scmp.eq.s32.totalorder %s30, 1
      %p283 = por %p281, %p282
      %p284 = scmp.ne.s32.totalorder %s276, %s279
      %p285 = scmp.eq.s32.totalorder %s30, 0
      %p286 = por %p284, %p285
      %p287 = scmp.ne.s32.totalorder %s276, %s279
      %p288 = scmp.eq.s32.totalorder %s35, 1
      %p289 = por %p287, %p288
      %p290 = scmp.ne.s32.totalorder %s279, %s280
      %p291 = scmp.eq.s32.totalorder %s35, 0
      %p292 = por %p290, %p291
      %p293 = scmp.ne.s32.totalorder %s279, %s280
      %p294 = scmp.eq.s32.totalorder %s36, 1
      %p295 = por %p293, %p294
      %p297 = scmp.ne.s32.totalorder %s280, %s296
      %p298 = scmp.eq.s32.totalorder %s36, 0
      %p299 = por %p297, %p298
      %s300 = ssub.s32 %s38, %s45
      %p301 = scmp.eq.s32.totalorder %s300, 0
      %s303 = sadd.s32 %s302, 1
      %s304 = scalar_select %p301, %s302, %s303
      %p307 = pneg %p301
      %p308 = scmp.eq.s32.totalorder %s30, 1
      %p309 = por %p307, %p308
      %p310 = scmp.ne.s32.totalorder %s302, %s305
      %p311 = scmp.eq.s32.totalorder %s30, 0
      %p312 = por %p310, %p311
      %p313 = scmp.ne.s32.totalorder %s302, %s305
      %p314 = scmp.eq.s32.totalorder %s35, 1
      %p315 = por %p313, %p314
      %p316 = scmp.ne.s32.totalorder %s305, %s306
      %p317 = scmp.eq.s32.totalorder %s35, 0
      %p318 = por %p316, %p317
      %p319 = scmp.ne.s32.totalorder %s305, %s306
      %p320 = scmp.eq.s32.totalorder %s36, 1
      %p321 = por %p319, %p320
      %p323 = scmp.ne.s32.totalorder %s306, %s322
      %p324 = scmp.eq.s32.totalorder %s36, 0
      %p325 = por %p323, %p324
      %s326 = ssub.s32 %s38, %s45
      %p327 = scmp.eq.s32.totalorder %s326, 0
      %s329 = sadd.s32 %s328, 1
      %s330 = scalar_select %p327, %s328, %s329
      %p333 = pneg %p327
      %p334 = scmp.eq.s32.totalorder %s30, 1
      %p335 = por %p333, %p334
      %p336 = scmp.ne.s32.totalorder %s328, %s331
      %p337 = scmp.eq.s32.totalorder %s30, 0
      %p338 = por %p336, %p337
      %p339 = scmp.ne.s32.totalorder %s328, %s331
      %p340 = scmp.eq.s32.totalorder %s35, 1
      %p341 = por %p339, %p340
      %p342 = scmp.ne.s32.totalorder %s331, %s332
      %p343 = scmp.eq.s32.totalorder %s35, 0
      %p344 = por %p342, %p343
      %p345 = scmp.ne.s32.totalorder %s331, %s332
      %p346 = scmp.eq.s32.totalorder %s36, 1
      %p347 = por %p345, %p346
      %p349 = scmp.ne.s32.totalorder %s332, %s348
      %p350 = scmp.eq.s32.totalorder %s36, 0
      %p351 = por %p349, %p350
      %s352 = ssub.s32 %s38, %s45
      %p353 = scmp.eq.s32.totalorder %s352, 0
      %s355 = sadd.s32 %s354, 1
      %s356 = scalar_select %p353, %s354, %s355
      %p359 = pneg %p353
      %p360 = scmp.eq.s32.totalorder %s30, 1
      %p361 = por %p359, %p360
      %p362 = scmp.ne.s32.totalorder %s354, %s357
      %p363 = scmp.eq.s32.totalorder %s30, 0
      %p364 = por %p362, %p363
      %p365 = scmp.ne.s32.totalorder %s354, %s357
      %p366 = scmp.eq.s32.totalorder %s35, 1
      %p367 = por %p365, %p366
      %p368 = scmp.ne.s32.totalorder %s357, %s358
      %p369 = scmp.eq.s32.totalorder %s35, 0
      %p370 = por %p368, %p369
      %p371 = scmp.ne.s32.totalorder %s357, %s358
      %p372 = scmp.eq.s32.totalorder %s36, 1
      %p373 = por %p371, %p372
      %p375 = scmp.ne.s32.totalorder %s358, %s374
      %p376 = scmp.eq.s32.totalorder %s36, 0
      %p377 = por %p375, %p376
      %s378 = ssub.s32 %s38, %s45
      %p379 = scmp.eq.s32.totalorder %s378, 0
      %s381 = sadd.s32 %s380, 1
      %s382 = scalar_select %p379, %s380, %s381
      %p385 = pneg %p379
      %p386 = scmp.eq.s32.totalorder %s30, 1
      %p387 = por %p385, %p386
      %p388 = scmp.ne.s32.totalorder %s380, %s383
      %p389 = scmp.eq.s32.totalorder %s30, 0
      %p390 = por %p388, %p389
      %p391 = scmp.ne.s32.totalorder %s380, %s383
      %p392 = scmp.eq.s32.totalorder %s35, 1
      %p393 = por %p391, %p392
      %p394 = scmp.ne.s32.totalorder %s383, %s384
      %p395 = scmp.eq.s32.totalorder %s35, 0
      %p396 = por %p394, %p395
      %p397 = scmp.ne.s32.totalorder %s383, %s384
      %p398 = scmp.eq.s32.totalorder %s36, 1
      %p399 = por %p397, %p398
      %p401 = scmp.ne.s32.totalorder %s384, %s400
      %p402 = scmp.eq.s32.totalorder %s36, 0
      %p403 = por %p401, %p402
      %s404 = ssub.s32 %s38, %s45
      %p405 = scmp.eq.s32.totalorder %s404, 0
      %s407 = sadd.s32 %s406, 1
      %s408 = scalar_select %p405, %s406, %s407
      %p411 = pneg %p405
      %p412 = scmp.eq.s32.totalorder %s30, 1
      %p413 = por %p411, %p412
      %p414 = scmp.ne.s32.totalorder %s406, %s409
      %p415 = scmp.eq.s32.totalorder %s30, 0
      %p416 = por %p414, %p415
      %p417 = scmp.ne.s32.totalorder %s406, %s409
      %p418 = scmp.eq.s32.totalorder %s35, 1
      %p419 = por %p417, %p418
      %p420 = scmp.ne.s32.totalorder %s409, %s410
      %p421 = scmp.eq.s32.totalorder %s35, 0
      %p422 = por %p420, %p421
      %p423 = scmp.ne.s32.totalorder %s409, %s410
      %p424 = scmp.eq.s32.totalorder %s36, 1
      %p425 = por %p423, %p424
      %p427 = scmp.ne.s32.totalorder %s410, %s426
      %p428 = scmp.eq.s32.totalorder %s36, 0
      %p429 = por %p427, %p428
      %s431 = sadd.s32 %s430, 1
      %p434 = scmp.eq.s32.totalorder %s30, 1
      %p435 = scmp.ne.s32.totalorder %s430, %s432
      %p436 = scmp.eq.s32.totalorder %s30, 0
      %p437 = por %p435, %p436
      %p438 = scmp.ne.s32.totalorder %s430, %s432
      %p439 = scmp.eq.s32.totalorder %s35, 1
      %p440 = por %p438, %p439
      %p441 = scmp.ne.s32.totalorder %s432, %s433
      %p442 = scmp.eq.s32.totalorder %s35, 0
      %p443 = por %p441, %p442
      %p444 = scmp.ne.s32.totalorder %s432, %s433
      %p445 = scmp.eq.s32.totalorder %s36, 1
      %p446 = por %p444, %p445
      %p448 = scmp.ne.s32.totalorder %s433, %s447
      %p449 = scmp.eq.s32.totalorder %s36, 0
      %p450 = por %p448, %p449
      %s452 = sadd.s32 %s451, 1
      %p455 = scmp.eq.s32.totalorder %s30, 1
      %p456 = scmp.ne.s32.totalorder %s451, %s453
      %p457 = scmp.eq.s32.totalorder %s30, 0
      %p458 = por %p456, %p457
      %p459 = scmp.ne.s32.totalorder %s451, %s453
      %p460 = scmp.eq.s32.totalorder %s35, 1
      %p461 = por %p459, %p460
      %p462 = scmp.ne.s32.totalorder %s453, %s454
      %p463 = scmp.eq.s32.totalorder %s35, 0
      %p464 = por %p462, %p463
      %p465 = scmp.ne.s32.totalorder %s453, %s454
      %p466 = scmp.eq.s32.totalorder %s36, 1
      %p467 = por %p465, %p466
      %p469 = scmp.ne.s32.totalorder %s454, %s468
      %p470 = scmp.eq.s32.totalorder %s36, 0
      %p471 = por %p469, %p470
      %s473 = sadd.s32 %s472, 1
      %p476 = scmp.eq.s32.totalorder %s30, 1
      %p477 = scmp.ne.s32.totalorder %s472, %s474
      %p478 = scmp.eq.s32.totalorder %s30, 0
      %p479 = por %p477, %p478
      %p480 = scmp.ne.s32.totalorder %s472, %s474
      %p481 = scmp.eq.s32.totalorder %s35, 1
      %p482 = por %p480, %p481
      %p483 = scmp.ne.s32.totalorder %s474, %s475
      %p484 = scmp.eq.s32.totalorder %s35, 0
      %p485 = por %p483, %p484
      %p486 = scmp.ne.s32.totalorder %s474, %s475
      %p487 = scmp.eq.s32.totalorder %s36, 1
      %p488 = por %p486, %p487
      %p490 = scmp.ne.s32.totalorder %s475, %s489
      %p491 = scmp.eq.s32.totalorder %s36, 0
      %p492 = por %p490, %p491
      %s493 = ssub.s32 %s37, %s49
      %p494 = scmp.eq.s32.totalorder %s493, 0
      %s496 = sadd.s32 %s495, 1
      %s497 = scalar_select %p494, %s495, %s496
      %p500 = pneg %p494
      %p501 = scmp.eq.s32.totalorder %s30, 1
      %p502 = por %p500, %p501
      %p503 = scmp.ne.s32.totalorder %s495, %s498
      %p504 = scmp.eq.s32.totalorder %s30, 0
      %p505 = por %p503, %p504
      %p506 = scmp.ne.s32.totalorder %s495, %s498
      %p507 = scmp.eq.s32.totalorder %s35, 1
      %p508 = por %p506, %p507
      %p509 = scmp.ne.s32.totalorder %s498, %s499
      %p510 = scmp.eq.s32.totalorder %s35, 0
      %p511 = por %p509, %p510
      %p512 = scmp.ne.s32.totalorder %s498, %s499
      %p513 = scmp.eq.s32.totalorder %s36, 1
      %p514 = por %p512, %p513
      %p516 = scmp.ne.s32.totalorder %s499, %s515
      %p517 = scmp.eq.s32.totalorder %s36, 0
      %p518 = por %p516, %p517
      %p519 = scmp.le.s32.totalorder 1, %s30
      %p520 = scmp.lt.s32.totalorder %s30, 3
      %p521 = pnand %p519, %p520
      %p522 = pneg %p521
      // Predicated region
      $region9: #{tpu_custom_call.1} parent=5 // pred_check
        _
      $region10: #{tpu_custom_call.1} parent=5 // pred_check_branch
        %524 = sbr.rel (%p521) target = $region12
      $region11: #{tpu_custom_call.1} parent=5 // pred_region
        %s525 = ssub.s32 %s30, 1
        // Predicated region
        $region13: #{tpu_custom_call.1} parent=11 // pred_check
          %p526 = pneg %p68
        $region14: #{tpu_custom_call.1} parent=11 // pred_check_branch
          %528 = sbr.rel (%p526) target = $region16
        $region15: #{tpu_custom_call.1} parent=11 // pred_region
          %s529 = smul.u32 2, %s39
          %p530 = scmp.lt.s32.totalorder %s529, 1
          %s531 = scalar_select %p530, %s529, 1
          %s532 = smul.addr %s531, 8
          %s533 = scalar_lea.vmem %s1, %s532
          %s534 = smul.u32 2, %s39
        $region16: #{tpu_custom_call.1} parent=11 // pred_fallthru
          _
        // Predicated region
        $region17: #{tpu_custom_call.1} parent=11 // pred_check
          %p535 = pneg %p89
        $region18: #{tpu_custom_call.1} parent=11 // pred_check_branch
          %537 = sbr.rel (%p535) target = $region20
        $region19: #{tpu_custom_call.1} parent=11 // pred_region
          _
        $region20: #{tpu_custom_call.1} parent=11 // pred_fallthru
          _
        // Predicated region
        $region21: #{tpu_custom_call.1} parent=11 // pred_check
          %p538 = pneg %p110
        $region22: #{tpu_custom_call.1} parent=11 // pred_check_branch
          %540 = sbr.rel (%p538) target = $region24
        $region23: #{tpu_custom_call.1} parent=11 // pred_region
          _
        $region24: #{tpu_custom_call.1} parent=11 // pred_fallthru
          _
        // Predicated region
        $region25: #{tpu_custom_call.1} parent=11 // pred_check
          %p541 = pneg %p443
        $region26: #{tpu_custom_call.1} parent=11 // pred_check_branch
          %543 = sbr.rel (%p541) target = $region28
        $region27: #{tpu_custom_call.1} parent=11 // pred_region
          _
        $region28: #{tpu_custom_call.1} parent=11 // pred_fallthru
          _
        // Predicated region
        $region29: #{tpu_custom_call.1} parent=11 // pred_check
          %p544 = pneg %p464
        $region30: #{tpu_custom_call.1} parent=11 // pred_check_branch
          %546 = sbr.rel (%p544) target = $region32
        $region31: #{tpu_custom_call.1} parent=11 // pred_region
          _
        $region32: #{tpu_custom_call.1} parent=11 // pred_fallthru
          _
        // Predicated region
        $region33: #{tpu_custom_call.1} parent=11 // pred_check
          %p547 = pneg %p485
        $region34: #{tpu_custom_call.1} parent=11 // pred_check_branch
          %549 = sbr.rel (%p547) target = $region36
        $region35: #{tpu_custom_call.1} parent=11 // pred_region
          _
        $region36: #{tpu_custom_call.1} parent=11 // pred_fallthru
          _
      $region12: #{tpu_custom_call.1} parent=5 // pred_fallthru
        _
      %p550 = scmp.lt.s32.totalorder %s30, 2
      // Predicated region
      $region37: #{tpu_custom_call.1} parent=5 // pred_check
        %p551 = pneg %p550
      $region38: #{tpu_custom_call.1} parent=5 // pred_check_branch
        %553 = sbr.rel (%p551) target = $region40
      $region39: #{tpu_custom_call.1} parent=5 // pred_region
        // Predicated region
        $region41: #{tpu_custom_call.1} parent=39 // pred_check
          %p554 = pneg %p130
        $region42: #{tpu_custom_call.1} parent=39 // pred_check_branch
          %556 = sbr.rel (%p554) target = $region44
        $region43: #{tpu_custom_call.1} parent=39 // pred_region
          %p557 = scmp.lt.s32.totalorder %s38, 1
          %s558 = scalar_select %p557, %s38, 1
          %s559 = scalar_lea.vmem %s4, %s558
        $region44: #{tpu_custom_call.1} parent=39 // pred_fallthru
          _
        // Predicated region
        $region45: #{tpu_custom_call.1} parent=39 // pred_check
          %p560 = pneg %p156
        $region46: #{tpu_custom_call.1} parent=39 // pred_check_branch
          %562 = sbr.rel (%p560) target = $region48
        $region47: #{tpu_custom_call.1} parent=39 // pred_region
          %p563 = scmp.lt.s32.totalorder %s38, 1
          %s564 = scalar_select %p563, %s38, 1
          %s565 = scalar_lea.vmem %s5, %s564
        $region48: #{tpu_custom_call.1} parent=39 // pred_fallthru
          _
        // Predicated region
        $region49: #{tpu_custom_call.1} parent=39 // pred_check
          %p566 = pneg %p182
        $region50: #{tpu_custom_call.1} parent=39 // pred_check_branch
          %568 = sbr.rel (%p566) target = $region52
        $region51: #{tpu_custom_call.1} parent=39 // pred_region
          %p569 = scmp.lt.s32.totalorder %s38, 1
          %s570 = scalar_select %p569, %s38, 1
          %s571 = smul.addr %s570, 4
          %s572 = smul.addr %s571, 4
          %s573 = scalar_lea.vmem %s6, %s572
        $region52: #{tpu_custom_call.1} parent=39 // pred_fallthru
          _
        // Predicated region
        $region53: #{tpu_custom_call.1} parent=39 // pred_check
          %p574 = pneg %p208
        $region54: #{tpu_custom_call.1} parent=39 // pred_check_branch
          %576 = sbr.rel (%p574) target = $region56
        $region55: #{tpu_custom_call.1} parent=39 // pred_region
          %p577 = scmp.lt.s32.totalorder %s38, 1
          %s578 = scalar_select %p577, %s38, 1
          %s579 = scalar_lea.vmem %s7, %s578
        $region56: #{tpu_custom_call.1} parent=39 // pred_fallthru
          _
        // Predicated region
        $region57: #{tpu_custom_call.1} parent=39 // pred_check
          %p580 = pneg %p234
        $region58: #{tpu_custom_call.1} parent=39 // pred_check_branch
          %582 = sbr.rel (%p580) target = $region60
        $region59: #{tpu_custom_call.1} parent=39 // pred_region
          %p583 = scmp.lt.s32.totalorder %s38, 1
          %s584 = scalar_select %p583, %s38, 1
          %s585 = smul.addr %s584, 4
          %s586 = smul.addr %s585, 4
          %s587 = scalar_lea.vmem %s8, %s586
        $region60: #{tpu_custom_call.1} parent=39 // pred_fallthru
          _
        // Predicated region
        $region61: #{tpu_custom_call.1} parent=39 // pred_check
          %p588 = pneg %p260
        $region62: #{tpu_custom_call.1} parent=39 // pred_check_branch
          %590 = sbr.rel (%p588) target = $region64
        $region63: #{tpu_custom_call.1} parent=39 // pred_region
          %p591 = scmp.lt.s32.totalorder %s38, 1
          %s592 = scalar_select %p591, %s38, 1
          %s593 = scalar_lea.vmem %s9, %s592
        $region64: #{tpu_custom_call.1} parent=39 // pred_fallthru
          _
        // Predicated region
        $region65: #{tpu_custom_call.1} parent=39 // pred_check
          %p594 = pneg %p286
        $region66: #{tpu_custom_call.1} parent=39 // pred_check_branch
          %596 = sbr.rel (%p594) target = $region68
        $region67: #{tpu_custom_call.1} parent=39 // pred_region
          %p597 = scmp.lt.s32.totalorder %s38, 1
          %s598 = scalar_select %p597, %s38, 1
          %s599 = scalar_lea.vmem %s10, %s598
        $region68: #{tpu_custom_call.1} parent=39 // pred_fallthru
          _
        // Predicated region
        $region69: #{tpu_custom_call.1} parent=39 // pred_check
          %p600 = pneg %p312
        $region70: #{tpu_custom_call.1} parent=39 // pred_check_branch
          %602 = sbr.rel (%p600) target = $region72
        $region71: #{tpu_custom_call.1} parent=39 // pred_region
          %p603 = scmp.lt.s32.totalorder %s38, 1
          %s604 = scalar_select %p603, %s38, 1
          %s605 = scalar_lea.vmem %s11, %s604
        $region72: #{tpu_custom_call.1} parent=39 // pred_fallthru
          _
        // Predicated region
        $region73: #{tpu_custom_call.1} parent=39 // pred_check
          %p606 = pneg %p338
        $region74: #{tpu_custom_call.1} parent=39 // pred_check_branch
          %608 = sbr.rel (%p606) target = $region76
        $region75: #{tpu_custom_call.1} parent=39 // pred_region
          %p609 = scmp.lt.s32.totalorder %s38, 1
          %s610 = scalar_select %p609, %s38, 1
          %s611 = smul.addr %s610, 4
          %s612 = smul.addr %s611, 4
          %s613 = scalar_lea.vmem %s12, %s612
        $region76: #{tpu_custom_call.1} parent=39 // pred_fallthru
          _
        // Predicated region
        $region77: #{tpu_custom_call.1} parent=39 // pred_check
          %p614 = pneg %p364
        $region78: #{tpu_custom_call.1} parent=39 // pred_check_branch
          %616 = sbr.rel (%p614) target = $region80
        $region79: #{tpu_custom_call.1} parent=39 // pred_region
          %p617 = scmp.lt.s32.totalorder %s38, 1
          %s618 = scalar_select %p617, %s38, 1
          %s619 = scalar_lea.vmem %s13, %s618
        $region80: #{tpu_custom_call.1} parent=39 // pred_fallthru
          _
        // Predicated region
        $region81: #{tpu_custom_call.1} parent=39 // pred_check
          %p620 = pneg %p390
        $region82: #{tpu_custom_call.1} parent=39 // pred_check_branch
          %622 = sbr.rel (%p620) target = $region84
        $region83: #{tpu_custom_call.1} parent=39 // pred_region
          %p623 = scmp.lt.s32.totalorder %s38, 1
          %s624 = scalar_select %p623, %s38, 1
          %s625 = smul.addr %s624, 16
          %s626 = smul.addr %s625, 4
          %s627 = scalar_lea.vmem %s14, %s626
        $region84: #{tpu_custom_call.1} parent=39 // pred_fallthru
          _
        // Predicated region
        $region85: #{tpu_custom_call.1} parent=39 // pred_check
          %p628 = pneg %p416
        $region86: #{tpu_custom_call.1} parent=39 // pred_check_branch
          %630 = sbr.rel (%p628) target = $region88
        $region87: #{tpu_custom_call.1} parent=39 // pred_region
          %p631 = scmp.lt.s32.totalorder %s38, 1
          %s632 = scalar_select %p631, %s38, 1
          %s633 = scalar_lea.vmem %s15, %s632
        $region88: #{tpu_custom_call.1} parent=39 // pred_fallthru
          _
      $region40: #{tpu_custom_call.1} parent=5 // pred_fallthru
        _
      %p634 = scmp.le.s32.totalorder 1, %s30
      %p635 = scmp.lt.s32.totalorder %s30, 3
      %p636 = pnand %p634, %p635
      %p637 = pneg %p636
      // Predicated region
      $region89: #{tpu_custom_call.1} parent=5 // pred_check
        _
      $region90: #{tpu_custom_call.1} parent=5 // pred_check_branch
        %639 = sbr.rel (%p636) target = $region92
      $region91: #{tpu_custom_call.1} parent=5 // pred_region
        %s640 = ssub.s32 %s30, 1
        %s641 = smul.u32 2, %s39
        %p642 = scmp.lt.s32.totalorder %s641, 1
        %s643 = scalar_select %p642, %s641, 1
        %s644 = smul.addr %s643, 8
        %s645 = scalar_lea.vmem %s1, %s644
        %p646 = pneg %p68
        %p647 = pneg %p65
        %p648 = pneg %p89
        %p649 = pneg %p86
        %p650 = pneg %p110
        %p651 = pneg %p107
        %p652 = scmp.lt.s32.totalorder %s40, 1
        %s653 = scalar_select %p652, %s40, 1
        %s654 = scalar_lea.vmem %s4, %s653
        %p655 = pneg %p136
        %p656 = pneg %p133
        %p657 = scmp.lt.s32.totalorder %s40, 1
        %s658 = scalar_select %p657, %s40, 1
        %s659 = scalar_lea.vmem %s5, %s658
        %p660 = pneg %p162
        %p661 = pneg %p159
        %p662 = scmp.lt.s32.totalorder %s40, 1
        %s663 = scalar_select %p662, %s40, 1
        %s664 = smul.addr %s663, 4
        %s665 = smul.addr %s664, 4
        %s666 = scalar_lea.vmem %s6, %s665
        %p667 = pneg %p188
        %p668 = pneg %p185
        %p669 = scmp.lt.s32.totalorder %s40, 1
        %s670 = scalar_select %p669, %s40, 1
        %s671 = scalar_lea.vmem %s7, %s670
        %p672 = pneg %p214
        %p673 = pneg %p211
        %p674 = scmp.lt.s32.totalorder %s40, 1
        %s675 = scalar_select %p674, %s40, 1
        %s676 = smul.addr %s675, 4
        %s677 = smul.addr %s676, 4
        %s678 = scalar_lea.vmem %s8, %s677
        %p679 = pneg %p240
        %p680 = pneg %p237
        %p681 = scmp.lt.s32.totalorder %s40, 1
        %s682 = scalar_select %p681, %s40, 1
        %s683 = scalar_lea.vmem %s9, %s682
        %p684 = pneg %p266
        %p685 = pneg %p263
        %p686 = scmp.lt.s32.totalorder %s40, 1
        %s687 = scalar_select %p686, %s40, 1
        %s688 = scalar_lea.vmem %s10, %s687
        %p689 = pneg %p292
        %p690 = pneg %p289
        %p691 = scmp.lt.s32.totalorder %s40, 1
        %s692 = scalar_select %p691, %s40, 1
        %s693 = scalar_lea.vmem %s11, %s692
        %p694 = pneg %p318
        %p695 = pneg %p315
        %p696 = scmp.lt.s32.totalorder %s40, 1
        %s697 = scalar_select %p696, %s40, 1
        %s698 = smul.addr %s697, 4
        %s699 = smul.addr %s698, 4
        %s700 = scalar_lea.vmem %s12, %s699
        %p701 = pneg %p344
        %p702 = pneg %p341
        %p703 = scmp.lt.s32.totalorder %s40, 1
        %s704 = scalar_select %p703, %s40, 1
        %s705 = scalar_lea.vmem %s13, %s704
        %p706 = pneg %p370
        %p707 = pneg %p367
        %p708 = scmp.lt.s32.totalorder %s40, 1
        %s709 = scalar_select %p708, %s40, 1
        %s710 = smul.addr %s709, 16
        %s711 = smul.addr %s710, 4
        %s712 = scalar_lea.vmem %s14, %s711
        %p713 = pneg %p396
        %p714 = pneg %p393
        %p715 = scmp.lt.s32.totalorder %s40, 1
        %s716 = scalar_select %p715, %s40, 1
        %s717 = scalar_lea.vmem %s15, %s716
        %p718 = pneg %p422
        %p719 = pneg %p419
        %p720 = pneg %p443
        %p721 = pneg %p440
        %p722 = pneg %p464
        %p723 = pneg %p461
        %p724 = pneg %p485
        %p725 = pneg %p482
        %p726 = pneg %p511
        %p727 = pneg %p508
        %s728 = smul.u32 2, %s39
        %p729 = scmp.lt.s32.totalorder %s728, 1
        %s730 = scalar_select %p729, %s728, 1
        %s731 = smul.addr %s730, 8
        %s732 = scalar_lea.vmem %s1, %s731
        %s733 = smul.u32 2, %s39
        %p734 = scmp.lt.s32.totalorder %s40, 1
        %s735 = scalar_select %p734, %s40, 1
        %s736 = scalar_lea.vmem %s4, %s735
        %p737 = scmp.lt.s32.totalorder %s40, 1
        %s738 = scalar_select %p737, %s40, 1
        %s739 = scalar_lea.vmem %s5, %s738
        %p740 = scmp.lt.s32.totalorder %s40, 1
        %s741 = scalar_select %p740, %s40, 1
        %s742 = smul.addr %s741, 4
        %s743 = smul.addr %s742, 4
        %s744 = scalar_lea.vmem %s6, %s743
        %p745 = scmp.lt.s32.totalorder %s40, 1
        %s746 = scalar_select %p745, %s40, 1
        %s747 = scalar_lea.vmem %s7, %s746
        %p748 = scmp.lt.s32.totalorder %s40, 1
        %s749 = scalar_select %p748, %s40, 1
        %s750 = smul.addr %s749, 4
        %s751 = smul.addr %s750, 4
        %s752 = scalar_lea.vmem %s8, %s751
        %p753 = scmp.lt.s32.totalorder %s40, 1
        %s754 = scalar_select %p753, %s40, 1
        %s755 = scalar_lea.vmem %s9, %s754
        %p756 = scmp.lt.s32.totalorder %s40, 1
        %s757 = scalar_select %p756, %s40, 1
        %s758 = scalar_lea.vmem %s10, %s757
        %p759 = scmp.lt.s32.totalorder %s40, 1
        %s760 = scalar_select %p759, %s40, 1
        %s761 = scalar_lea.vmem %s11, %s760
        %p762 = scmp.lt.s32.totalorder %s40, 1
        %s763 = scalar_select %p762, %s40, 1
        %s764 = smul.addr %s763, 4
        %s765 = smul.addr %s764, 4
        %s766 = scalar_lea.vmem %s12, %s765
        %p767 = scmp.lt.s32.totalorder %s40, 1
        %s768 = scalar_select %p767, %s40, 1
        %s769 = scalar_lea.vmem %s13, %s768
        %p770 = scmp.lt.s32.totalorder %s40, 1
        %s771 = scalar_select %p770, %s40, 1
        %s772 = smul.addr %s771, 16
        %s773 = smul.addr %s772, 4
        %s774 = scalar_lea.vmem %s14, %s773
        %p775 = scmp.lt.s32.totalorder %s40, 1
        %s776 = scalar_select %p775, %s40, 1
        %s777 = scalar_lea.vmem %s15, %s776
        %p781 = scmp.eq.s32.totalorder %s40, 0
        // Predicated region
        $region93: #{tpu_custom_call.1} parent=91 // pred_check
          %p782 = pneg %p781
        $region94: #{tpu_custom_call.1} parent=91 // pred_check_branch
          %784 = sbr.rel (%p782) target = $region96
        $region95: #{tpu_custom_call.1} parent=91 // pred_region
          %v785 = vld [vmem:[%s732] sm:$0xff]
          %v786 = vld [vmem:[%s732 + $0x8] sm:$0xff]
          %v787 = vld [vmem:[%s2] sm:$0xff]
          %v788 = vadd.f32 %v785, %v787
          %v789 = vadd.f32 %v786, %v787
          %vm790 = vcmask 261120
          %791 = vst.msk [vmem:[#allocation2] sm:$0xff] %vm790, %v788
          %792 = vst.msk [vmem:[#allocation2 + $0x8] sm:$0xff] %vm790, %v789
        $region96: #{tpu_custom_call.1} parent=91 // pred_fallthru
          _
        %v793 = vld [vmem:[#allocation2] sm:$0xff]
        %v794 = vld [vmem:[#allocation2 + $0x8] sm:$0xff]
        %v795 = vld [vmem:[%s736] sm:$0x1]
        %v796 = vld [vmem:[%s739] sm:$0x1]
        %vm797 = vcmask 261120
        %v798 = vsel %vm797, %v793, 0.0
        %799 = vadd.xlane.f32.xlu0 %v798
        %v800 = vpop.xlane.xlu0 %799
        %v801 = vsel %vm797, %v794, 0.0
        %802 = vadd.xlane.f32.xlu0 %v801
        %v803 = vpop.xlane.xlu0 %802
        %v804 = vrcp.pop 32.0
        %v805 = vmul.f32 %v800, %v804
        %v806 = vmul.f32 %v803, %v804
        %v807 = vsub.f32 %v793, %v805
        %v808 = vsub.f32 %v794, %v806
        %v809 = vmul.f32 %v807, %v807
        %v810 = vmul.f32 %v808, %v808
        %v811 = vsel %vm797, %v809, 0.0
        %812 = vadd.xlane.f32.xlu0 %v811
        %v813 = vpop.xlane.xlu0 %812
        %v814 = vsel %vm797, %v810, 0.0
        %815 = vadd.xlane.f32.xlu0 %v814
        %v816 = vpop.xlane.xlu0 %815
        %v817 = vmul.f32 %v813, %v804
        %v818 = vmul.f32 %v816, %v804
        %v819 = vadd.f32 %v817, 1e-05
        %v820 = vadd.f32 %v818, 1e-05
        %v821 = vrsqrt.pop %v819
        %v822 = vrsqrt.pop %v820
        %v823 = vmul.f32 %v807, %v821
        %v824 = vmul.f32 %v808, %v822
        %v826 = vlaneseq
        %v827 = vshrl.u32 %v826, 7
        %v828 = vsub.s32 0, %v827
        %v829 = vrot.slane %v795, %v828
        %v831 = vmul.f32 %v823, %v829
        %v832 = vmul.f32 %v824, %v829
        %v834 = vlaneseq
        %v835 = vshrl.u32 %v834, 7
        %v836 = vsub.s32 0, %v835
        %v837 = vrot.slane %v796, %v836
        %v839 = vadd.f32 %v831, %v837
        %v840 = vadd.f32 %v832, %v837
        %v841 = vpack.c.bf16 %v840, %v839
        %v842 = vld [vmem:[%s744] sm:$0xf]
        %v843 = vld [vmem:[%s744 + $0x4] sm:$0xf]
        %v844 = vld [vmem:[%s744 + $0x8] sm:$0xf]
        %v845 = vld [vmem:[%s744 + $0xc] sm:$0xf]
        %v846 = vld [vmem:[%s747] sm:$0x1]
        %v848 = vlaneseq
        %v849 = vshrl.u32 %v848, 7
        %v850 = vsub.s32 0, %v849
        %v851 = vrot.slane %v846, %v850
        %v857 = vunpack.c.l.b16 %v842
        %v858 = vunpack.c.l.b16 %v843
        %v859 = vunpack.c.l.b16 %v844
        %v860 = vunpack.c.l.b16 %v845
        %v861 = vpack.c.b16 %v858, %v857
        %v862 = vpack.c.b16 %v860, %v859
        %v866 = vsel %vm797, %v841, 0
        %868 = vmatprep.subr.bf16.mxu0 0
        %869 = vmatpush1.bf16.msra.mxu0 0
        %870 = vmatprep.subr.bf16.mxu0 0
        %871 = vmatpush1.bf16.msra.mxu0 0
        %872 = vmatprep.subr.bf16.mxu0 0
        %873 = vmatpush1.bf16.msra.mxu0 0
        %874 = vmatprep.subr.bf16.mxu0 0
        %875 = vmatpush1.bf16.msra.mxu0 0
        %876 = vmatprep.subr.bf16.mxu0 0
        %877 = vmatpush1.bf16.msra.mxu0 0
        %878 = vmatprep.subr.bf16.mxu0 0
        %879 = vmatpush1.bf16.msra.mxu0 0
        %880 = vmatprep.subr.bf16.mxu0 0
        %881 = vmatpush1.bf16.msra.mxu0 %v862
        %882 = vmatprep.subr.bf16.mxu0 0
        %883 = vmatpush1.bf16.msra.mxu0 %v861
        %884 = vmatprep.subr.bf16.mxu0 0
        %885 = vmatpush2.bf16.msra.mxu0 0
        %886 = vmatprep.subr.bf16.mxu0 0
        %887 = vmatpush2.bf16.msra.mxu0 0
        %888 = vmatprep.subr.bf16.mxu0 0
        %889 = vmatpush2.bf16.msra.mxu0 0
        %890 = vmatprep.subr.bf16.mxu0 0
        %891 = vmatpush2.bf16.msra.mxu0 0
        %892 = vmatprep.subr.bf16.mxu0 0
        %893 = vmatpush2.bf16.msra.mxu0 0
        %894 = vmatprep.subr.bf16.mxu0 0
        %895 = vmatpush2.bf16.msra.mxu0 0
        %896 = vmatprep.subr.bf16.mxu0 0
        %897 = vmatpush2.bf16.msra.mxu0 0
        %898 = vmatprep.subr.bf16.mxu0 0
        %899 = vmatpush2.bf16.msra.mxu0 0
        %900 = vmatprep.mubr.bf16.mxu0 0
        %901 = vmatmul.mubr.bf16.gmra.mxu0 %v866
        %v902 = vpop.f32.mrf.mxu0
        %v903 = vadd.f32 %v851, %v902
        %v904 = vpop.f32.mrf.mxu0
        %v905 = vpop.f32.mrf.mxu0
        %v906 = vadd.f32 %v851, %v905
        %v907 = vpop.f32.mrf.mxu0
        %908 = vdwg.mxu0
        %v909 = vmul.f32 %v903, 0.35355338
        %v910 = vmul.f32 %v906, 0.35355338
        %913 = vrot.lane.b32.xlu0 %v909, 120
        %v914 = vpop.permute.xlu0 %913
        %915 = vrot.lane.b32.xlu0 %v910, 120
        %v916 = vpop.permute.xlu0 %915
        %919 = vrot.lane.b32.xlu0 %v909, 112
        %v920 = vpop.permute.xlu0 %919
        %921 = vrot.lane.b32.xlu0 %v910, 112
        %v922 = vpop.permute.xlu0 %921
        %925 = vrot.lane.b32.xlu0 %v909, 104
        %v926 = vpop.permute.xlu0 %925
        %927 = vrot.lane.b32.xlu0 %v910, 104
        %v928 = vpop.permute.xlu0 %927
        %v931 = vcombine.low %v909, %v920
        %v932 = vcombine.high %v909, %v920
        %v934 = vunpack.c.l.s4 1983009808
        %v935 = vunpack.c.0.s8 %v934
        %v936 = vlaneseq
        %v937 = vshrl.u32 %v936, 7
        %v938 = vsub.s32 %v935, %v937
        %v939 = vrot.slane %v931, %v938
        %v941 = vunpack.c.l.s4 1983009808
        %v942 = vunpack.c.0.s8 %v941
        %v943 = vlaneseq
        %v944 = vshrl.u32 %v943, 7
        %v945 = vsub.s32 %v942, %v944
        %v946 = vrot.slane %v932, %v945
        %v947 = vcombine.low %v914, %v926
        %v948 = vcombine.high %v914, %v926
        %v950 = vunpack.c.l.s4 1983009808
        %v951 = vunpack.c.0.s8 %v950
        %v952 = vlaneseq
        %v953 = vshrl.u32 %v952, 7
        %v954 = vsub.s32 %v951, %v953
        %v955 = vrot.slane %v947, %v954
        %v957 = vunpack.c.l.s4 1983009808
        %v958 = vunpack.c.0.s8 %v957
        %v959 = vlaneseq
        %v960 = vshrl.u32 %v959, 7
        %v961 = vsub.s32 %v958, %v960
        %v962 = vrot.slane %v948, %v961
        %v963 = vcombine.low %v939, %v955
        %v964 = vcombine.high %v939, %v955
        %v966 = vunpack.c.l.s4 1934713408
        %v967 = vunpack.c.0.s8 %v966
        %v968 = vlaneseq
        %v969 = vshrl.u32 %v968, 7
        %v970 = vsub.s32 %v967, %v969
        %v971 = vrot.slane %v963, %v970
        %v973 = vunpack.c.l.s4 1934713408
        %v974 = vunpack.c.0.s8 %v973
        %v975 = vlaneseq
        %v976 = vshrl.u32 %v975, 7
        %v977 = vsub.s32 %v974, %v976
        %v978 = vrot.slane %v964, %v977
        %v979 = vcombine.low %v946, %v962
        %v980 = vcombine.high %v946, %v962
        %v982 = vunpack.c.l.s4 1934713408
        %v983 = vunpack.c.0.s8 %v982
        %v984 = vlaneseq
        %v985 = vshrl.u32 %v984, 7
        %v986 = vsub.s32 %v983, %v985
        %v987 = vrot.slane %v979, %v986
        %v989 = vunpack.c.l.s4 1934713408
        %v990 = vunpack.c.0.s8 %v989
        %v991 = vlaneseq
        %v992 = vshrl.u32 %v991, 7
        %v993 = vsub.s32 %v990, %v992
        %v994 = vrot.slane %v980, %v993
        %v995 = vcombine.high %v971, 0.0
        %v996 = vcombine.high %v978, 0.0
        %v997 = vcombine.high %v987, 0.0
        %v998 = vcombine.high %v994, 0.0
        %v999 = vcombine.low %v910, %v922
        %v1000 = vcombine.high %v910, %v922
        %v1002 = vunpack.c.l.s4 1983009808
        %v1003 = vunpack.c.0.s8 %v1002
        %v1004 = vlaneseq
        %v1005 = vshrl.u32 %v1004, 7
        %v1006 = vsub.s32 %v1003, %v1005
        %v1007 = vrot.slane %v999, %v1006
        %v1009 = vunpack.c.l.s4 1983009808
        %v1010 = vunpack.c.0.s8 %v1009
        %v1011 = vlaneseq
        %v1012 = vshrl.u32 %v1011, 7
        %v1013 = vsub.s32 %v1010, %v1012
        %v1014 = vrot.slane %v1000, %v1013
        %v1015 = vcombine.low %v916, %v928
        %v1016 = vcombine.high %v916, %v928
        %v1018 = vunpack.c.l.s4 1983009808
        %v1019 = vunpack.c.0.s8 %v1018
        %v1020 = vlaneseq
        %v1021 = vshrl.u32 %v1020, 7
        %v1022 = vsub.s32 %v1019, %v1021
        %v1023 = vrot.slane %v1015, %v1022
        %v1025 = vunpack.c.l.s4 1983009808
        %v1026 = vunpack.c.0.s8 %v1025
        %v1027 = vlaneseq
        %v1028 = vshrl.u32 %v1027, 7
        %v1029 = vsub.s32 %v1026, %v1028
        %v1030 = vrot.slane %v1016, %v1029
        %v1031 = vcombine.low %v1007, %v1023
        %v1032 = vcombine.high %v1007, %v1023
        %v1034 = vunpack.c.l.s4 1934713408
        %v1035 = vunpack.c.0.s8 %v1034
        %v1036 = vlaneseq
        %v1037 = vshrl.u32 %v1036, 7
        %v1038 = vsub.s32 %v1035, %v1037
        %v1039 = vrot.slane %v1031, %v1038
        %v1041 = vunpack.c.l.s4 1934713408
        %v1042 = vunpack.c.0.s8 %v1041
        %v1043 = vlaneseq
        %v1044 = vshrl.u32 %v1043, 7
        %v1045 = vsub.s32 %v1042, %v1044
        %v1046 = vrot.slane %v1032, %v1045
        %v1047 = vcombine.low %v1014, %v1030
        %v1048 = vcombine.high %v1014, %v1030
        %v1050 = vunpack.c.l.s4 1934713408
        %v1051 = vunpack.c.0.s8 %v1050
        %v1052 = vlaneseq
        %v1053 = vshrl.u32 %v1052, 7
        %v1054 = vsub.s32 %v1051, %v1053
        %v1055 = vrot.slane %v1047, %v1054
        %v1057 = vunpack.c.l.s4 1934713408
        %v1058 = vunpack.c.0.s8 %v1057
        %v1059 = vlaneseq
        %v1060 = vshrl.u32 %v1059, 7
        %v1061 = vsub.s32 %v1058, %v1060
        %v1062 = vrot.slane %v1048, %v1061
        %v1063 = vcombine.high %v1039, 0.0
        %v1064 = vcombine.high %v1046, 0.0
        %v1065 = vcombine.high %v1055, 0.0
        %v1066 = vcombine.high %v1062, 0.0
        %v1067 = vcombine.low %v971, %v978
        %v1069 = vunpack.c.l.s4 1983009808
        %v1070 = vunpack.c.0.s8 %v1069
        %v1071 = vlaneseq
        %v1072 = vshrl.u32 %v1071, 7
        %v1073 = vsub.s32 %v1070, %v1072
        %v1074 = vrot.slane %v1067, %v1073
        %v1075 = vcombine.low %v995, %v996
        %v1077 = vunpack.c.l.s4 1983009808
        %v1078 = vunpack.c.0.s8 %v1077
        %v1079 = vlaneseq
        %v1080 = vshrl.u32 %v1079, 7
        %v1081 = vsub.s32 %v1078, %v1080
        %v1082 = vrot.slane %v1075, %v1081
        %v1083 = vcombine.low %v987, %v994
        %v1085 = vunpack.c.l.s4 1983009808
        %v1086 = vunpack.c.0.s8 %v1085
        %v1087 = vlaneseq
        %v1088 = vshrl.u32 %v1087, 7
        %v1089 = vsub.s32 %v1086, %v1088
        %v1090 = vrot.slane %v1083, %v1089
        %v1091 = vcombine.low %v997, %v998
        %v1093 = vunpack.c.l.s4 1983009808
        %v1094 = vunpack.c.0.s8 %v1093
        %v1095 = vlaneseq
        %v1096 = vshrl.u32 %v1095, 7
        %v1097 = vsub.s32 %v1094, %v1096
        %v1098 = vrot.slane %v1091, %v1097
        %v1099 = vcombine.low %v1074, %v1082
        %v1100 = vcombine.high %v1074, %v1082
        %v1102 = vunpack.c.l.s4 1934713408
        %v1103 = vunpack.c.0.s8 %v1102
        %v1104 = vlaneseq
        %v1105 = vshrl.u32 %v1104, 7
        %v1106 = vsub.s32 %v1103, %v1105
        %v1107 = vrot.slane %v1099, %v1106
        %v1109 = vunpack.c.l.s4 1934713408
        %v1110 = vunpack.c.0.s8 %v1109
        %v1111 = vlaneseq
        %v1112 = vshrl.u32 %v1111, 7
        %v1113 = vsub.s32 %v1110, %v1112
        %v1114 = vrot.slane %v1100, %v1113
        %v1115 = vcombine.low %v1090, %v1098
        %v1116 = vcombine.high %v1090, %v1098
        %v1118 = vunpack.c.l.s4 1934713408
        %v1119 = vunpack.c.0.s8 %v1118
        %v1120 = vlaneseq
        %v1121 = vshrl.u32 %v1120, 7
        %v1122 = vsub.s32 %v1119, %v1121
        %v1123 = vrot.slane %v1115, %v1122
        %v1125 = vunpack.c.l.s4 1934713408
        %v1126 = vunpack.c.0.s8 %v1125
        %v1127 = vlaneseq
        %v1128 = vshrl.u32 %v1127, 7
        %v1129 = vsub.s32 %v1126, %v1128
        %v1130 = vrot.slane %v1116, %v1129
        %v1131 = vcombine.low %v1107, %v1123
        %v1132 = vcombine.high %v1107, %v1123
        %v1133 = vcombine.low %v1114, %v1130
        %v1134 = vcombine.high %v1114, %v1130
        %v1135 = vcombine.low %v1039, %v1046
        %v1137 = vunpack.c.l.s4 1983009808
        %v1138 = vunpack.c.0.s8 %v1137
        %v1139 = vlaneseq
        %v1140 = vshrl.u32 %v1139, 7
        %v1141 = vsub.s32 %v1138, %v1140
        %v1142 = vrot.slane %v1135, %v1141
        %v1143 = vcombine.low %v1063, %v1064
        %v1145 = vunpack.c.l.s4 1983009808
        %v1146 = vunpack.c.0.s8 %v1145
        %v1147 = vlaneseq
        %v1148 = vshrl.u32 %v1147, 7
        %v1149 = vsub.s32 %v1146, %v1148
        %v1150 = vrot.slane %v1143, %v1149
        %v1151 = vcombine.low %v1055, %v1062
        %v1153 = vunpack.c.l.s4 1983009808
        %v1154 = vunpack.c.0.s8 %v1153
        %v1155 = vlaneseq
        %v1156 = vshrl.u32 %v1155, 7
        %v1157 = vsub.s32 %v1154, %v1156
        %v1158 = vrot.slane %v1151, %v1157
        %v1159 = vcombine.low %v1065, %v1066
        %v1161 = vunpack.c.l.s4 1983009808
        %v1162 = vunpack.c.0.s8 %v1161
        %v1163 = vlaneseq
        %v1164 = vshrl.u32 %v1163, 7
        %v1165 = vsub.s32 %v1162, %v1164
        %v1166 = vrot.slane %v1159, %v1165
        %v1167 = vcombine.low %v1142, %v1150
        %v1168 = vcombine.high %v1142, %v1150
        %v1170 = vunpack.c.l.s4 1934713408
        %v1171 = vunpack.c.0.s8 %v1170
        %v1172 = vlaneseq
        %v1173 = vshrl.u32 %v1172, 7
        %v1174 = vsub.s32 %v1171, %v1173
        %v1175 = vrot.slane %v1167, %v1174
        %v1177 = vunpack.c.l.s4 1934713408
        %v1178 = vunpack.c.0.s8 %v1177
        %v1179 = vlaneseq
        %v1180 = vshrl.u32 %v1179, 7
        %v1181 = vsub.s32 %v1178, %v1180
        %v1182 = vrot.slane %v1168, %v1181
        %v1183 = vcombine.low %v1158, %v1166
        %v1184 = vcombine.high %v1158, %v1166
        %v1186 = vunpack.c.l.s4 1934713408
        %v1187 = vunpack.c.0.s8 %v1186
        %v1188 = vlaneseq
        %v1189 = vshrl.u32 %v1188, 7
        %v1190 = vsub.s32 %v1187, %v1189
        %v1191 = vrot.slane %v1183, %v1190
        %v1193 = vunpack.c.l.s4 1934713408
        %v1194 = vunpack.c.0.s8 %v1193
        %v1195 = vlaneseq
        %v1196 = vshrl.u32 %v1195, 7
        %v1197 = vsub.s32 %v1194, %v1196
        %v1198 = vrot.slane %v1184, %v1197
        %v1199 = vcombine.low %v1175, %v1191
        %v1200 = vcombine.high %v1175, %v1191
        %v1201 = vcombine.low %v1182, %v1198
        %v1202 = vcombine.high %v1182, %v1198
        %v1203 = vpack.c.bf16 %v1131, %v1131
        %v1204 = vpack.c.bf16 %v1132, %v1132
        %v1205 = vpack.c.bf16 %v1133, %v1133
        %v1206 = vpack.c.bf16 %v1134, %v1134
        %v1207 = vpack.c.bf16 %v1199, %v1199
        %v1208 = vpack.c.bf16 %v1200, %v1200
        %v1209 = vpack.c.bf16 %v1201, %v1201
        %v1210 = vpack.c.bf16 %v1202, %v1202
        %1213 = vrot.lane.b32.xlu0 %v903, 120
        %v1214 = vpop.permute.xlu0 %1213
        %1215 = vrot.lane.b32.xlu0 %v906, 120
        %v1216 = vpop.permute.xlu0 %1215
        %1217 = vrot.lane.b32.xlu0 %v903, 112
        %v1218 = vpop.permute.xlu0 %1217
        %1219 = vrot.lane.b32.xlu0 %v906, 112
        %v1220 = vpop.permute.xlu0 %1219
        %1221 = vrot.lane.b32.xlu0 %v903, 104
        %v1222 = vpop.permute.xlu0 %1221
        %1223 = vrot.lane.b32.xlu0 %v906, 104
        %v1224 = vpop.permute.xlu0 %1223
        %1225 = vrot.lane.b32.xlu0 %v903, 96
        %v1226 = vpop.permute.xlu0 %1225
        %1227 = vrot.lane.b32.xlu0 %v906, 96
        %v1228 = vpop.permute.xlu0 %1227
        %1229 = vrot.lane.b32.xlu0 %v1214, 96
        %v1230 = vpop.permute.xlu0 %1229
        %1231 = vrot.lane.b32.xlu0 %v1216, 96
        %v1232 = vpop.permute.xlu0 %1231
        %1233 = vrot.lane.b32.xlu0 %v1218, 96
        %v1234 = vpop.permute.xlu0 %1233
        %1235 = vrot.lane.b32.xlu0 %v1220, 96
        %v1236 = vpop.permute.xlu0 %1235
        %1237 = vrot.lane.b32.xlu0 %v1222, 96
        %v1238 = vpop.permute.xlu0 %1237
        %1239 = vrot.lane.b32.xlu0 %v1224, 96
        %v1240 = vpop.permute.xlu0 %1239
        %v1249 = vcombine.low %v1226, %v1234
        %v1250 = vcombine.high %v1226, %v1234
        %v1252 = vunpack.c.l.s4 1983009808
        %v1253 = vunpack.c.0.s8 %v1252
        %v1254 = vlaneseq
        %v1255 = vshrl.u32 %v1254, 7
        %v1256 = vsub.s32 %v1253, %v1255
        %v1257 = vrot.slane %v1249, %v1256
        %v1259 = vunpack.c.l.s4 1983009808
        %v1260 = vunpack.c.0.s8 %v1259
        %v1261 = vlaneseq
        %v1262 = vshrl.u32 %v1261, 7
        %v1263 = vsub.s32 %v1260, %v1262
        %v1264 = vrot.slane %v1250, %v1263
        %v1265 = vcombine.low %v1230, %v1238
        %v1266 = vcombine.high %v1230, %v1238
        %v1268 = vunpack.c.l.s4 1983009808
        %v1269 = vunpack.c.0.s8 %v1268
        %v1270 = vlaneseq
        %v1271 = vshrl.u32 %v1270, 7
        %v1272 = vsub.s32 %v1269, %v1271
        %v1273 = vrot.slane %v1265, %v1272
        %v1275 = vunpack.c.l.s4 1983009808
        %v1276 = vunpack.c.0.s8 %v1275
        %v1277 = vlaneseq
        %v1278 = vshrl.u32 %v1277, 7
        %v1279 = vsub.s32 %v1276, %v1278
        %v1280 = vrot.slane %v1266, %v1279
        %v1281 = vcombine.low %v1257, %v1273
        %v1282 = vcombine.high %v1257, %v1273
        %v1284 = vunpack.c.l.s4 1934713408
        %v1285 = vunpack.c.0.s8 %v1284
        %v1286 = vlaneseq
        %v1287 = vshrl.u32 %v1286, 7
        %v1288 = vsub.s32 %v1285, %v1287
        %v1289 = vrot.slane %v1281, %v1288
        %v1291 = vunpack.c.l.s4 1934713408
        %v1292 = vunpack.c.0.s8 %v1291
        %v1293 = vlaneseq
        %v1294 = vshrl.u32 %v1293, 7
        %v1295 = vsub.s32 %v1292, %v1294
        %v1296 = vrot.slane %v1282, %v1295
        %v1297 = vcombine.low %v1264, %v1280
        %v1298 = vcombine.high %v1264, %v1280
        %v1300 = vunpack.c.l.s4 1934713408
        %v1301 = vunpack.c.0.s8 %v1300
        %v1302 = vlaneseq
        %v1303 = vshrl.u32 %v1302, 7
        %v1304 = vsub.s32 %v1301, %v1303
        %v1305 = vrot.slane %v1297, %v1304
        %v1307 = vunpack.c.l.s4 1934713408
        %v1308 = vunpack.c.0.s8 %v1307
        %v1309 = vlaneseq
        %v1310 = vshrl.u32 %v1309, 7
        %v1311 = vsub.s32 %v1308, %v1310
        %v1312 = vrot.slane %v1298, %v1311
        %v1313 = vcombine.high %v1289, 0.0
        %v1314 = vcombine.high %v1296, 0.0
        %v1315 = vcombine.high %v1305, 0.0
        %v1316 = vcombine.high %v1312, 0.0
        %v1317 = vcombine.low %v1228, %v1236
        %v1318 = vcombine.high %v1228, %v1236
        %v1320 = vunpack.c.l.s4 1983009808
        %v1321 = vunpack.c.0.s8 %v1320
        %v1322 = vlaneseq
        %v1323 = vshrl.u32 %v1322, 7
        %v1324 = vsub.s32 %v1321, %v1323
        %v1325 = vrot.slane %v1317, %v1324
        %v1327 = vunpack.c.l.s4 1983009808
        %v1328 = vunpack.c.0.s8 %v1327
        %v1329 = vlaneseq
        %v1330 = vshrl.u32 %v1329, 7
        %v1331 = vsub.s32 %v1328, %v1330
        %v1332 = vrot.slane %v1318, %v1331
        %v1333 = vcombine.low %v1232, %v1240
        %v1334 = vcombine.high %v1232, %v1240
        %v1336 = vunpack.c.l.s4 1983009808
        %v1337 = vunpack.c.0.s8 %v1336
        %v1338 = vlaneseq
        %v1339 = vshrl.u32 %v1338, 7
        %v1340 = vsub.s32 %v1337, %v1339
        %v1341 = vrot.slane %v1333, %v1340
        %v1343 = vunpack.c.l.s4 1983009808
        %v1344 = vunpack.c.0.s8 %v1343
        %v1345 = vlaneseq
        %v1346 = vshrl.u32 %v1345, 7
        %v1347 = vsub.s32 %v1344, %v1346
        %v1348 = vrot.slane %v1334, %v1347
        %v1349 = vcombine.low %v1325, %v1341
        %v1350 = vcombine.high %v1325, %v1341
        %v1352 = vunpack.c.l.s4 1934713408
        %v1353 = vunpack.c.0.s8 %v1352
        %v1354 = vlaneseq
        %v1355 = vshrl.u32 %v1354, 7
        %v1356 = vsub.s32 %v1353, %v1355
        %v1357 = vrot.slane %v1349, %v1356
        %v1359 = vunpack.c.l.s4 1934713408
        %v1360 = vunpack.c.0.s8 %v1359
        %v1361 = vlaneseq
        %v1362 = vshrl.u32 %v1361, 7
        %v1363 = vsub.s32 %v1360, %v1362
        %v1364 = vrot.slane %v1350, %v1363
        %v1365 = vcombine.low %v1332, %v1348
        %v1366 = vcombine.high %v1332, %v1348
        %v1368 = vunpack.c.l.s4 1934713408
        %v1369 = vunpack.c.0.s8 %v1368
        %v1370 = vlaneseq
        %v1371 = vshrl.u32 %v1370, 7
        %v1372 = vsub.s32 %v1369, %v1371
        %v1373 = vrot.slane %v1365, %v1372
        %v1375 = vunpack.c.l.s4 1934713408
        %v1376 = vunpack.c.0.s8 %v1375
        %v1377 = vlaneseq
        %v1378 = vshrl.u32 %v1377, 7
        %v1379 = vsub.s32 %v1376, %v1378
        %v1380 = vrot.slane %v1366, %v1379
        %v1381 = vcombine.high %v1357, 0.0
        %v1382 = vcombine.high %v1364, 0.0
        %v1383 = vcombine.high %v1373, 0.0
        %v1384 = vcombine.high %v1380, 0.0
        %v1385 = vcombine.low %v1289, %v1296
        %v1387 = vunpack.c.l.s4 1983009808
        %v1388 = vunpack.c.0.s8 %v1387
        %v1389 = vlaneseq
        %v1390 = vshrl.u32 %v1389, 7
        %v1391 = vsub.s32 %v1388, %v1390
        %v1392 = vrot.slane %v1385, %v1391
        %v1393 = vcombine.low %v1313, %v1314
        %v1395 = vunpack.c.l.s4 1983009808
        %v1396 = vunpack.c.0.s8 %v1395
        %v1397 = vlaneseq
        %v1398 = vshrl.u32 %v1397, 7
        %v1399 = vsub.s32 %v1396, %v1398
        %v1400 = vrot.slane %v1393, %v1399
        %v1401 = vcombine.low %v1305, %v1312
        %v1403 = vunpack.c.l.s4 1983009808
        %v1404 = vunpack.c.0.s8 %v1403
        %v1405 = vlaneseq
        %v1406 = vshrl.u32 %v1405, 7
        %v1407 = vsub.s32 %v1404, %v1406
        %v1408 = vrot.slane %v1401, %v1407
        %v1409 = vcombine.low %v1315, %v1316
        %v1411 = vunpack.c.l.s4 1983009808
        %v1412 = vunpack.c.0.s8 %v1411
        %v1413 = vlaneseq
        %v1414 = vshrl.u32 %v1413, 7
        %v1415 = vsub.s32 %v1412, %v1414
        %v1416 = vrot.slane %v1409, %v1415
        %v1417 = vcombine.low %v1392, %v1400
        %v1418 = vcombine.high %v1392, %v1400
        %v1420 = vunpack.c.l.s4 1934713408
        %v1421 = vunpack.c.0.s8 %v1420
        %v1422 = vlaneseq
        %v1423 = vshrl.u32 %v1422, 7
        %v1424 = vsub.s32 %v1421, %v1423
        %v1425 = vrot.slane %v1417, %v1424
        %v1427 = vunpack.c.l.s4 1934713408
        %v1428 = vunpack.c.0.s8 %v1427
        %v1429 = vlaneseq
        %v1430 = vshrl.u32 %v1429, 7
        %v1431 = vsub.s32 %v1428, %v1430
        %v1432 = vrot.slane %v1418, %v1431
        %v1433 = vcombine.low %v1408, %v1416
        %v1434 = vcombine.high %v1408, %v1416
        %v1436 = vunpack.c.l.s4 1934713408
        %v1437 = vunpack.c.0.s8 %v1436
        %v1438 = vlaneseq
        %v1439 = vshrl.u32 %v1438, 7
        %v1440 = vsub.s32 %v1437, %v1439
        %v1441 = vrot.slane %v1433, %v1440
        %v1443 = vunpack.c.l.s4 1934713408
        %v1444 = vunpack.c.0.s8 %v1443
        %v1445 = vlaneseq
        %v1446 = vshrl.u32 %v1445, 7
        %v1447 = vsub.s32 %v1444, %v1446
        %v1448 = vrot.slane %v1434, %v1447
        %v1449 = vcombine.low %v1425, %v1441
        %v1450 = vcombine.high %v1425, %v1441
        %v1451 = vcombine.low %v1432, %v1448
        %v1452 = vcombine.high %v1432, %v1448
        %v1453 = vcombine.low %v1357, %v1364
        %v1455 = vunpack.c.l.s4 1983009808
        %v1456 = vunpack.c.0.s8 %v1455
        %v1457 = vlaneseq
        %v1458 = vshrl.u32 %v1457, 7
        %v1459 = vsub.s32 %v1456, %v1458
        %v1460 = vrot.slane %v1453, %v1459
        %v1461 = vcombine.low %v1381, %v1382
        %v1463 = vunpack.c.l.s4 1983009808
        %v1464 = vunpack.c.0.s8 %v1463
        %v1465 = vlaneseq
        %v1466 = vshrl.u32 %v1465, 7
        %v1467 = vsub.s32 %v1464, %v1466
        %v1468 = vrot.slane %v1461, %v1467
        %v1469 = vcombine.low %v1373, %v1380
        %v1471 = vunpack.c.l.s4 1983009808
        %v1472 = vunpack.c.0.s8 %v1471
        %v1473 = vlaneseq
        %v1474 = vshrl.u32 %v1473, 7
        %v1475 = vsub.s32 %v1472, %v1474
        %v1476 = vrot.slane %v1469, %v1475
        %v1477 = vcombine.low %v1383, %v1384
        %v1479 = vunpack.c.l.s4 1983009808
        %v1480 = vunpack.c.0.s8 %v1479
        %v1481 = vlaneseq
        %v1482 = vshrl.u32 %v1481, 7
        %v1483 = vsub.s32 %v1480, %v1482
        %v1484 = vrot.slane %v1477, %v1483
        %v1485 = vcombine.low %v1460, %v1468
        %v1486 = vcombine.high %v1460, %v1468
        %v1488 = vunpack.c.l.s4 1934713408
        %v1489 = vunpack.c.0.s8 %v1488
        %v1490 = vlaneseq
        %v1491 = vshrl.u32 %v1490, 7
        %v1492 = vsub.s32 %v1489, %v1491
        %v1493 = vrot.slane %v1485, %v1492
        %v1495 = vunpack.c.l.s4 1934713408
        %v1496 = vunpack.c.0.s8 %v1495
        %v1497 = vlaneseq
        %v1498 = vshrl.u32 %v1497, 7
        %v1499 = vsub.s32 %v1496, %v1498
        %v1500 = vrot.slane %v1486, %v1499
        %v1501 = vcombine.low %v1476, %v1484
        %v1502 = vcombine.high %v1476, %v1484
        %v1504 = vunpack.c.l.s4 1934713408
        %v1505 = vunpack.c.0.s8 %v1504
        %v1506 = vlaneseq
        %v1507 = vshrl.u32 %v1506, 7
        %v1508 = vsub.s32 %v1505, %v1507
        %v1509 = vrot.slane %v1501, %v1508
        %v1511 = vunpack.c.l.s4 1934713408
        %v1512 = vunpack.c.0.s8 %v1511
        %v1513 = vlaneseq
        %v1514 = vshrl.u32 %v1513, 7
        %v1515 = vsub.s32 %v1512, %v1514
        %v1516 = vrot.slane %v1502, %v1515
        %v1517 = vcombine.low %v1493, %v1509
        %v1518 = vcombine.high %v1493, %v1509
        %v1519 = vcombine.low %v1500, %v1516
        %v1520 = vcombine.high %v1500, %v1516
        %v1521 = vpack.c.bf16 %v1449, %v1449
        %v1522 = vpack.c.bf16 %v1450, %v1450
        %v1523 = vpack.c.bf16 %v1451, %v1451
        %v1524 = vpack.c.bf16 %v1452, %v1452
        %v1525 = vpack.c.bf16 %v1517, %v1517
        %v1526 = vpack.c.bf16 %v1518, %v1518
        %v1527 = vpack.c.bf16 %v1519, %v1519
        %v1528 = vpack.c.bf16 %v1520, %v1520
        %1529 = vrot.lane.b32.xlu0 %v903, 64
        %v1530 = vpop.permute.xlu0 %1529
        %1531 = vrot.lane.b32.xlu0 %v906, 64
        %v1532 = vpop.permute.xlu0 %1531
        %1533 = vrot.lane.b32.xlu0 %v1214, 64
        %v1534 = vpop.permute.xlu0 %1533
        %1535 = vrot.lane.b32.xlu0 %v1216, 64
        %v1536 = vpop.permute.xlu0 %1535
        %1537 = vrot.lane.b32.xlu0 %v1218, 64
        %v1538 = vpop.permute.xlu0 %1537
        %1539 = vrot.lane.b32.xlu0 %v1220, 64
        %v1540 = vpop.permute.xlu0 %1539
        %1541 = vrot.lane.b32.xlu0 %v1222, 64
        %v1542 = vpop.permute.xlu0 %1541
        %1543 = vrot.lane.b32.xlu0 %v1224, 64
        %v1544 = vpop.permute.xlu0 %1543
        %v1553 = vcombine.low %v1530, %v1538
        %v1554 = vcombine.high %v1530, %v1538
        %v1556 = vunpack.c.l.s4 1983009808
        %v1557 = vunpack.c.0.s8 %v1556
        %v1558 = vlaneseq
        %v1559 = vshrl.u32 %v1558, 7
        %v1560 = vsub.s32 %v1557, %v1559
        %v1561 = vrot.slane %v1553, %v1560
        %v1563 = vunpack.c.l.s4 1983009808
        %v1564 = vunpack.c.0.s8 %v1563
        %v1565 = vlaneseq
        %v1566 = vshrl.u32 %v1565, 7
        %v1567 = vsub.s32 %v1564, %v1566
        %v1568 = vrot.slane %v1554, %v1567
        %v1569 = vcombine.low %v1534, %v1542
        %v1570 = vcombine.high %v1534, %v1542
        %v1572 = vunpack.c.l.s4 1983009808
        %v1573 = vunpack.c.0.s8 %v1572
        %v1574 = vlaneseq
        %v1575 = vshrl.u32 %v1574, 7
        %v1576 = vsub.s32 %v1573, %v1575
        %v1577 = vrot.slane %v1569, %v1576
        %v1579 = vunpack.c.l.s4 1983009808
        %v1580 = vunpack.c.0.s8 %v1579
        %v1581 = vlaneseq
        %v1582 = vshrl.u32 %v1581, 7
        %v1583 = vsub.s32 %v1580, %v1582
        %v1584 = vrot.slane %v1570, %v1583
        %v1585 = vcombine.low %v1561, %v1577
        %v1586 = vcombine.high %v1561, %v1577
        %v1588 = vunpack.c.l.s4 1934713408
        %v1589 = vunpack.c.0.s8 %v1588
        %v1590 = vlaneseq
        %v1591 = vshrl.u32 %v1590, 7
        %v1592 = vsub.s32 %v1589, %v1591
        %v1593 = vrot.slane %v1585, %v1592
        %v1595 = vunpack.c.l.s4 1934713408
        %v1596 = vunpack.c.0.s8 %v1595
        %v1597 = vlaneseq
        %v1598 = vshrl.u32 %v1597, 7
        %v1599 = vsub.s32 %v1596, %v1598
        %v1600 = vrot.slane %v1586, %v1599
        %v1601 = vcombine.low %v1568, %v1584
        %v1602 = vcombine.high %v1568, %v1584
        %v1604 = vunpack.c.l.s4 1934713408
        %v1605 = vunpack.c.0.s8 %v1604
        %v1606 = vlaneseq
        %v1607 = vshrl.u32 %v1606, 7
        %v1608 = vsub.s32 %v1605, %v1607
        %v1609 = vrot.slane %v1601, %v1608
        %v1611 = vunpack.c.l.s4 1934713408
        %v1612 = vunpack.c.0.s8 %v1611
        %v1613 = vlaneseq
        %v1614 = vshrl.u32 %v1613, 7
        %v1615 = vsub.s32 %v1612, %v1614
        %v1616 = vrot.slane %v1602, %v1615
        %v1617 = vcombine.high %v1593, 0.0
        %v1618 = vcombine.high %v1600, 0.0
        %v1619 = vcombine.high %v1609, 0.0
        %v1620 = vcombine.high %v1616, 0.0
        %v1621 = vcombine.low %v1532, %v1540
        %v1622 = vcombine.high %v1532, %v1540
        %v1624 = vunpack.c.l.s4 1983009808
        %v1625 = vunpack.c.0.s8 %v1624
        %v1626 = vlaneseq
        %v1627 = vshrl.u32 %v1626, 7
        %v1628 = vsub.s32 %v1625, %v1627
        %v1629 = vrot.slane %v1621, %v1628
        %v1631 = vunpack.c.l.s4 1983009808
        %v1632 = vunpack.c.0.s8 %v1631
        %v1633 = vlaneseq
        %v1634 = vshrl.u32 %v1633, 7
        %v1635 = vsub.s32 %v1632, %v1634
        %v1636 = vrot.slane %v1622, %v1635
        %v1637 = vcombine.low %v1536, %v1544
        %v1638 = vcombine.high %v1536, %v1544
        %v1640 = vunpack.c.l.s4 1983009808
        %v1641 = vunpack.c.0.s8 %v1640
        %v1642 = vlaneseq
        %v1643 = vshrl.u32 %v1642, 7
        %v1644 = vsub.s32 %v1641, %v1643
        %v1645 = vrot.slane %v1637, %v1644
        %v1647 = vunpack.c.l.s4 1983009808
        %v1648 = vunpack.c.0.s8 %v1647
        %v1649 = vlaneseq
        %v1650 = vshrl.u32 %v1649, 7
        %v1651 = vsub.s32 %v1648, %v1650
        %v1652 = vrot.slane %v1638, %v1651
        %v1653 = vcombine.low %v1629, %v1645
        %v1654 = vcombine.high %v1629, %v1645
        %v1656 = vunpack.c.l.s4 1934713408
        %v1657 = vunpack.c.0.s8 %v1656
        %v1658 = vlaneseq
        %v1659 = vshrl.u32 %v1658, 7
        %v1660 = vsub.s32 %v1657, %v1659
        %v1661 = vrot.slane %v1653, %v1660
        %v1663 = vunpack.c.l.s4 1934713408
        %v1664 = vunpack.c.0.s8 %v1663
        %v1665 = vlaneseq
        %v1666 = vshrl.u32 %v1665, 7
        %v1667 = vsub.s32 %v1664, %v1666
        %v1668 = vrot.slane %v1654, %v1667
        %v1669 = vcombine.low %v1636, %v1652
        %v1670 = vcombine.high %v1636, %v1652
        %v1672 = vunpack.c.l.s4 1934713408
        %v1673 = vunpack.c.0.s8 %v1672
        %v1674 = vlaneseq
        %v1675 = vshrl.u32 %v1674, 7
        %v1676 = vsub.s32 %v1673, %v1675
        %v1677 = vrot.slane %v1669, %v1676
        %v1679 = vunpack.c.l.s4 1934713408
        %v1680 = vunpack.c.0.s8 %v1679
        %v1681 = vlaneseq
        %v1682 = vshrl.u32 %v1681, 7
        %v1683 = vsub.s32 %v1680, %v1682
        %v1684 = vrot.slane %v1670, %v1683
        %v1685 = vcombine.high %v1661, 0.0
        %v1686 = vcombine.high %v1668, 0.0
        %v1687 = vcombine.high %v1677, 0.0
        %v1688 = vcombine.high %v1684, 0.0
        %v1689 = vcombine.low %v1593, %v1600
        %v1691 = vunpack.c.l.s4 1983009808
        %v1692 = vunpack.c.0.s8 %v1691
        %v1693 = vlaneseq
        %v1694 = vshrl.u32 %v1693, 7
        %v1695 = vsub.s32 %v1692, %v1694
        %v1696 = vrot.slane %v1689, %v1695
        %v1697 = vcombine.low %v1617, %v1618
        %v1699 = vunpack.c.l.s4 1983009808
        %v1700 = vunpack.c.0.s8 %v1699
        %v1701 = vlaneseq
        %v1702 = vshrl.u32 %v1701, 7
        %v1703 = vsub.s32 %v1700, %v1702
        %v1704 = vrot.slane %v1697, %v1703
        %v1705 = vcombine.low %v1609, %v1616
        %v1707 = vunpack.c.l.s4 1983009808
        %v1708 = vunpack.c.0.s8 %v1707
        %v1709 = vlaneseq
        %v1710 = vshrl.u32 %v1709, 7
        %v1711 = vsub.s32 %v1708, %v1710
        %v1712 = vrot.slane %v1705, %v1711
        %v1713 = vcombine.low %v1619, %v1620
        %v1715 = vunpack.c.l.s4 1983009808
        %v1716 = vunpack.c.0.s8 %v1715
        %v1717 = vlaneseq
        %v1718 = vshrl.u32 %v1717, 7
        %v1719 = vsub.s32 %v1716, %v1718
        %v1720 = vrot.slane %v1713, %v1719
        %v1721 = vcombine.low %v1696, %v1704
        %v1722 = vcombine.high %v1696, %v1704
        %v1724 = vunpack.c.l.s4 1934713408
        %v1725 = vunpack.c.0.s8 %v1724
        %v1726 = vlaneseq
        %v1727 = vshrl.u32 %v1726, 7
        %v1728 = vsub.s32 %v1725, %v1727
        %v1729 = vrot.slane %v1721, %v1728
        %v1731 = vunpack.c.l.s4 1934713408
        %v1732 = vunpack.c.0.s8 %v1731
        %v1733 = vlaneseq
        %v1734 = vshrl.u32 %v1733, 7
        %v1735 = vsub.s32 %v1732, %v1734
        %v1736 = vrot.slane %v1722, %v1735
        %v1737 = vcombine.low %v1712, %v1720
        %v1738 = vcombine.high %v1712, %v1720
        %v1740 = vunpack.c.l.s4 1934713408
        %v1741 = vunpack.c.0.s8 %v1740
        %v1742 = vlaneseq
        %v1743 = vshrl.u32 %v1742, 7
        %v1744 = vsub.s32 %v1741, %v1743
        %v1745 = vrot.slane %v1737, %v1744
        %v1747 = vunpack.c.l.s4 1934713408
        %v1748 = vunpack.c.0.s8 %v1747
        %v1749 = vlaneseq
        %v1750 = vshrl.u32 %v1749, 7
        %v1751 = vsub.s32 %v1748, %v1750
        %v1752 = vrot.slane %v1738, %v1751
        %v1753 = vcombine.low %v1729, %v1745
        %v1754 = vcombine.high %v1729, %v1745
        %v1755 = vcombine.low %v1736, %v1752
        %v1756 = vcombine.high %v1736, %v1752
        %v1757 = vcombine.low %v1661, %v1668
        %v1759 = vunpack.c.l.s4 1983009808
        %v1760 = vunpack.c.0.s8 %v1759
        %v1761 = vlaneseq
        %v1762 = vshrl.u32 %v1761, 7
        %v1763 = vsub.s32 %v1760, %v1762
        %v1764 = vrot.slane %v1757, %v1763
        %v1765 = vcombine.low %v1685, %v1686
        %v1767 = vunpack.c.l.s4 1983009808
        %v1768 = vunpack.c.0.s8 %v1767
        %v1769 = vlaneseq
        %v1770 = vshrl.u32 %v1769, 7
        %v1771 = vsub.s32 %v1768, %v1770
        %v1772 = vrot.slane %v1765, %v1771
        %v1773 = vcombine.low %v1677, %v1684
        %v1775 = vunpack.c.l.s4 1983009808
        %v1776 = vunpack.c.0.s8 %v1775
        %v1777 = vlaneseq
        %v1778 = vshrl.u32 %v1777, 7
        %v1779 = vsub.s32 %v1776, %v1778
        %v1780 = vrot.slane %v1773, %v1779
        %v1781 = vcombine.low %v1687, %v1688
        %v1783 = vunpack.c.l.s4 1983009808
        %v1784 = vunpack.c.0.s8 %v1783
        %v1785 = vlaneseq
        %v1786 = vshrl.u32 %v1785, 7
        %v1787 = vsub.s32 %v1784, %v1786
        %v1788 = vrot.slane %v1781, %v1787
        %v1789 = vcombine.low %v1764, %v1772
        %v1790 = vcombine.high %v1764, %v1772
        %v1792 = vunpack.c.l.s4 1934713408
        %v1793 = vunpack.c.0.s8 %v1792
        %v1794 = vlaneseq
        %v1795 = vshrl.u32 %v1794, 7
        %v1796 = vsub.s32 %v1793, %v1795
        %v1797 = vrot.slane %v1789, %v1796
        %v1799 = vunpack.c.l.s4 1934713408
        %v1800 = vunpack.c.0.s8 %v1799
        %v1801 = vlaneseq
        %v1802 = vshrl.u32 %v1801, 7
        %v1803 = vsub.s32 %v1800, %v1802
        %v1804 = vrot.slane %v1790, %v1803
        %v1805 = vcombine.low %v1780, %v1788
        %v1806 = vcombine.high %v1780, %v1788
        %v1808 = vunpack.c.l.s4 1934713408
        %v1809 = vunpack.c.0.s8 %v1808
        %v1810 = vlaneseq
        %v1811 = vshrl.u32 %v1810, 7
        %v1812 = vsub.s32 %v1809, %v1811
        %v1813 = vrot.slane %v1805, %v1812
        %v1815 = vunpack.c.l.s4 1934713408
        %v1816 = vunpack.c.0.s8 %v1815
        %v1817 = vlaneseq
        %v1818 = vshrl.u32 %v1817, 7
        %v1819 = vsub.s32 %v1816, %v1818
        %v1820 = vrot.slane %v1806, %v1819
        %v1821 = vcombine.low %v1797, %v1813
        %v1822 = vcombine.high %v1797, %v1813
        %v1823 = vcombine.low %v1804, %v1820
        %v1824 = vcombine.high %v1804, %v1820
        %v1825 = vpack.c.bf16 %v1753, %v1753
        %v1826 = vpack.c.bf16 %v1754, %v1754
        %v1827 = vpack.c.bf16 %v1755, %v1755
        %v1828 = vpack.c.bf16 %v1756, %v1756
        %v1829 = vpack.c.bf16 %v1821, %v1821
        %v1830 = vpack.c.bf16 %v1822, %v1822
        %v1831 = vpack.c.bf16 %v1823, %v1823
        %v1832 = vpack.c.bf16 %v1824, %v1824
        %v1833 = vld [vmem:[%s3] sm:$0xff]
        %vm1834 = vcmask 64512
        %v1836 = vsel %vm1834, %v1203, 0
        %v1839 = vsel %vm1834, %v1521, 0
        %1841 = vmatprep.subr.bf16.mxu0 0
        %1842 = vmatpush1.bf16.xpose.msra.mxu0 0
        %1843 = vmatprep.subr.bf16.mxu0 0
        %1844 = vmatpush1.bf16.xpose.msra.mxu0 0
        %1845 = vmatprep.subr.bf16.mxu0 0
        %1846 = vmatpush1.bf16.xpose.msra.mxu0 0
        %1847 = vmatprep.subr.bf16.mxu0 0
        %1848 = vmatpush1.bf16.xpose.msra.mxu0 0
        %1849 = vmatprep.subr.bf16.mxu0 0
        %1850 = vmatpush1.bf16.xpose.msra.mxu0 0
        %1851 = vmatprep.subr.bf16.mxu0 0
        %1852 = vmatpush1.bf16.xpose.msra.mxu0 0
        %1853 = vmatprep.subr.bf16.mxu0 0
        %1854 = vmatpush1.bf16.xpose.msra.mxu0 0
        %1855 = vmatprep.subr.bf16.mxu0 0
        %1856 = vmatpush1.bf16.xpose.msra.mxu0 %v1839
        %1857 = vmatprep.subr.bf16.mxu0 0
        %1858 = vmatpush2.bf16.xpose.msra.mxu0 0
        %1859 = vmatprep.subr.bf16.mxu0 0
        %1860 = vmatpush2.bf16.xpose.msra.mxu0 0
        %1861 = vmatprep.subr.bf16.mxu0 0
        %1862 = vmatpush2.bf16.xpose.msra.mxu0 0
        %1863 = vmatprep.subr.bf16.mxu0 0
        %1864 = vmatpush2.bf16.xpose.msra.mxu0 0
        %1865 = vmatprep.subr.bf16.mxu0 0
        %1866 = vmatpush2.bf16.xpose.msra.mxu0 0
        %1867 = vmatprep.subr.bf16.mxu0 0
        %1868 = vmatpush2.bf16.xpose.msra.mxu0 0
        %1869 = vmatprep.subr.bf16.mxu0 0
        %1870 = vmatpush2.bf16.xpose.msra.mxu0 0
        %1871 = vmatprep.subr.bf16.mxu0 0
        %1872 = vmatpush2.bf16.xpose.msra.mxu0 0
        %1873 = vmatprep.mubr.bf16.mxu0 0
        %1874 = vmatmul.mubr.bf16.gmra.mxu0 %v1836
        %v1875 = vpop.f32.mrf.mxu0
        %v1876 = vadd.f32 %v1833, %v1875
        %v1877 = vpop.f32.mrf.mxu0
        %v1878 = vpop.f32.mrf.mxu0
        %v1879 = vpop.f32.mrf.mxu0
        %1880 = vdwg.mxu0
        %v1882 = vsel %vm1834, %v1204, 0
        %v1885 = vsel %vm1834, %v1522, 0
        %1887 = vmatprep.subr.bf16.mxu0 0
        %1888 = vmatpush1.bf16.xpose.msra.mxu0 0
        %1889 = vmatprep.subr.bf16.mxu0 0
        %1890 = vmatpush1.bf16.xpose.msra.mxu0 0
        %1891 = vmatprep.subr.bf16.mxu0 0
        %1892 = vmatpush1.bf16.xpose.msra.mxu0 0
        %1893 = vmatprep.subr.bf16.mxu0 0
        %1894 = vmatpush1.bf16.xpose.msra.mxu0 0
        %1895 = vmatprep.subr.bf16.mxu0 0
        %1896 = vmatpush1.bf16.xpose.msra.mxu0 0
        %1897 = vmatprep.subr.bf16.mxu0 0
        %1898 = vmatpush1.bf16.xpose.msra.mxu0 0
        %1899 = vmatprep.subr.bf16.mxu0 0
        %1900 = vmatpush1.bf16.xpose.msra.mxu0 0
        %1901 = vmatprep.subr.bf16.mxu0 0
        %1902 = vmatpush1.bf16.xpose.msra.mxu0 %v1885
        %1903 = vmatprep.subr.bf16.mxu0 0
        %1904 = vmatpush2.bf16.xpose.msra.mxu0 0
        %1905 = vmatprep.subr.bf16.mxu0 0
        %1906 = vmatpush2.bf16.xpose.msra.mxu0 0
        %1907 = vmatprep.subr.bf16.mxu0 0
        %1908 = vmatpush2.bf16.xpose.msra.mxu0 0
        %1909 = vmatprep.subr.bf16.mxu0 0
        %1910 = vmatpush2.bf16.xpose.msra.mxu0 0
        %1911 = vmatprep.subr.bf16.mxu0 0
        %1912 = vmatpush2.bf16.xpose.msra.mxu0 0
        %1913 = vmatprep.subr.bf16.mxu0 0
        %1914 = vmatpush2.bf16.xpose.msra.mxu0 0
        %1915 = vmatprep.subr.bf16.mxu0 0
        %1916 = vmatpush2.bf16.xpose.msra.mxu0 0
        %1917 = vmatprep.subr.bf16.mxu0 0
        %1918 = vmatpush2.bf16.xpose.msra.mxu0 0
        %1919 = vmatprep.mubr.bf16.mxu0 0
        %1920 = vmatmul.mubr.bf16.gmra.mxu0 %v1882
        %v1921 = vpop.f32.mrf.mxu0
        %v1922 = vadd.f32 %v1833, %v1921
        %v1923 = vpop.f32.mrf.mxu0
        %v1924 = vpop.f32.mrf.mxu0
        %v1925 = vpop.f32.mrf.mxu0
        %1926 = vdwg.mxu0
        %v1928 = vsel %vm1834, %v1205, 0
        %v1931 = vsel %vm1834, %v1523, 0
        %1933 = vmatprep.subr.bf16.mxu0 0
        %1934 = vmatpush1.bf16.xpose.msra.mxu0 0
        %1935 = vmatprep.subr.bf16.mxu0 0
        %1936 = vmatpush1.bf16.xpose.msra.mxu0 0
        %1937 = vmatprep.subr.bf16.mxu0 0
        %1938 = vmatpush1.bf16.xpose.msra.mxu0 0
        %1939 = vmatprep.subr.bf16.mxu0 0
        %1940 = vmatpush1.bf16.xpose.msra.mxu0 0
        %1941 = vmatprep.subr.bf16.mxu0 0
        %1942 = vmatpush1.bf16.xpose.msra.mxu0 0
        %1943 = vmatprep.subr.bf16.mxu0 0
        %1944 = vmatpush1.bf16.xpose.msra.mxu0 0
        %1945 = vmatprep.subr.bf16.mxu0 0
        %1946 = vmatpush1.bf16.xpose.msra.mxu0 0
        %1947 = vmatprep.subr.bf16.mxu0 0
        %1948 = vmatpush1.bf16.xpose.msra.mxu0 %v1931
        %1949 = vmatprep.subr.bf16.mxu0 0
        %1950 = vmatpush2.bf16.xpose.msra.mxu0 0
        %1951 = vmatprep.subr.bf16.mxu0 0
        %1952 = vmatpush2.bf16.xpose.msra.mxu0 0
        %1953 = vmatprep.subr.bf16.mxu0 0
        %1954 = vmatpush2.bf16.xpose.msra.mxu0 0
        %1955 = vmatprep.subr.bf16.mxu0 0
        %1956 = vmatpush2.bf16.xpose.msra.mxu0 0
        %1957 = vmatprep.subr.bf16.mxu0 0
        %1958 = vmatpush2.bf16.xpose.msra.mxu0 0
        %1959 = vmatprep.subr.bf16.mxu0 0
        %1960 = vmatpush2.bf16.xpose.msra.mxu0 0
        %1961 = vmatprep.subr.bf16.mxu0 0
        %1962 = vmatpush2.bf16.xpose.msra.mxu0 0
        %1963 = vmatprep.subr.bf16.mxu0 0
        %1964 = vmatpush2.bf16.xpose.msra.mxu0 0
        %1965 = vmatprep.mubr.bf16.mxu0 0
        %1966 = vmatmul.mubr.bf16.gmra.mxu0 %v1928
        %v1967 = vpop.f32.mrf.mxu0
        %v1968 = vadd.f32 %v1833, %v1967
        %v1969 = vpop.f32.mrf.mxu0
        %v1970 = vpop.f32.mrf.mxu0
        %v1971 = vpop.f32.mrf.mxu0
        %1972 = vdwg.mxu0
        %v1974 = vsel %vm1834, %v1206, 0
        %v1977 = vsel %vm1834, %v1524, 0
        %1979 = vmatprep.subr.bf16.mxu0 0
        %1980 = vmatpush1.bf16.xpose.msra.mxu0 0
        %1981 = vmatprep.subr.bf16.mxu0 0
        %1982 = vmatpush1.bf16.xpose.msra.mxu0 0
        %1983 = vmatprep.subr.bf16.mxu0 0
        %1984 = vmatpush1.bf16.xpose.msra.mxu0 0
        %1985 = vmatprep.subr.bf16.mxu0 0
        %1986 = vmatpush1.bf16.xpose.msra.mxu0 0
        %1987 = vmatprep.subr.bf16.mxu0 0
        %1988 = vmatpush1.bf16.xpose.msra.mxu0 0
        %1989 = vmatprep.subr.bf16.mxu0 0
        %1990 = vmatpush1.bf16.xpose.msra.mxu0 0
        %1991 = vmatprep.subr.bf16.mxu0 0
        %1992 = vmatpush1.bf16.xpose.msra.mxu0 0
        %1993 = vmatprep.subr.bf16.mxu0 0
        %1994 = vmatpush1.bf16.xpose.msra.mxu0 %v1977
        %1995 = vmatprep.subr.bf16.mxu0 0
        %1996 = vmatpush2.bf16.xpose.msra.mxu0 0
        %1997 = vmatprep.subr.bf16.mxu0 0
        %1998 = vmatpush2.bf16.xpose.msra.mxu0 0
        %1999 = vmatprep.subr.bf16.mxu0 0
        %2000 = vmatpush2.bf16.xpose.msra.mxu0 0
        %2001 = vmatprep.subr.bf16.mxu0 0
        %2002 = vmatpush2.bf16.xpose.msra.mxu0 0
        %2003 = vmatprep.subr.bf16.mxu0 0
        %2004 = vmatpush2.bf16.xpose.msra.mxu0 0
        %2005 = vmatprep.subr.bf16.mxu0 0
        %2006 = vmatpush2.bf16.xpose.msra.mxu0 0
        %2007 = vmatprep.subr.bf16.mxu0 0
        %2008 = vmatpush2.bf16.xpose.msra.mxu0 0
        %2009 = vmatprep.subr.bf16.mxu0 0
        %2010 = vmatpush2.bf16.xpose.msra.mxu0 0
        %2011 = vmatprep.mubr.bf16.mxu0 0
        %2012 = vmatmul.mubr.bf16.gmra.mxu0 %v1974
        %v2013 = vpop.f32.mrf.mxu0
        %v2014 = vadd.f32 %v1833, %v2013
        %v2015 = vpop.f32.mrf.mxu0
        %v2016 = vpop.f32.mrf.mxu0
        %v2017 = vpop.f32.mrf.mxu0
        %2018 = vdwg.mxu0
        %v2020 = vsel %vm1834, %v1207, 0
        %v2023 = vsel %vm1834, %v1525, 0
        %2025 = vmatprep.subr.bf16.mxu0 0
        %2026 = vmatpush1.bf16.xpose.msra.mxu0 0
        %2027 = vmatprep.subr.bf16.mxu0 0
        %2028 = vmatpush1.bf16.xpose.msra.mxu0 0
        %2029 = vmatprep.subr.bf16.mxu0 0
        %2030 = vmatpush1.bf16.xpose.msra.mxu0 0
        %2031 = vmatprep.subr.bf16.mxu0 0
        %2032 = vmatpush1.bf16.xpose.msra.mxu0 0
        %2033 = vmatprep.subr.bf16.mxu0 0
        %2034 = vmatpush1.bf16.xpose.msra.mxu0 0
        %2035 = vmatprep.subr.bf16.mxu0 0
        %2036 = vmatpush1.bf16.xpose.msra.mxu0 0
        %2037 = vmatprep.subr.bf16.mxu0 0
        %2038 = vmatpush1.bf16.xpose.msra.mxu0 0
        %2039 = vmatprep.subr.bf16.mxu0 0
        %2040 = vmatpush1.bf16.xpose.msra.mxu0 %v2023
        %2041 = vmatprep.subr.bf16.mxu0 0
        %2042 = vmatpush2.bf16.xpose.msra.mxu0 0
        %2043 = vmatprep.subr.bf16.mxu0 0
        %2044 = vmatpush2.bf16.xpose.msra.mxu0 0
        %2045 = vmatprep.subr.bf16.mxu0 0
        %2046 = vmatpush2.bf16.xpose.msra.mxu0 0
        %2047 = vmatprep.subr.bf16.mxu0 0
        %2048 = vmatpush2.bf16.xpose.msra.mxu0 0
        %2049 = vmatprep.subr.bf16.mxu0 0
        %2050 = vmatpush2.bf16.xpose.msra.mxu0 0
        %2051 = vmatprep.subr.bf16.mxu0 0
        %2052 = vmatpush2.bf16.xpose.msra.mxu0 0
        %2053 = vmatprep.subr.bf16.mxu0 0
        %2054 = vmatpush2.bf16.xpose.msra.mxu0 0
        %2055 = vmatprep.subr.bf16.mxu0 0
        %2056 = vmatpush2.bf16.xpose.msra.mxu0 0
        %2057 = vmatprep.mubr.bf16.mxu0 0
        %2058 = vmatmul.mubr.bf16.gmra.mxu0 %v2020
        %v2059 = vpop.f32.mrf.mxu0
        %v2060 = vadd.f32 %v1833, %v2059
        %v2061 = vpop.f32.mrf.mxu0
        %v2062 = vpop.f32.mrf.mxu0
        %v2063 = vpop.f32.mrf.mxu0
        %2064 = vdwg.mxu0
        %v2066 = vsel %vm1834, %v1208, 0
        %v2069 = vsel %vm1834, %v1526, 0
        %2071 = vmatprep.subr.bf16.mxu0 0
        %2072 = vmatpush1.bf16.xpose.msra.mxu0 0
        %2073 = vmatprep.subr.bf16.mxu0 0
        %2074 = vmatpush1.bf16.xpose.msra.mxu0 0
        %2075 = vmatprep.subr.bf16.mxu0 0
        %2076 = vmatpush1.bf16.xpose.msra.mxu0 0
        %2077 = vmatprep.subr.bf16.mxu0 0
        %2078 = vmatpush1.bf16.xpose.msra.mxu0 0
        %2079 = vmatprep.subr.bf16.mxu0 0
        %2080 = vmatpush1.bf16.xpose.msra.mxu0 0
        %2081 = vmatprep.subr.bf16.mxu0 0
        %2082 = vmatpush1.bf16.xpose.msra.mxu0 0
        %2083 = vmatprep.subr.bf16.mxu0 0
        %2084 = vmatpush1.bf16.xpose.msra.mxu0 0
        %2085 = vmatprep.subr.bf16.mxu0 0
        %2086 = vmatpush1.bf16.xpose.msra.mxu0 %v2069
        %2087 = vmatprep.subr.bf16.mxu0 0
        %2088 = vmatpush2.bf16.xpose.msra.mxu0 0
        %2089 = vmatprep.subr.bf16.mxu0 0
        %2090 = vmatpush2.bf16.xpose.msra.mxu0 0
        %2091 = vmatprep.subr.bf16.mxu0 0
        %2092 = vmatpush2.bf16.xpose.msra.mxu0 0
        %2093 = vmatprep.subr.bf16.mxu0 0
        %2094 = vmatpush2.bf16.xpose.msra.mxu0 0
        %2095 = vmatprep.subr.bf16.mxu0 0
        %2096 = vmatpush2.bf16.xpose.msra.mxu0 0
        %2097 = vmatprep.subr.bf16.mxu0 0
        %2098 = vmatpush2.bf16.xpose.msra.mxu0 0
        %2099 = vmatprep.subr.bf16.mxu0 0
        %2100 = vmatpush2.bf16.xpose.msra.mxu0 0
        %2101 = vmatprep.subr.bf16.mxu0 0
        %2102 = vmatpush2.bf16.xpose.msra.mxu0 0
        %2103 = vmatprep.mubr.bf16.mxu0 0
        %2104 = vmatmul.mubr.bf16.gmra.mxu0 %v2066
        %v2105 = vpop.f32.mrf.mxu0
        %v2106 = vadd.f32 %v1833, %v2105
        %v2107 = vpop.f32.mrf.mxu0
        %v2108 = vpop.f32.mrf.mxu0
        %v2109 = vpop.f32.mrf.mxu0
        %2110 = vdwg.mxu0
        %v2112 = vsel %vm1834, %v1209, 0
        %v2115 = vsel %vm1834, %v1527, 0
        %2117 = vmatprep.subr.bf16.mxu0 0
        %2118 = vmatpush1.bf16.xpose.msra.mxu0 0
        %2119 = vmatprep.subr.bf16.mxu0 0
        %2120 = vmatpush1.bf16.xpose.msra.mxu0 0
        %2121 = vmatprep.subr.bf16.mxu0 0
        %2122 = vmatpush1.bf16.xpose.msra.mxu0 0
        %2123 = vmatprep.subr.bf16.mxu0 0
        %2124 = vmatpush1.bf16.xpose.msra.mxu0 0
        %2125 = vmatprep.subr.bf16.mxu0 0
        %2126 = vmatpush1.bf16.xpose.msra.mxu0 0
        %2127 = vmatprep.subr.bf16.mxu0 0
        %2128 = vmatpush1.bf16.xpose.msra.mxu0 0
        %2129 = vmatprep.subr.bf16.mxu0 0
        %2130 = vmatpush1.bf16.xpose.msra.mxu0 0
        %2131 = vmatprep.subr.bf16.mxu0 0
        %2132 = vmatpush1.bf16.xpose.msra.mxu0 %v2115
        %2133 = vmatprep.subr.bf16.mxu0 0
        %2134 = vmatpush2.bf16.xpose.msra.mxu0 0
        %2135 = vmatprep.subr.bf16.mxu0 0
        %2136 = vmatpush2.bf16.xpose.msra.mxu0 0
        %2137 = vmatprep.subr.bf16.mxu0 0
        %2138 = vmatpush2.bf16.xpose.msra.mxu0 0
        %2139 = vmatprep.subr.bf16.mxu0 0
        %2140 = vmatpush2.bf16.xpose.msra.mxu0 0
        %2141 = vmatprep.subr.bf16.mxu0 0
        %2142 = vmatpush2.bf16.xpose.msra.mxu0 0
        %2143 = vmatprep.subr.bf16.mxu0 0
        %2144 = vmatpush2.bf16.xpose.msra.mxu0 0
        %2145 = vmatprep.subr.bf16.mxu0 0
        %2146 = vmatpush2.bf16.xpose.msra.mxu0 0
        %2147 = vmatprep.subr.bf16.mxu0 0
        %2148 = vmatpush2.bf16.xpose.msra.mxu0 0
        %2149 = vmatprep.mubr.bf16.mxu0 0
        %2150 = vmatmul.mubr.bf16.gmra.mxu0 %v2112
        %v2151 = vpop.f32.mrf.mxu0
        %v2152 = vadd.f32 %v1833, %v2151
        %v2153 = vpop.f32.mrf.mxu0
        %v2154 = vpop.f32.mrf.mxu0
        %v2155 = vpop.f32.mrf.mxu0
        %2156 = vdwg.mxu0
        %v2158 = vsel %vm1834, %v1210, 0
        %v2161 = vsel %vm1834, %v1528, 0
        %2163 = vmatprep.subr.bf16.mxu0 0
        %2164 = vmatpush1.bf16.xpose.msra.mxu0 0
        %2165 = vmatprep.subr.bf16.mxu0 0
        %2166 = vmatpush1.bf16.xpose.msra.mxu0 0
        %2167 = vmatprep.subr.bf16.mxu0 0
        %2168 = vmatpush1.bf16.xpose.msra.mxu0 0
        %2169 = vmatprep.subr.bf16.mxu0 0
        %2170 = vmatpush1.bf16.xpose.msra.mxu0 0
        %2171 = vmatprep.subr.bf16.mxu0 0
        %2172 = vmatpush1.bf16.xpose.msra.mxu0 0
        %2173 = vmatprep.subr.bf16.mxu0 0
        %2174 = vmatpush1.bf16.xpose.msra.mxu0 0
        %2175 = vmatprep.subr.bf16.mxu0 0
        %2176 = vmatpush1.bf16.xpose.msra.mxu0 0
        %2177 = vmatprep.subr.bf16.mxu0 0
        %2178 = vmatpush1.bf16.xpose.msra.mxu0 %v2161
        %2179 = vmatprep.subr.bf16.mxu0 0
        %2180 = vmatpush2.bf16.xpose.msra.mxu0 0
        %2181 = vmatprep.subr.bf16.mxu0 0
        %2182 = vmatpush2.bf16.xpose.msra.mxu0 0
        %2183 = vmatprep.subr.bf16.mxu0 0
        %2184 = vmatpush2.bf16.xpose.msra.mxu0 0
        %2185 = vmatprep.subr.bf16.mxu0 0
        %2186 = vmatpush2.bf16.xpose.msra.mxu0 0
        %2187 = vmatprep.subr.bf16.mxu0 0
        %2188 = vmatpush2.bf16.xpose.msra.mxu0 0
        %2189 = vmatprep.subr.bf16.mxu0 0
        %2190 = vmatpush2.bf16.xpose.msra.mxu0 0
        %2191 = vmatprep.subr.bf16.mxu0 0
        %2192 = vmatpush2.bf16.xpose.msra.mxu0 0
        %2193 = vmatprep.subr.bf16.mxu0 0
        %2194 = vmatpush2.bf16.xpose.msra.mxu0 0
        %2195 = vmatprep.mubr.bf16.mxu0 0
        %2196 = vmatmul.mubr.bf16.gmra.mxu0 %v2158
        %v2197 = vpop.f32.mrf.mxu0
        %v2198 = vadd.f32 %v1833, %v2197
        %v2199 = vpop.f32.mrf.mxu0
        %v2200 = vpop.f32.mrf.mxu0
        %v2201 = vpop.f32.mrf.mxu0
        %2202 = vdwg.mxu0
        %v2203 = vsel %vm1834, %v1876, -inf
        %2204 = vmax.xlane.f32.xlu0 %v2203
        %v2205 = vpop.xlane.xlu0 %2204
        %v2206 = vsel %vm1834, %v1922, -inf
        %2207 = vmax.xlane.f32.xlu0 %v2206
        %v2208 = vpop.xlane.xlu0 %2207
        %v2209 = vsel %vm1834, %v1968, -inf
        %2210 = vmax.xlane.f32.xlu0 %v2209
        %v2211 = vpop.xlane.xlu0 %2210
        %v2212 = vsel %vm1834, %v2014, -inf
        %2213 = vmax.xlane.f32.xlu0 %v2212
        %v2214 = vpop.xlane.xlu0 %2213
        %v2215 = vsel %vm1834, %v2060, -inf
        %2216 = vmax.xlane.f32.xlu0 %v2215
        %v2217 = vpop.xlane.xlu0 %2216
        %v2218 = vsel %vm1834, %v2106, -inf
        %2219 = vmax.xlane.f32.xlu0 %v2218
        %v2220 = vpop.xlane.xlu0 %2219
        %v2221 = vsel %vm1834, %v2152, -inf
        %2222 = vmax.xlane.f32.xlu0 %v2221
        %v2223 = vpop.xlane.xlu0 %2222
        %v2224 = vsel %vm1834, %v2198, -inf
        %2225 = vmax.xlane.f32.xlu0 %v2224
        %v2226 = vpop.xlane.xlu0 %2225
        %v2227 = vsub.f32 %v1876, %v2205
        %v2228 = vsub.f32 %v1922, %v2208
        %v2229 = vsub.f32 %v1968, %v2211
        %v2230 = vsub.f32 %v2014, %v2214
        %v2231 = vsub.f32 %v2060, %v2217
        %v2232 = vsub.f32 %v2106, %v2220
        %v2233 = vsub.f32 %v2152, %v2223
        %v2234 = vsub.f32 %v2198, %v2226
        %v2235 = vmul.f32 %v2227, 1.442695
        %v2236 = vpow.pop %v2235
        %v2237 = vmul.f32 %v2228, 1.442695
        %v2238 = vpow.pop %v2237
        %v2239 = vmul.f32 %v2229, 1.442695
        %v2240 = vpow.pop %v2239
        %v2241 = vmul.f32 %v2230, 1.442695
        %v2242 = vpow.pop %v2241
        %v2243 = vmul.f32 %v2231, 1.442695
        %v2244 = vpow.pop %v2243
        %v2245 = vmul.f32 %v2232, 1.442695
        %v2246 = vpow.pop %v2245
        %v2247 = vmul.f32 %v2233, 1.442695
        %v2248 = vpow.pop %v2247
        %v2249 = vmul.f32 %v2234, 1.442695
        %v2250 = vpow.pop %v2249
        %v2251 = vsel %vm1834, %v2236, 0.0
        %2252 = vadd.xlane.f32.xlu0 %v2251
        %v2253 = vpop.xlane.xlu0 %2252
        %v2254 = vsel %vm1834, %v2238, 0.0
        %2255 = vadd.xlane.f32.xlu0 %v2254
        %v2256 = vpop.xlane.xlu0 %2255
        %v2257 = vsel %vm1834, %v2240, 0.0
        %2258 = vadd.xlane.f32.xlu0 %v2257
        %v2259 = vpop.xlane.xlu0 %2258
        %v2260 = vsel %vm1834, %v2242, 0.0
        %2261 = vadd.xlane.f32.xlu0 %v2260
        %v2262 = vpop.xlane.xlu0 %2261
        %v2263 = vsel %vm1834, %v2244, 0.0
        %2264 = vadd.xlane.f32.xlu0 %v2263
        %v2265 = vpop.xlane.xlu0 %2264
        %v2266 = vsel %vm1834, %v2246, 0.0
        %2267 = vadd.xlane.f32.xlu0 %v2266
        %v2268 = vpop.xlane.xlu0 %2267
        %v2269 = vsel %vm1834, %v2248, 0.0
        %2270 = vadd.xlane.f32.xlu0 %v2269
        %v2271 = vpop.xlane.xlu0 %2270
        %v2272 = vsel %vm1834, %v2250, 0.0
        %2273 = vadd.xlane.f32.xlu0 %v2272
        %v2274 = vpop.xlane.xlu0 %2273
        %v2275 = vrcp.pop %v2253
        %v2276 = vrcp.pop %v2256
        %v2277 = vrcp.pop %v2259
        %v2278 = vrcp.pop %v2262
        %v2279 = vrcp.pop %v2265
        %v2280 = vrcp.pop %v2268
        %v2281 = vrcp.pop %v2271
        %v2282 = vrcp.pop %v2274
        %v2283 = vmul.f32 %v2236, %v2275
        %v2284 = vmul.f32 %v2238, %v2276
        %v2285 = vmul.f32 %v2240, %v2277
        %v2286 = vmul.f32 %v2242, %v2278
        %v2287 = vmul.f32 %v2244, %v2279
        %v2288 = vmul.f32 %v2246, %v2280
        %v2289 = vmul.f32 %v2248, %v2281
        %v2290 = vmul.f32 %v2250, %v2282
        %v2291 = vpack.c.bf16 %v2283, %v2283
        %v2292 = vpack.c.bf16 %v2284, %v2284
        %v2293 = vpack.c.bf16 %v2285, %v2285
        %v2294 = vpack.c.bf16 %v2286, %v2286
        %v2295 = vpack.c.bf16 %v2287, %v2287
        %v2296 = vpack.c.bf16 %v2288, %v2288
        %v2297 = vpack.c.bf16 %v2289, %v2289
        %v2298 = vpack.c.bf16 %v2290, %v2290
        %v2300 = vsel %vm1834, %v2291, 0
        %vm2302 = vcmask 1043456
        %v2304 = vsel %vm2302, %v1825, 0
        %2306 = vmatprep.subr.bf16.mxu0 0
        %2307 = vmatpush1.bf16.msra.mxu0 0
        %2308 = vmatprep.subr.bf16.mxu0 0
        %2309 = vmatpush1.bf16.msra.mxu0 0
        %2310 = vmatprep.subr.bf16.mxu0 0
        %2311 = vmatpush1.bf16.msra.mxu0 0
        %2312 = vmatprep.subr.bf16.mxu0 0
        %2313 = vmatpush1.bf16.msra.mxu0 0
        %2314 = vmatprep.subr.bf16.mxu0 0
        %2315 = vmatpush1.bf16.msra.mxu0 0
        %2316 = vmatprep.subr.bf16.mxu0 0
        %2317 = vmatpush1.bf16.msra.mxu0 0
        %2318 = vmatprep.subr.bf16.mxu0 0
        %2319 = vmatpush1.bf16.msra.mxu0 0
        %2320 = vmatprep.subr.bf16.mxu0 0
        %2321 = vmatpush1.bf16.msra.mxu0 %v2304
        %2322 = vmatprep.subr.bf16.mxu0 0
        %2323 = vmatpush2.bf16.msra.mxu0 0
        %2324 = vmatprep.subr.bf16.mxu0 0
        %2325 = vmatpush2.bf16.msra.mxu0 0
        %2326 = vmatprep.subr.bf16.mxu0 0
        %2327 = vmatpush2.bf16.msra.mxu0 0
        %2328 = vmatprep.subr.bf16.mxu0 0
        %2329 = vmatpush2.bf16.msra.mxu0 0
        %2330 = vmatprep.subr.bf16.mxu0 0
        %2331 = vmatpush2.bf16.msra.mxu0 0
        %2332 = vmatprep.subr.bf16.mxu0 0
        %2333 = vmatpush2.bf16.msra.mxu0 0
        %2334 = vmatprep.subr.bf16.mxu0 0
        %2335 = vmatpush2.bf16.msra.mxu0 0
        %2336 = vmatprep.subr.bf16.mxu0 0
        %2337 = vmatpush2.bf16.msra.mxu0 0
        %2338 = vmatprep.mubr.bf16.mxu0 0
        %2339 = vmatmul.mubr.bf16.gmra.mxu0 %v2300
        %v2340 = vpop.f32.mrf.mxu0
        %v2341 = vadd.f32 0.0, %v2340
        %v2342 = vpop.f32.mrf.mxu0
        %v2343 = vpop.f32.mrf.mxu0
        %v2344 = vpop.f32.mrf.mxu0
        %2345 = vdwg.mxu0
        %v2347 = vsel %vm1834, %v2292, 0
        %v2350 = vsel %vm2302, %v1826, 0
        %2352 = vmatprep.subr.bf16.mxu0 0
        %2353 = vmatpush1.bf16.msra.mxu0 0
        %2354 = vmatprep.subr.bf16.mxu0 0
        %2355 = vmatpush1.bf16.msra.mxu0 0
        %2356 = vmatprep.subr.bf16.mxu0 0
        %2357 = vmatpush1.bf16.msra.mxu0 0
        %2358 = vmatprep.subr.bf16.mxu0 0
        %2359 = vmatpush1.bf16.msra.mxu0 0
        %2360 = vmatprep.subr.bf16.mxu0 0
        %2361 = vmatpush1.bf16.msra.mxu0 0
        %2362 = vmatprep.subr.bf16.mxu0 0
        %2363 = vmatpush1.bf16.msra.mxu0 0
        %2364 = vmatprep.subr.bf16.mxu0 0
        %2365 = vmatpush1.bf16.msra.mxu0 0
        %2366 = vmatprep.subr.bf16.mxu0 0
        %2367 = vmatpush1.bf16.msra.mxu0 %v2350
        %2368 = vmatprep.subr.bf16.mxu0 0
        %2369 = vmatpush2.bf16.msra.mxu0 0
        %2370 = vmatprep.subr.bf16.mxu0 0
        %2371 = vmatpush2.bf16.msra.mxu0 0
        %2372 = vmatprep.subr.bf16.mxu0 0
        %2373 = vmatpush2.bf16.msra.mxu0 0
        %2374 = vmatprep.subr.bf16.mxu0 0
        %2375 = vmatpush2.bf16.msra.mxu0 0
        %2376 = vmatprep.subr.bf16.mxu0 0
        %2377 = vmatpush2.bf16.msra.mxu0 0
        %2378 = vmatprep.subr.bf16.mxu0 0
        %2379 = vmatpush2.bf16.msra.mxu0 0
        %2380 = vmatprep.subr.bf16.mxu0 0
        %2381 = vmatpush2.bf16.msra.mxu0 0
        %2382 = vmatprep.subr.bf16.mxu0 0
        %2383 = vmatpush2.bf16.msra.mxu0 0
        %2384 = vmatprep.mubr.bf16.mxu0 0
        %2385 = vmatmul.mubr.bf16.gmra.mxu0 %v2347
        %v2386 = vpop.f32.mrf.mxu0
        %v2387 = vadd.f32 0.0, %v2386
        %v2388 = vpop.f32.mrf.mxu0
        %v2389 = vpop.f32.mrf.mxu0
        %v2390 = vpop.f32.mrf.mxu0
        %2391 = vdwg.mxu0
        %v2393 = vsel %vm1834, %v2293, 0
        %v2396 = vsel %vm2302, %v1827, 0
        %2398 = vmatprep.subr.bf16.mxu0 0
        %2399 = vmatpush1.bf16.msra.mxu0 0
        %2400 = vmatprep.subr.bf16.mxu0 0
        %2401 = vmatpush1.bf16.msra.mxu0 0
        %2402 = vmatprep.subr.bf16.mxu0 0
        %2403 = vmatpush1.bf16.msra.mxu0 0
        %2404 = vmatprep.subr.bf16.mxu0 0
        %2405 = vmatpush1.bf16.msra.mxu0 0
        %2406 = vmatprep.subr.bf16.mxu0 0
        %2407 = vmatpush1.bf16.msra.mxu0 0
        %2408 = vmatprep.subr.bf16.mxu0 0
        %2409 = vmatpush1.bf16.msra.mxu0 0
        %2410 = vmatprep.subr.bf16.mxu0 0
        %2411 = vmatpush1.bf16.msra.mxu0 0
        %2412 = vmatprep.subr.bf16.mxu0 0
        %2413 = vmatpush1.bf16.msra.mxu0 %v2396
        %2414 = vmatprep.subr.bf16.mxu0 0
        %2415 = vmatpush2.bf16.msra.mxu0 0
        %2416 = vmatprep.subr.bf16.mxu0 0
        %2417 = vmatpush2.bf16.msra.mxu0 0
        %2418 = vmatprep.subr.bf16.mxu0 0
        %2419 = vmatpush2.bf16.msra.mxu0 0
        %2420 = vmatprep.subr.bf16.mxu0 0
        %2421 = vmatpush2.bf16.msra.mxu0 0
        %2422 = vmatprep.subr.bf16.mxu0 0
        %2423 = vmatpush2.bf16.msra.mxu0 0
        %2424 = vmatprep.subr.bf16.mxu0 0
        %2425 = vmatpush2.bf16.msra.mxu0 0
        %2426 = vmatprep.subr.bf16.mxu0 0
        %2427 = vmatpush2.bf16.msra.mxu0 0
        %2428 = vmatprep.subr.bf16.mxu0 0
        %2429 = vmatpush2.bf16.msra.mxu0 0
        %2430 = vmatprep.mubr.bf16.mxu0 0
        %2431 = vmatmul.mubr.bf16.gmra.mxu0 %v2393
        %v2432 = vpop.f32.mrf.mxu0
        %v2433 = vadd.f32 0.0, %v2432
        %v2434 = vpop.f32.mrf.mxu0
        %v2435 = vpop.f32.mrf.mxu0
        %v2436 = vpop.f32.mrf.mxu0
        %2437 = vdwg.mxu0
        %v2439 = vsel %vm1834, %v2294, 0
        %v2442 = vsel %vm2302, %v1828, 0
        %2444 = vmatprep.subr.bf16.mxu0 0
        %2445 = vmatpush1.bf16.msra.mxu0 0
        %2446 = vmatprep.subr.bf16.mxu0 0
        %2447 = vmatpush1.bf16.msra.mxu0 0
        %2448 = vmatprep.subr.bf16.mxu0 0
        %2449 = vmatpush1.bf16.msra.mxu0 0
        %2450 = vmatprep.subr.bf16.mxu0 0
        %2451 = vmatpush1.bf16.msra.mxu0 0
        %2452 = vmatprep.subr.bf16.mxu0 0
        %2453 = vmatpush1.bf16.msra.mxu0 0
        %2454 = vmatprep.subr.bf16.mxu0 0
        %2455 = vmatpush1.bf16.msra.mxu0 0
        %2456 = vmatprep.subr.bf16.mxu0 0
        %2457 = vmatpush1.bf16.msra.mxu0 0
        %2458 = vmatprep.subr.bf16.mxu0 0
        %2459 = vmatpush1.bf16.msra.mxu0 %v2442
        %2460 = vmatprep.subr.bf16.mxu0 0
        %2461 = vmatpush2.bf16.msra.mxu0 0
        %2462 = vmatprep.subr.bf16.mxu0 0
        %2463 = vmatpush2.bf16.msra.mxu0 0
        %2464 = vmatprep.subr.bf16.mxu0 0
        %2465 = vmatpush2.bf16.msra.mxu0 0
        %2466 = vmatprep.subr.bf16.mxu0 0
        %2467 = vmatpush2.bf16.msra.mxu0 0
        %2468 = vmatprep.subr.bf16.mxu0 0
        %2469 = vmatpush2.bf16.msra.mxu0 0
        %2470 = vmatprep.subr.bf16.mxu0 0
        %2471 = vmatpush2.bf16.msra.mxu0 0
        %2472 = vmatprep.subr.bf16.mxu0 0
        %2473 = vmatpush2.bf16.msra.mxu0 0
        %2474 = vmatprep.subr.bf16.mxu0 0
        %2475 = vmatpush2.bf16.msra.mxu0 0
        %2476 = vmatprep.mubr.bf16.mxu0 0
        %2477 = vmatmul.mubr.bf16.gmra.mxu0 %v2439
        %v2478 = vpop.f32.mrf.mxu0
        %v2479 = vadd.f32 0.0, %v2478
        %v2480 = vpop.f32.mrf.mxu0
        %v2481 = vpop.f32.mrf.mxu0
        %v2482 = vpop.f32.mrf.mxu0
        %2483 = vdwg.mxu0
        %v2485 = vsel %vm1834, %v2295, 0
        %v2488 = vsel %vm2302, %v1829, 0
        %2490 = vmatprep.subr.bf16.mxu0 0
        %2491 = vmatpush1.bf16.msra.mxu0 0
        %2492 = vmatprep.subr.bf16.mxu0 0
        %2493 = vmatpush1.bf16.msra.mxu0 0
        %2494 = vmatprep.subr.bf16.mxu0 0
        %2495 = vmatpush1.bf16.msra.mxu0 0
        %2496 = vmatprep.subr.bf16.mxu0 0
        %2497 = vmatpush1.bf16.msra.mxu0 0
        %2498 = vmatprep.subr.bf16.mxu0 0
        %2499 = vmatpush1.bf16.msra.mxu0 0
        %2500 = vmatprep.subr.bf16.mxu0 0
        %2501 = vmatpush1.bf16.msra.mxu0 0
        %2502 = vmatprep.subr.bf16.mxu0 0
        %2503 = vmatpush1.bf16.msra.mxu0 0
        %2504 = vmatprep.subr.bf16.mxu0 0
        %2505 = vmatpush1.bf16.msra.mxu0 %v2488
        %2506 = vmatprep.subr.bf16.mxu0 0
        %2507 = vmatpush2.bf16.msra.mxu0 0
        %2508 = vmatprep.subr.bf16.mxu0 0
        %2509 = vmatpush2.bf16.msra.mxu0 0
        %2510 = vmatprep.subr.bf16.mxu0 0
        %2511 = vmatpush2.bf16.msra.mxu0 0
        %2512 = vmatprep.subr.bf16.mxu0 0
        %2513 = vmatpush2.bf16.msra.mxu0 0
        %2514 = vmatprep.subr.bf16.mxu0 0
        %2515 = vmatpush2.bf16.msra.mxu0 0
        %2516 = vmatprep.subr.bf16.mxu0 0
        %2517 = vmatpush2.bf16.msra.mxu0 0
        %2518 = vmatprep.subr.bf16.mxu0 0
        %2519 = vmatpush2.bf16.msra.mxu0 0
        %2520 = vmatprep.subr.bf16.mxu0 0
        %2521 = vmatpush2.bf16.msra.mxu0 0
        %2522 = vmatprep.mubr.bf16.mxu0 0
        %2523 = vmatmul.mubr.bf16.gmra.mxu0 %v2485
        %v2524 = vpop.f32.mrf.mxu0
        %v2525 = vadd.f32 0.0, %v2524
        %v2526 = vpop.f32.mrf.mxu0
        %v2527 = vpop.f32.mrf.mxu0
        %v2528 = vpop.f32.mrf.mxu0
        %2529 = vdwg.mxu0
        %v2531 = vsel %vm1834, %v2296, 0
        %v2534 = vsel %vm2302, %v1830, 0
        %2536 = vmatprep.subr.bf16.mxu0 0
        %2537 = vmatpush1.bf16.msra.mxu0 0
        %2538 = vmatprep.subr.bf16.mxu0 0
        %2539 = vmatpush1.bf16.msra.mxu0 0
        %2540 = vmatprep.subr.bf16.mxu0 0
        %2541 = vmatpush1.bf16.msra.mxu0 0
        %2542 = vmatprep.subr.bf16.mxu0 0
        %2543 = vmatpush1.bf16.msra.mxu0 0
        %2544 = vmatprep.subr.bf16.mxu0 0
        %2545 = vmatpush1.bf16.msra.mxu0 0
        %2546 = vmatprep.subr.bf16.mxu0 0
        %2547 = vmatpush1.bf16.msra.mxu0 0
        %2548 = vmatprep.subr.bf16.mxu0 0
        %2549 = vmatpush1.bf16.msra.mxu0 0
        %2550 = vmatprep.subr.bf16.mxu0 0
        %2551 = vmatpush1.bf16.msra.mxu0 %v2534
        %2552 = vmatprep.subr.bf16.mxu0 0
        %2553 = vmatpush2.bf16.msra.mxu0 0
        %2554 = vmatprep.subr.bf16.mxu0 0
        %2555 = vmatpush2.bf16.msra.mxu0 0
        %2556 = vmatprep.subr.bf16.mxu0 0
        %2557 = vmatpush2.bf16.msra.mxu0 0
        %2558 = vmatprep.subr.bf16.mxu0 0
        %2559 = vmatpush2.bf16.msra.mxu0 0
        %2560 = vmatprep.subr.bf16.mxu0 0
        %2561 = vmatpush2.bf16.msra.mxu0 0
        %2562 = vmatprep.subr.bf16.mxu0 0
        %2563 = vmatpush2.bf16.msra.mxu0 0
        %2564 = vmatprep.subr.bf16.mxu0 0
        %2565 = vmatpush2.bf16.msra.mxu0 0
        %2566 = vmatprep.subr.bf16.mxu0 0
        %2567 = vmatpush2.bf16.msra.mxu0 0
        %2568 = vmatprep.mubr.bf16.mxu0 0
        %2569 = vmatmul.mubr.bf16.gmra.mxu0 %v2531
        %v2570 = vpop.f32.mrf.mxu0
        %v2571 = vadd.f32 0.0, %v2570
        %v2572 = vpop.f32.mrf.mxu0
        %v2573 = vpop.f32.mrf.mxu0
        %v2574 = vpop.f32.mrf.mxu0
        %2575 = vdwg.mxu0
        %v2577 = vsel %vm1834, %v2297, 0
        %v2580 = vsel %vm2302, %v1831, 0
        %2582 = vmatprep.subr.bf16.mxu0 0
        %2583 = vmatpush1.bf16.msra.mxu0 0
        %2584 = vmatprep.subr.bf16.mxu0 0
        %2585 = vmatpush1.bf16.msra.mxu0 0
        %2586 = vmatprep.subr.bf16.mxu0 0
        %2587 = vmatpush1.bf16.msra.mxu0 0
        %2588 = vmatprep.subr.bf16.mxu0 0
        %2589 = vmatpush1.bf16.msra.mxu0 0
        %2590 = vmatprep.subr.bf16.mxu0 0
        %2591 = vmatpush1.bf16.msra.mxu0 0
        %2592 = vmatprep.subr.bf16.mxu0 0
        %2593 = vmatpush1.bf16.msra.mxu0 0
        %2594 = vmatprep.subr.bf16.mxu0 0
        %2595 = vmatpush1.bf16.msra.mxu0 0
        %2596 = vmatprep.subr.bf16.mxu0 0
        %2597 = vmatpush1.bf16.msra.mxu0 %v2580
        %2598 = vmatprep.subr.bf16.mxu0 0
        %2599 = vmatpush2.bf16.msra.mxu0 0
        %2600 = vmatprep.subr.bf16.mxu0 0
        %2601 = vmatpush2.bf16.msra.mxu0 0
        %2602 = vmatprep.subr.bf16.mxu0 0
        %2603 = vmatpush2.bf16.msra.mxu0 0
        %2604 = vmatprep.subr.bf16.mxu0 0
        %2605 = vmatpush2.bf16.msra.mxu0 0
        %2606 = vmatprep.subr.bf16.mxu0 0
        %2607 = vmatpush2.bf16.msra.mxu0 0
        %2608 = vmatprep.subr.bf16.mxu0 0
        %2609 = vmatpush2.bf16.msra.mxu0 0
        %2610 = vmatprep.subr.bf16.mxu0 0
        %2611 = vmatpush2.bf16.msra.mxu0 0
        %2612 = vmatprep.subr.bf16.mxu0 0
        %2613 = vmatpush2.bf16.msra.mxu0 0
        %2614 = vmatprep.mubr.bf16.mxu0 0
        %2615 = vmatmul.mubr.bf16.gmra.mxu0 %v2577
        %v2616 = vpop.f32.mrf.mxu0
        %v2617 = vadd.f32 0.0, %v2616
        %v2618 = vpop.f32.mrf.mxu0
        %v2619 = vpop.f32.mrf.mxu0
        %v2620 = vpop.f32.mrf.mxu0
        %2621 = vdwg.mxu0
        %v2623 = vsel %vm1834, %v2298, 0
        %v2626 = vsel %vm2302, %v1832, 0
        %2628 = vmatprep.subr.bf16.mxu0 0
        %2629 = vmatpush1.bf16.msra.mxu0 0
        %2630 = vmatprep.subr.bf16.mxu0 0
        %2631 = vmatpush1.bf16.msra.mxu0 0
        %2632 = vmatprep.subr.bf16.mxu0 0
        %2633 = vmatpush1.bf16.msra.mxu0 0
        %2634 = vmatprep.subr.bf16.mxu0 0
        %2635 = vmatpush1.bf16.msra.mxu0 0
        %2636 = vmatprep.subr.bf16.mxu0 0
        %2637 = vmatpush1.bf16.msra.mxu0 0
        %2638 = vmatprep.subr.bf16.mxu0 0
        %2639 = vmatpush1.bf16.msra.mxu0 0
        %2640 = vmatprep.subr.bf16.mxu0 0
        %2641 = vmatpush1.bf16.msra.mxu0 0
        %2642 = vmatprep.subr.bf16.mxu0 0
        %2643 = vmatpush1.bf16.msra.mxu0 %v2626
        %2644 = vmatprep.subr.bf16.mxu0 0
        %2645 = vmatpush2.bf16.msra.mxu0 0
        %2646 = vmatprep.subr.bf16.mxu0 0
        %2647 = vmatpush2.bf16.msra.mxu0 0
        %2648 = vmatprep.subr.bf16.mxu0 0
        %2649 = vmatpush2.bf16.msra.mxu0 0
        %2650 = vmatprep.subr.bf16.mxu0 0
        %2651 = vmatpush2.bf16.msra.mxu0 0
        %2652 = vmatprep.subr.bf16.mxu0 0
        %2653 = vmatpush2.bf16.msra.mxu0 0
        %2654 = vmatprep.subr.bf16.mxu0 0
        %2655 = vmatpush2.bf16.msra.mxu0 0
        %2656 = vmatprep.subr.bf16.mxu0 0
        %2657 = vmatpush2.bf16.msra.mxu0 0
        %2658 = vmatprep.subr.bf16.mxu0 0
        %2659 = vmatpush2.bf16.msra.mxu0 0
        %2660 = vmatprep.mubr.bf16.mxu0 0
        %2661 = vmatmul.mubr.bf16.gmra.mxu0 %v2623
        %v2662 = vpop.f32.mrf.mxu0
        %v2663 = vadd.f32 0.0, %v2662
        %v2664 = vpop.f32.mrf.mxu0
        %v2665 = vpop.f32.mrf.mxu0
        %v2666 = vpop.f32.mrf.mxu0
        %2667 = vdwg.mxu0
        %v2668 = vcombine.low %v2341, %v2433
        %v2669 = vcombine.high %v2341, %v2433
        %v2671 = vunpack.c.l.s4 1983009808
        %v2672 = vunpack.c.0.s8 %v2671
        %v2673 = vlaneseq
        %v2674 = vshrl.u32 %v2673, 7
        %v2675 = vsub.s32 %v2672, %v2674
        %v2676 = vrot.slane %v2668, %v2675
        %v2678 = vunpack.c.l.s4 1983009808
        %v2679 = vunpack.c.0.s8 %v2678
        %v2680 = vlaneseq
        %v2681 = vshrl.u32 %v2680, 7
        %v2682 = vsub.s32 %v2679, %v2681
        %v2683 = vrot.slane %v2669, %v2682
        %v2684 = vcombine.low %v2387, %v2479
        %v2685 = vcombine.high %v2387, %v2479
        %v2687 = vunpack.c.l.s4 1983009808
        %v2688 = vunpack.c.0.s8 %v2687
        %v2689 = vlaneseq
        %v2690 = vshrl.u32 %v2689, 7
        %v2691 = vsub.s32 %v2688, %v2690
        %v2692 = vrot.slane %v2684, %v2691
        %v2694 = vunpack.c.l.s4 1983009808
        %v2695 = vunpack.c.0.s8 %v2694
        %v2696 = vlaneseq
        %v2697 = vshrl.u32 %v2696, 7
        %v2698 = vsub.s32 %v2695, %v2697
        %v2699 = vrot.slane %v2685, %v2698
        %v2700 = vcombine.low %v2676, %v2692
        %v2701 = vcombine.high %v2676, %v2692
        %v2703 = vunpack.c.l.s4 1934713408
        %v2704 = vunpack.c.0.s8 %v2703
        %v2705 = vlaneseq
        %v2706 = vshrl.u32 %v2705, 7
        %v2707 = vsub.s32 %v2704, %v2706
        %v2708 = vrot.slane %v2700, %v2707
        %v2710 = vunpack.c.l.s4 1934713408
        %v2711 = vunpack.c.0.s8 %v2710
        %v2712 = vlaneseq
        %v2713 = vshrl.u32 %v2712, 7
        %v2714 = vsub.s32 %v2711, %v2713
        %v2715 = vrot.slane %v2701, %v2714
        %v2716 = vcombine.low %v2683, %v2699
        %v2717 = vcombine.high %v2683, %v2699
        %v2719 = vunpack.c.l.s4 1934713408
        %v2720 = vunpack.c.0.s8 %v2719
        %v2721 = vlaneseq
        %v2722 = vshrl.u32 %v2721, 7
        %v2723 = vsub.s32 %v2720, %v2722
        %v2724 = vrot.slane %v2716, %v2723
        %v2726 = vunpack.c.l.s4 1934713408
        %v2727 = vunpack.c.0.s8 %v2726
        %v2728 = vlaneseq
        %v2729 = vshrl.u32 %v2728, 7
        %v2730 = vsub.s32 %v2727, %v2729
        %v2731 = vrot.slane %v2717, %v2730
        %v2732 = vcombine.high %v2708, 0.0
        %v2733 = vcombine.high %v2715, 0.0
        %v2734 = vcombine.high %v2724, 0.0
        %v2735 = vcombine.high %v2731, 0.0
        %v2736 = vcombine.low %v2525, %v2617
        %v2737 = vcombine.high %v2525, %v2617
        %v2739 = vunpack.c.l.s4 1983009808
        %v2740 = vunpack.c.0.s8 %v2739
        %v2741 = vlaneseq
        %v2742 = vshrl.u32 %v2741, 7
        %v2743 = vsub.s32 %v2740, %v2742
        %v2744 = vrot.slane %v2736, %v2743
        %v2746 = vunpack.c.l.s4 1983009808
        %v2747 = vunpack.c.0.s8 %v2746
        %v2748 = vlaneseq
        %v2749 = vshrl.u32 %v2748, 7
        %v2750 = vsub.s32 %v2747, %v2749
        %v2751 = vrot.slane %v2737, %v2750
        %v2752 = vcombine.low %v2571, %v2663
        %v2753 = vcombine.high %v2571, %v2663
        %v2755 = vunpack.c.l.s4 1983009808
        %v2756 = vunpack.c.0.s8 %v2755
        %v2757 = vlaneseq
        %v2758 = vshrl.u32 %v2757, 7
        %v2759 = vsub.s32 %v2756, %v2758
        %v2760 = vrot.slane %v2752, %v2759
        %v2762 = vunpack.c.l.s4 1983009808
        %v2763 = vunpack.c.0.s8 %v2762
        %v2764 = vlaneseq
        %v2765 = vshrl.u32 %v2764, 7
        %v2766 = vsub.s32 %v2763, %v2765
        %v2767 = vrot.slane %v2753, %v2766
        %v2768 = vcombine.low %v2744, %v2760
        %v2769 = vcombine.high %v2744, %v2760
        %v2771 = vunpack.c.l.s4 1934713408
        %v2772 = vunpack.c.0.s8 %v2771
        %v2773 = vlaneseq
        %v2774 = vshrl.u32 %v2773, 7
        %v2775 = vsub.s32 %v2772, %v2774
        %v2776 = vrot.slane %v2768, %v2775
        %v2778 = vunpack.c.l.s4 1934713408
        %v2779 = vunpack.c.0.s8 %v2778
        %v2780 = vlaneseq
        %v2781 = vshrl.u32 %v2780, 7
        %v2782 = vsub.s32 %v2779, %v2781
        %v2783 = vrot.slane %v2769, %v2782
        %v2784 = vcombine.low %v2751, %v2767
        %v2785 = vcombine.high %v2751, %v2767
        %v2787 = vunpack.c.l.s4 1934713408
        %v2788 = vunpack.c.0.s8 %v2787
        %v2789 = vlaneseq
        %v2790 = vshrl.u32 %v2789, 7
        %v2791 = vsub.s32 %v2788, %v2790
        %v2792 = vrot.slane %v2784, %v2791
        %v2794 = vunpack.c.l.s4 1934713408
        %v2795 = vunpack.c.0.s8 %v2794
        %v2796 = vlaneseq
        %v2797 = vshrl.u32 %v2796, 7
        %v2798 = vsub.s32 %v2795, %v2797
        %v2799 = vrot.slane %v2785, %v2798
        %v2800 = vcombine.high %v2776, 0.0
        %v2801 = vcombine.high %v2783, 0.0
        %v2802 = vcombine.high %v2792, 0.0
        %v2803 = vcombine.high %v2799, 0.0
        %v2804 = vcombine.low %v2708, %v2715
        %v2806 = vunpack.c.l.s4 1983009808
        %v2807 = vunpack.c.0.s8 %v2806
        %v2808 = vlaneseq
        %v2809 = vshrl.u32 %v2808, 7
        %v2810 = vsub.s32 %v2807, %v2809
        %v2811 = vrot.slane %v2804, %v2810
        %v2812 = vcombine.low %v2732, %v2733
        %v2814 = vunpack.c.l.s4 1983009808
        %v2815 = vunpack.c.0.s8 %v2814
        %v2816 = vlaneseq
        %v2817 = vshrl.u32 %v2816, 7
        %v2818 = vsub.s32 %v2815, %v2817
        %v2819 = vrot.slane %v2812, %v2818
        %v2820 = vcombine.low %v2724, %v2731
        %v2822 = vunpack.c.l.s4 1983009808
        %v2823 = vunpack.c.0.s8 %v2822
        %v2824 = vlaneseq
        %v2825 = vshrl.u32 %v2824, 7
        %v2826 = vsub.s32 %v2823, %v2825
        %v2827 = vrot.slane %v2820, %v2826
        %v2828 = vcombine.low %v2734, %v2735
        %v2830 = vunpack.c.l.s4 1983009808
        %v2831 = vunpack.c.0.s8 %v2830
        %v2832 = vlaneseq
        %v2833 = vshrl.u32 %v2832, 7
        %v2834 = vsub.s32 %v2831, %v2833
        %v2835 = vrot.slane %v2828, %v2834
        %v2836 = vcombine.low %v2811, %v2819
        %v2837 = vcombine.high %v2811, %v2819
        %v2839 = vunpack.c.l.s4 1934713408
        %v2840 = vunpack.c.0.s8 %v2839
        %v2841 = vlaneseq
        %v2842 = vshrl.u32 %v2841, 7
        %v2843 = vsub.s32 %v2840, %v2842
        %v2844 = vrot.slane %v2836, %v2843
        %v2846 = vunpack.c.l.s4 1934713408
        %v2847 = vunpack.c.0.s8 %v2846
        %v2848 = vlaneseq
        %v2849 = vshrl.u32 %v2848, 7
        %v2850 = vsub.s32 %v2847, %v2849
        %v2851 = vrot.slane %v2837, %v2850
        %v2852 = vcombine.low %v2827, %v2835
        %v2853 = vcombine.high %v2827, %v2835
        %v2855 = vunpack.c.l.s4 1934713408
        %v2856 = vunpack.c.0.s8 %v2855
        %v2857 = vlaneseq
        %v2858 = vshrl.u32 %v2857, 7
        %v2859 = vsub.s32 %v2856, %v2858
        %v2860 = vrot.slane %v2852, %v2859
        %v2862 = vunpack.c.l.s4 1934713408
        %v2863 = vunpack.c.0.s8 %v2862
        %v2864 = vlaneseq
        %v2865 = vshrl.u32 %v2864, 7
        %v2866 = vsub.s32 %v2863, %v2865
        %v2867 = vrot.slane %v2853, %v2866
        %v2868 = vcombine.low %v2844, %v2860
        %v2869 = vcombine.high %v2844, %v2860
        %v2870 = vcombine.low %v2851, %v2867
        %v2871 = vcombine.high %v2851, %v2867
        %v2872 = vcombine.low %v2776, %v2783
        %v2874 = vunpack.c.l.s4 1983009808
        %v2875 = vunpack.c.0.s8 %v2874
        %v2876 = vlaneseq
        %v2877 = vshrl.u32 %v2876, 7
        %v2878 = vsub.s32 %v2875, %v2877
        %v2879 = vrot.slane %v2872, %v2878
        %v2880 = vcombine.low %v2800, %v2801
        %v2882 = vunpack.c.l.s4 1983009808
        %v2883 = vunpack.c.0.s8 %v2882
        %v2884 = vlaneseq
        %v2885 = vshrl.u32 %v2884, 7
        %v2886 = vsub.s32 %v2883, %v2885
        %v2887 = vrot.slane %v2880, %v2886
        %v2888 = vcombine.low %v2792, %v2799
        %v2890 = vunpack.c.l.s4 1983009808
        %v2891 = vunpack.c.0.s8 %v2890
        %v2892 = vlaneseq
        %v2893 = vshrl.u32 %v2892, 7
        %v2894 = vsub.s32 %v2891, %v2893
        %v2895 = vrot.slane %v2888, %v2894
        %v2896 = vcombine.low %v2802, %v2803
        %v2898 = vunpack.c.l.s4 1983009808
        %v2899 = vunpack.c.0.s8 %v2898
        %v2900 = vlaneseq
        %v2901 = vshrl.u32 %v2900, 7
        %v2902 = vsub.s32 %v2899, %v2901
        %v2903 = vrot.slane %v2896, %v2902
        %v2904 = vcombine.low %v2879, %v2887
        %v2905 = vcombine.high %v2879, %v2887
        %v2907 = vunpack.c.l.s4 1934713408
        %v2908 = vunpack.c.0.s8 %v2907
        %v2909 = vlaneseq
        %v2910 = vshrl.u32 %v2909, 7
        %v2911 = vsub.s32 %v2908, %v2910
        %v2912 = vrot.slane %v2904, %v2911
        %v2914 = vunpack.c.l.s4 1934713408
        %v2915 = vunpack.c.0.s8 %v2914
        %v2916 = vlaneseq
        %v2917 = vshrl.u32 %v2916, 7
        %v2918 = vsub.s32 %v2915, %v2917
        %v2919 = vrot.slane %v2905, %v2918
        %v2920 = vcombine.low %v2895, %v2903
        %v2921 = vcombine.high %v2895, %v2903
        %v2923 = vunpack.c.l.s4 1934713408
        %v2924 = vunpack.c.0.s8 %v2923
        %v2925 = vlaneseq
        %v2926 = vshrl.u32 %v2925, 7
        %v2927 = vsub.s32 %v2924, %v2926
        %v2928 = vrot.slane %v2920, %v2927
        %v2930 = vunpack.c.l.s4 1934713408
        %v2931 = vunpack.c.0.s8 %v2930
        %v2932 = vlaneseq
        %v2933 = vshrl.u32 %v2932, 7
        %v2934 = vsub.s32 %v2931, %v2933
        %v2935 = vrot.slane %v2921, %v2934
        %v2936 = vcombine.low %v2912, %v2928
        %v2937 = vcombine.high %v2912, %v2928
        %v2938 = vcombine.low %v2919, %v2935
        %v2939 = vcombine.high %v2919, %v2935
        %2942 = vrot.lane.b32.xlu0 %v2869, 8
        %v2943 = vpop.permute.xlu0 %2942
        %2944 = vrot.lane.b32.xlu0 %v2937, 8
        %v2945 = vpop.permute.xlu0 %2944
        %2950 = vrot.lane.b32.xlu0 %v2870, 16
        %v2951 = vpop.permute.xlu0 %2950
        %2952 = vrot.lane.b32.xlu0 %v2938, 16
        %v2953 = vpop.permute.xlu0 %2952
        %2958 = vrot.lane.b32.xlu0 %v2871, 24
        %v2959 = vpop.permute.xlu0 %2958
        %2960 = vrot.lane.b32.xlu0 %v2939, 24
        %v2961 = vpop.permute.xlu0 %2960
        %v2964 = vsel %vm1834, %v2868, %v2943
        %v2965 = vsel %vm1834, %v2936, %v2945
        %vm2966 = vcmask 130048
        %v2967 = vsel %vm2966, %v2964, %v2951
        %v2968 = vsel %vm2966, %v2965, %v2953
        %vm2969 = vcmask 195584
        %v2970 = vsel %vm2969, %v2967, %v2959
        %v2971 = vsel %vm2969, %v2968, %v2961
        %v2972 = vpack.c.bf16 %v2971, %v2970
        %v2973 = vld [vmem:[%s752] sm:$0xf]
        %v2974 = vld [vmem:[%s752 + $0x4] sm:$0xf]
        %v2975 = vld [vmem:[%s752 + $0x8] sm:$0xf]
        %v2976 = vld [vmem:[%s752 + $0xc] sm:$0xf]
        %v2977 = vld [vmem:[%s755] sm:$0x1]
        %v2979 = vlaneseq
        %v2980 = vshrl.u32 %v2979, 7
        %v2981 = vsub.s32 0, %v2980
        %v2982 = vrot.slane %v2977, %v2981
        %v2988 = vunpack.c.l.b16 %v2973
        %v2989 = vunpack.c.l.b16 %v2974
        %v2990 = vunpack.c.l.b16 %v2975
        %v2991 = vunpack.c.l.b16 %v2976
        %v2992 = vpack.c.b16 %v2989, %v2988
        %v2993 = vpack.c.b16 %v2991, %v2990
        %v2997 = vsel %vm797, %v2972, 0
        %2999 = vmatprep.subr.bf16.mxu0 0
        %3000 = vmatpush1.bf16.msra.mxu0 0
        %3001 = vmatprep.subr.bf16.mxu0 0
        %3002 = vmatpush1.bf16.msra.mxu0 0
        %3003 = vmatprep.subr.bf16.mxu0 0
        %3004 = vmatpush1.bf16.msra.mxu0 0
        %3005 = vmatprep.subr.bf16.mxu0 0
        %3006 = vmatpush1.bf16.msra.mxu0 0
        %3007 = vmatprep.subr.bf16.mxu0 0
        %3008 = vmatpush1.bf16.msra.mxu0 0
        %3009 = vmatprep.subr.bf16.mxu0 0
        %3010 = vmatpush1.bf16.msra.mxu0 0
        %3011 = vmatprep.subr.bf16.mxu0 0
        %3012 = vmatpush1.bf16.msra.mxu0 %v2993
        %3013 = vmatprep.subr.bf16.mxu0 0
        %3014 = vmatpush1.bf16.msra.mxu0 %v2992
        %3015 = vmatprep.subr.bf16.mxu0 0
        %3016 = vmatpush2.bf16.msra.mxu0 0
        %3017 = vmatprep.subr.bf16.mxu0 0
        %3018 = vmatpush2.bf16.msra.mxu0 0
        %3019 = vmatprep.subr.bf16.mxu0 0
        %3020 = vmatpush2.bf16.msra.mxu0 0
        %3021 = vmatprep.subr.bf16.mxu0 0
        %3022 = vmatpush2.bf16.msra.mxu0 0
        %3023 = vmatprep.subr.bf16.mxu0 0
        %3024 = vmatpush2.bf16.msra.mxu0 0
        %3025 = vmatprep.subr.bf16.mxu0 0
        %3026 = vmatpush2.bf16.msra.mxu0 0
        %3027 = vmatprep.subr.bf16.mxu0 0
        %3028 = vmatpush2.bf16.msra.mxu0 0
        %3029 = vmatprep.subr.bf16.mxu0 0
        %3030 = vmatpush2.bf16.msra.mxu0 0
        %3031 = vmatprep.mubr.bf16.mxu0 0
        %3032 = vmatmul.mubr.bf16.gmra.mxu0 %v2997
        %v3033 = vpop.f32.mrf.mxu0
        %v3034 = vadd.f32 %v2982, %v3033
        %v3035 = vpop.f32.mrf.mxu0
        %v3036 = vpop.f32.mrf.mxu0
        %v3037 = vadd.f32 %v2982, %v3036
        %v3038 = vpop.f32.mrf.mxu0
        %3039 = vdwg.mxu0
        %v3040 = vadd.f32 %v793, %v3034
        %v3041 = vadd.f32 %v794, %v3037
        %v3042 = vld [vmem:[%s758] sm:$0x1]
        %v3043 = vld [vmem:[%s761] sm:$0x1]
        %v3044 = vsel %vm797, %v3040, 0.0
        %3045 = vadd.xlane.f32.xlu0 %v3044
        %v3046 = vpop.xlane.xlu0 %3045
        %v3047 = vsel %vm797, %v3041, 0.0
        %3048 = vadd.xlane.f32.xlu0 %v3047
        %v3049 = vpop.xlane.xlu0 %3048
        %v3050 = vmul.f32 %v3046, %v804
        %v3051 = vmul.f32 %v3049, %v804
        %v3052 = vsub.f32 %v3040, %v3050
        %v3053 = vsub.f32 %v3041, %v3051
        %v3054 = vmul.f32 %v3052, %v3052
        %v3055 = vmul.f32 %v3053, %v3053
        %v3056 = vsel %vm797, %v3054, 0.0
        %3057 = vadd.xlane.f32.xlu0 %v3056
        %v3058 = vpop.xlane.xlu0 %3057
        %v3059 = vsel %vm797, %v3055, 0.0
        %3060 = vadd.xlane.f32.xlu0 %v3059
        %v3061 = vpop.xlane.xlu0 %3060
        %v3062 = vmul.f32 %v3058, %v804
        %v3063 = vmul.f32 %v3061, %v804
        %v3064 = vadd.f32 %v3062, 1e-05
        %v3065 = vadd.f32 %v3063, 1e-05
        %v3066 = vrsqrt.pop %v3064
        %v3067 = vrsqrt.pop %v3065
        %v3068 = vmul.f32 %v3052, %v3066
        %v3069 = vmul.f32 %v3053, %v3067
        %v3071 = vlaneseq
        %v3072 = vshrl.u32 %v3071, 7
        %v3073 = vsub.s32 0, %v3072
        %v3074 = vrot.slane %v3042, %v3073
        %v3076 = vmul.f32 %v3068, %v3074
        %v3077 = vmul.f32 %v3069, %v3074
        %v3079 = vlaneseq
        %v3080 = vshrl.u32 %v3079, 7
        %v3081 = vsub.s32 0, %v3080
        %v3082 = vrot.slane %v3043, %v3081
        %v3084 = vadd.f32 %v3076, %v3082
        %v3085 = vadd.f32 %v3077, %v3082
        %v3086 = vpack.c.bf16 %v3085, %v3084
        %v3087 = vld [vmem:[%s766] sm:$0xf]
        %v3088 = vld [vmem:[%s766 + $0x4] sm:$0xf]
        %v3089 = vld [vmem:[%s766 + $0x8] sm:$0xf]
        %v3090 = vld [vmem:[%s766 + $0xc] sm:$0xf]
        %v3091 = vld [vmem:[%s769] sm:$0x1]
        %v3093 = vlaneseq
        %v3094 = vshrl.u32 %v3093, 7
        %v3095 = vsub.s32 0, %v3094
        %v3096 = vrot.slane %v3091, %v3095
        %v3102 = vunpack.c.l.b16 %v3087
        %v3103 = vunpack.c.l.b16 %v3088
        %v3104 = vunpack.c.l.b16 %v3089
        %v3105 = vunpack.c.l.b16 %v3090
        %v3106 = vpack.c.b16 %v3103, %v3102
        %v3107 = vpack.c.b16 %v3105, %v3104
        %v3111 = vsel %vm797, %v3086, 0
        %3113 = vmatprep.subr.bf16.mxu0 0
        %3114 = vmatpush1.bf16.msra.mxu0 0
        %3115 = vmatprep.subr.bf16.mxu0 0
        %3116 = vmatpush1.bf16.msra.mxu0 0
        %3117 = vmatprep.subr.bf16.mxu0 0
        %3118 = vmatpush1.bf16.msra.mxu0 0
        %3119 = vmatprep.subr.bf16.mxu0 0
        %3120 = vmatpush1.bf16.msra.mxu0 0
        %3121 = vmatprep.subr.bf16.mxu0 0
        %3122 = vmatpush1.bf16.msra.mxu0 0
        %3123 = vmatprep.subr.bf16.mxu0 0
        %3124 = vmatpush1.bf16.msra.mxu0 0
        %3125 = vmatprep.subr.bf16.mxu0 0
        %3126 = vmatpush1.bf16.msra.mxu0 %v3107
        %3127 = vmatprep.subr.bf16.mxu0 0
        %3128 = vmatpush1.bf16.msra.mxu0 %v3106
        %3129 = vmatprep.subr.bf16.mxu0 0
        %3130 = vmatpush2.bf16.msra.mxu0 0
        %3131 = vmatprep.subr.bf16.mxu0 0
        %3132 = vmatpush2.bf16.msra.mxu0 0
        %3133 = vmatprep.subr.bf16.mxu0 0
        %3134 = vmatpush2.bf16.msra.mxu0 0
        %3135 = vmatprep.subr.bf16.mxu0 0
        %3136 = vmatpush2.bf16.msra.mxu0 0
        %3137 = vmatprep.subr.bf16.mxu0 0
        %3138 = vmatpush2.bf16.msra.mxu0 0
        %3139 = vmatprep.subr.bf16.mxu0 0
        %3140 = vmatpush2.bf16.msra.mxu0 0
        %3141 = vmatprep.subr.bf16.mxu0 0
        %3142 = vmatpush2.bf16.msra.mxu0 0
        %3143 = vmatprep.subr.bf16.mxu0 0
        %3144 = vmatpush2.bf16.msra.mxu0 0
        %3145 = vmatprep.mubr.bf16.mxu0 0
        %3146 = vmatmul.mubr.bf16.gmra.mxu0 %v3111
        %v3147 = vpop.f32.mrf.mxu0
        %v3148 = vadd.f32 %v3096, %v3147
        %v3149 = vpop.f32.mrf.mxu0
        %v3150 = vpop.f32.mrf.mxu0
        %v3151 = vadd.f32 %v3096, %v3150
        %v3152 = vpop.f32.mrf.mxu0
        %3153 = vdwg.mxu0
        %v3154 = vpack.c.bf16 %v3151, %v3148
        %v3155 = vmul.bf16 %v3154, 1071267802
        %v3156 = vxor.u32 %v3155, 2147516416
        %v3158 = vmul.bf16 %v3156, 1069105081
        %v3159 = vpow.bf16.pop %v3158
        %v3160 = vadd.bf16 %v3159, 1065369472
        %v3161 = vrcp.bf16.pop %v3160
        %v3162 = vmul.bf16 1065369472, %v3161
        %v3163 = vmul.bf16 %v3154, %v3162
        %v3164 = vld [vmem:[%s774] sm:$0xf]
        %v3165 = vld [vmem:[%s774 + $0x4] sm:$0xf]
        %v3166 = vld [vmem:[%s774 + $0x8] sm:$0xf]
        %v3167 = vld [vmem:[%s774 + $0xc] sm:$0xf]
        %v3168 = vld [vmem:[%s774 + $0x10] sm:$0xf]
        %v3169 = vld [vmem:[%s774 + $0x14] sm:$0xf]
        %v3170 = vld [vmem:[%s774 + $0x18] sm:$0xf]
        %v3171 = vld [vmem:[%s774 + $0x1c] sm:$0xf]
        %v3172 = vld [vmem:[%s774 + $0x20] sm:$0xf]
        %v3173 = vld [vmem:[%s774 + $0x24] sm:$0xf]
        %v3174 = vld [vmem:[%s774 + $0x28] sm:$0xf]
        %v3175 = vld [vmem:[%s774 + $0x2c] sm:$0xf]
        %v3176 = vld [vmem:[%s774 + $0x30] sm:$0xf]
        %v3177 = vld [vmem:[%s774 + $0x34] sm:$0xf]
        %v3178 = vld [vmem:[%s774 + $0x38] sm:$0xf]
        %v3179 = vld [vmem:[%s774 + $0x3c] sm:$0xf]
        %v3180 = vld [vmem:[%s777] sm:$0x1]
        %v3182 = vlaneseq
        %v3183 = vshrl.u32 %v3182, 7
        %v3184 = vsub.s32 0, %v3183
        %v3185 = vrot.slane %v3180, %v3184
        %v3203 = vunpack.c.l.b16 %v3164
        %v3204 = vunpack.c.l.b16 %v3165
        %v3205 = vunpack.c.l.b16 %v3166
        %v3206 = vunpack.c.l.b16 %v3167
        %v3207 = vunpack.c.l.b16 %v3168
        %v3208 = vunpack.c.l.b16 %v3169
        %v3209 = vunpack.c.l.b16 %v3170
        %v3210 = vunpack.c.l.b16 %v3171
        %v3211 = vunpack.c.l.b16 %v3172
        %v3212 = vunpack.c.l.b16 %v3173
        %v3213 = vunpack.c.l.b16 %v3174
        %v3214 = vunpack.c.l.b16 %v3175
        %v3215 = vunpack.c.l.b16 %v3176
        %v3216 = vunpack.c.l.b16 %v3177
        %v3217 = vunpack.c.l.b16 %v3178
        %v3218 = vunpack.c.l.b16 %v3179
        %v3219 = vpack.c.b16 %v3204, %v3203
        %v3220 = vpack.c.b16 %v3206, %v3205
        %v3221 = vpack.c.b16 %v3208, %v3207
        %v3222 = vpack.c.b16 %v3210, %v3209
        %v3223 = vpack.c.b16 %v3212, %v3211
        %v3224 = vpack.c.b16 %v3214, %v3213
        %v3225 = vpack.c.b16 %v3216, %v3215
        %v3226 = vpack.c.b16 %v3218, %v3217
        %3235 = vmatprep.subr.bf16.mxu0 0
        %3236 = vmatpush1.bf16.msra.mxu0 %v3226
        %3237 = vmatprep.subr.bf16.mxu0 0
        %3238 = vmatpush1.bf16.msra.mxu0 %v3225
        %3239 = vmatprep.subr.bf16.mxu0 0
        %3240 = vmatpush1.bf16.msra.mxu0 %v3224
        %3241 = vmatprep.subr.bf16.mxu0 0
        %3242 = vmatpush1.bf16.msra.mxu0 %v3223
        %3243 = vmatprep.subr.bf16.mxu0 0
        %3244 = vmatpush1.bf16.msra.mxu0 %v3222
        %3245 = vmatprep.subr.bf16.mxu0 0
        %3246 = vmatpush1.bf16.msra.mxu0 %v3221
        %3247 = vmatprep.subr.bf16.mxu0 0
        %3248 = vmatpush1.bf16.msra.mxu0 %v3220
        %3249 = vmatprep.subr.bf16.mxu0 0
        %3250 = vmatpush1.bf16.msra.mxu0 %v3219
        %3251 = vmatprep.subr.bf16.mxu0 0
        %3252 = vmatpush2.bf16.msra.mxu0 0
        %3253 = vmatprep.subr.bf16.mxu0 0
        %3254 = vmatpush2.bf16.msra.mxu0 0
        %3255 = vmatprep.subr.bf16.mxu0 0
        %3256 = vmatpush2.bf16.msra.mxu0 0
        %3257 = vmatprep.subr.bf16.mxu0 0
        %3258 = vmatpush2.bf16.msra.mxu0 0
        %3259 = vmatprep.subr.bf16.mxu0 0
        %3260 = vmatpush2.bf16.msra.mxu0 0
        %3261 = vmatprep.subr.bf16.mxu0 0
        %3262 = vmatpush2.bf16.msra.mxu0 0
        %3263 = vmatprep.subr.bf16.mxu0 0
        %3264 = vmatpush2.bf16.msra.mxu0 0
        %3265 = vmatprep.subr.bf16.mxu0 0
        %3266 = vmatpush2.bf16.msra.mxu0 0
        %3267 = vmatprep.mubr.bf16.mxu0 0
        %3268 = vmatmul.mubr.bf16.gmra.mxu0 %v3163
        %v3269 = vpop.f32.mrf.mxu0
        %v3270 = vadd.f32 %v3185, %v3269
        %v3271 = vpop.f32.mrf.mxu0
        %v3272 = vpop.f32.mrf.mxu0
        %v3273 = vadd.f32 %v3185, %v3272
        %v3274 = vpop.f32.mrf.mxu0
        %3275 = vdwg.mxu0
        %v3276 = vadd.f32 %v3040, %v3270
        %v3277 = vadd.f32 %v3041, %v3273
        %3278 = vst.msk [vmem:[#allocation2] sm:$0xff] %vm797, %v3276
        %3279 = vst.msk [vmem:[#allocation2 + $0x8] sm:$0xff] %vm797, %v3277
        %p3280 = scmp.eq.s32.totalorder %s40, 1
        // Predicated region
        $region97: #{tpu_custom_call.1} parent=91 // pred_check
          %p3281 = pneg %p3280
        $region98: #{tpu_custom_call.1} parent=91 // pred_check_branch
          %3283 = sbr.rel (%p3281) target = $region100
        $region99: #{tpu_custom_call.1} parent=91 // pred_region
          %s3284 = smul.u32 %s39, 2
          %s3285 = sld [smem:[#allocation4 + %s3284]]
          %s3286 = scalar_lea.vmem [#allocation2], %s3285
          %v3287 = vld [vmem:[%s3286] sm:$0x1]
          %s3288 = sadd.s32 %s3284, 1
          %s3289 = sld [smem:[#allocation4 + %s3288]]
          %s3290 = sadd.s32 %s3289, 8
          %s3291 = scalar_lea.vmem [#allocation2], %s3290
          %v3292 = vld [vmem:[%s3291] sm:$0x1]
          %v3294 = vrot.slane %v3292, 7
          %vm3296 = vcmask 1040384
          %v3297 = vsel %vm3296, %v3287, %v3294
          %v3298 = vld [vmem:[%s16] sm:$0x1]
          %v3299 = vld [vmem:[%s17] sm:$0x1]
          %vm3300 = vcmask 254976
          %v3301 = vsel %vm3300, %v3297, 0.0
          %3302 = vadd.xlane.f32.xlu0 %v3301
          %v3303 = vpop.xlane.xlu0 %3302
          %v3304 = vmul.f32 %v3303, %v804
          %v3305 = vsub.f32 %v3297, %v3304
          %v3306 = vmul.f32 %v3305, %v3305
          %v3307 = vsel %vm3300, %v3306, 0.0
          %3308 = vadd.xlane.f32.xlu0 %v3307
          %v3309 = vpop.xlane.xlu0 %3308
          %v3310 = vmul.f32 %v3309, %v804
          %v3311 = vadd.f32 %v3310, 1e-05
          %v3312 = vrsqrt.pop %v3311
          %v3313 = vmul.f32 %v3305, %v3312
          %v3315 = vlaneseq
          %v3316 = vshrl.u32 %v3315, 7
          %v3317 = vsub.s32 0, %v3316
          %v3318 = vrot.slane %v3298, %v3317
          %v3320 = vmul.f32 %v3313, %v3318
          %v3322 = vlaneseq
          %v3323 = vshrl.u32 %v3322, 7
          %v3324 = vsub.s32 0, %v3323
          %v3325 = vrot.slane %v3299, %v3324
          %v3327 = vadd.f32 %v3320, %v3325
          %v3328 = vpack.c.bf16 %v3327, %v3327
          %v3329 = vld [vmem:[%s18] sm:$0xf]
          %v3330 = vld [vmem:[%s18 + $0x4] sm:$0xf]
          %v3331 = vld [vmem:[%s18 + $0x8] sm:$0xf]
          %v3332 = vld [vmem:[%s18 + $0xc] sm:$0xf]
          %v3337 = vunpack.c.l.b16 %v3329
          %v3338 = vunpack.c.l.b16 %v3330
          %v3339 = vunpack.c.l.b16 %v3331
          %v3340 = vunpack.c.l.b16 %v3332
          %v3341 = vpack.c.b16 %v3338, %v3337
          %v3342 = vpack.c.b16 %v3340, %v3339
          %v3346 = vsel %vm797, %v3328, 0
          %3348 = vmatprep.subr.bf16.mxu0 0
          %3349 = vmatpush1.bf16.msra.mxu0 0
          %3350 = vmatprep.subr.bf16.mxu0 0
          %3351 = vmatpush1.bf16.msra.mxu0 0
          %3352 = vmatprep.subr.bf16.mxu0 0
          %3353 = vmatpush1.bf16.msra.mxu0 0
          %3354 = vmatprep.subr.bf16.mxu0 0
          %3355 = vmatpush1.bf16.msra.mxu0 0
          %3356 = vmatprep.subr.bf16.mxu0 0
          %3357 = vmatpush1.bf16.msra.mxu0 0
          %3358 = vmatprep.subr.bf16.mxu0 0
          %3359 = vmatpush1.bf16.msra.mxu0 0
          %3360 = vmatprep.subr.bf16.mxu0 0
          %3361 = vmatpush1.bf16.msra.mxu0 %v3342
          %3362 = vmatprep.subr.bf16.mxu0 0
          %3363 = vmatpush1.bf16.msra.mxu0 %v3341
          %3364 = vmatprep.subr.bf16.mxu0 0
          %3365 = vmatpush2.bf16.msra.mxu0 0
          %3366 = vmatprep.subr.bf16.mxu0 0
          %3367 = vmatpush2.bf16.msra.mxu0 0
          %3368 = vmatprep.subr.bf16.mxu0 0
          %3369 = vmatpush2.bf16.msra.mxu0 0
          %3370 = vmatprep.subr.bf16.mxu0 0
          %3371 = vmatpush2.bf16.msra.mxu0 0
          %3372 = vmatprep.subr.bf16.mxu0 0
          %3373 = vmatpush2.bf16.msra.mxu0 0
          %3374 = vmatprep.subr.bf16.mxu0 0
          %3375 = vmatpush2.bf16.msra.mxu0 0
          %3376 = vmatprep.subr.bf16.mxu0 0
          %3377 = vmatpush2.bf16.msra.mxu0 0
          %3378 = vmatprep.subr.bf16.mxu0 0
          %3379 = vmatpush2.bf16.msra.mxu0 0
          %3380 = vmatprep.mubr.bf16.mxu0 0
          %3381 = vmatmul.mubr.bf16.gmra.mxu0 %v3346
          %v3382 = vpop.f32.mrf.mxu0
          %v3383 = vadd.f32 0.0, %v3382
          %v3384 = vpop.f32.mrf.mxu0
          %v3385 = vpop.f32.mrf.mxu0
          %v3386 = vpop.f32.mrf.mxu0
          %3387 = vdwg.mxu0
          %3388 = vst.msk [vmem:[#allocation5] sm:$0x3] %vm3300, %v3383
        $region100: #{tpu_custom_call.1} parent=91 // pred_fallthru
          _
        // Predicated region
        $region101: #{tpu_custom_call.1} parent=91 // pred_check
          %p3389 = pneg %p508
        $region102: #{tpu_custom_call.1} parent=91 // pred_check_branch
          %3391 = sbr.rel (%p3389) target = $region104
        $region103: #{tpu_custom_call.1} parent=91 // pred_region
          %s3393 = ssub.s32 32, 32
          %3394 = vsyncadd [#allocation6], %s3393
          %s3395 = smul.addr %s39, 32
          %s3396 = scalar_lea.hbm %s19, %s3395
          %s3398 = sshll.u32 [#allocation5], 4
          %s3399 = int_to_ptr.vmem [resolvable:$true] %s3398
          %3401 = dma.vmem_to_hbm [thread:$0]  %s3399, 32, %s3396, [#allocation6]
        $region104: #{tpu_custom_call.1} parent=91 // pred_fallthru
          _
        // Predicated region
        $region105: #{tpu_custom_call.1} parent=91 // pred_check
          %p3402 = pneg %p508
        $region106: #{tpu_custom_call.1} parent=91 // pred_check_branch
          %3404 = sbr.rel (%p3402) target = $region108
        $region107: #{tpu_custom_call.1} parent=91 // pred_region
          %3405 = dma.done [#allocation6], 32
        $region108: #{tpu_custom_call.1} parent=91 // pred_fallthru
          _
      $region92: #{tpu_custom_call.1} parent=5 // pred_fallthru
        _
      %p3406 = scmp.le.s32.totalorder 2, %s30
      // Predicated region
      $region109: #{tpu_custom_call.1} parent=5 // pred_check
        %p3407 = pneg %p3406
      $region110: #{tpu_custom_call.1} parent=5 // pred_check_branch
        %3409 = sbr.rel (%p3407) target = $region112
      $region111: #{tpu_custom_call.1} parent=5 // pred_region
        %s3410 = ssub.s32 %s30, 2
      $region112: #{tpu_custom_call.1} parent=5 // pred_fallthru
        _
    $region6: #{tpu_custom_call.1} parent=1 // loop_footer
      %s34 = sadd.s32 1, %s30
    $region7: #{tpu_custom_call.1} parent=1 // loop_footer_branch
      %29 = sbr.rel target = $region3
    $region8: #{tpu_custom_call.1} parent=1 // loop_exit
      _
    %3411 = vsyncpa [#allocation6], 1
    %s3412 = scalar_lea.sflag [#allocation6], 1
    %3413 = vsyncpa %s3412, 1

</llo_original>
